<compile_context>
chip_gen: v7x
topology: tpu7x:2x2x1
jax: 0.10.0
libtpu: 0.0.40
codegen_flags: <defaults>
</compile_context>

<pallas_src>
import functools

import jax
import jax.numpy as jnp
from jax import lax
from jax.experimental import pallas as pl
from jax.experimental.pallas import tpu as pltpu

COMPUTE_DTYPE = jnp.bfloat16   # GEMM operand dtype (MXU-native, f32 accumulation)
ACT_DTYPE = jnp.bfloat16       # inter-layer activation dtype (halves HBM store traffic)


def _round_up(x, m):
    return (x + m - 1) // m * m


def gemm_bias_lrelu_kernel(p_ref, w_ref, b_ref, o_ref, *, negative_slope):
    """Fused  (im2col patches @ BN-folded weight)  +  bias  ->  LeakyReLU.

    p_ref: (TILE_M, K)        bf16 im2col patches (K = 16 * cin_pad)
    w_ref: (K, COUT_PAD)      bf16 BN-folded conv weight (VMEM resident across steps)
    b_ref: (1, COUT_PAD)      f32 BN-folded bias          (VMEM resident across steps)
    o_ref: (TILE_M, COUT_PAD)
    """
    acc = jnp.dot(p_ref[...], w_ref[...], preferred_element_type=jnp.float32)  # MXU
    y = acc + b_ref[...]                                                       # folded BN
    o_ref[...] = jnp.where(y > 0, y, negative_slope * y).astype(o_ref.dtype)   # VPU


def _pick_tile_m(m, k, cout_pad, in_itemsize, out_itemsize,
                 vmem_budget=8 << 20, tile_cap=2048):
    """Largest row-tile (multiple of 8) whose double-buffered working set fits a
    conservative VMEM budget (under every generation's scoped default, incl. v7x),
    while keeping >= 2 grid steps when possible so both v7x TensorCores get work."""
    fixed = k * cout_pad * in_itemsize + cout_pad * 4            # resident weight + bias
    per_row = 2 * (k * in_itemsize + cout_pad * out_itemsize)    # double-buffered in/out
    tm = max(8, (vmem_budget - fixed) // per_row // 8 * 8)
    tm = min(tm, tile_cap)
    tm = min(tm, max(8, _round_up(-(-m // 2), 8)))               # grid >= 2 (megacore)
    return tm


def conv4x4_s2_bn_lrelu(x_nhwc, w_oihw, gamma, beta, mean, var, bn_eps, *,
                        negative_slope=0.2):
    """One encode_img block: Conv2d(k=4, s=2, p=1, bias=False) + BN(eval) + LeakyReLU(0.2).

    x_nhwc: (B, H, W, Cin);  w_oihw: (Cout, Cin, 4, 4) (PyTorch layout).
    Returns (B, H//2, W//2, Cout) in ACT_DTYPE.
    """
    B, H, W, cin = x_nhwc.shape
    cout = w_oihw.shape[0]
    ho, wo = H // 2, W // 2
    cin_pad = _round_up(cin, 8)          # K = 16*cin_pad -> multiple of 128 (lane-dense)
    cout_pad = _round_up(cout, 128)      # lane-dense output / full MXU result width
    K = 16 * cin_pad

    # --- fold eval-mode BatchNorm into the GEMM operands (weight scale + bias) ----
    scale = gamma.astype(jnp.float32) * lax.rsqrt(var.astype(jnp.float32) + bn_eps)
    bias = beta.astype(jnp.float32) - mean.astype(jnp.float32) * scale
    w = w_oihw.astype(jnp.float32) * scale[:, None, None, None]          # (cout,cin,4,4)
    w = jnp.pad(w, ((0, cout_pad - cout), (0, cin_pad - cin), (0, 0), (0, 0)))
    # (O,I,kh,kw) -> (kh,kw,I,O) -> (16*cin_pad, cout_pad), matching the patch layout
    w_mat = jnp.transpose(w, (2, 3, 1, 0)).reshape(K, cout_pad).astype(COMPUTE_DTYPE)
    bias2d = jnp.pad(bias, (0, cout_pad - cout)).reshape(1, cout_pad)    # f32

    # --- im2col in bf16 (wrapper-side layout plumbing, zero FLOPs) -----------------
    x = x_nhwc.astype(COMPUTE_DTYPE)
    if cin_pad > cin:
        x = jnp.pad(x, ((0, 0), (0, 0), (0, 0), (0, cin_pad - cin)))
    xp = jnp.pad(x, ((0, 0), (1, 1), (1, 1), (0, 0)))
    cols = [xp[:, kh:kh + 2 * ho:2, kw:kw + 2 * wo:2, :]
            for kh in range(4) for kw in range(4)]                # each (B,ho,wo,cin_pad)
    patches = jnp.concatenate(cols, axis=-1).reshape(B * ho * wo, K)

    M = B * ho * wo
    tm = _pick_tile_m(M, K, cout_pad,
                      in_itemsize=jnp.dtype(COMPUTE_DTYPE).itemsize,
                      out_itemsize=jnp.dtype(ACT_DTYPE).itemsize)
    m_pad = _round_up(M, tm)
    if m_pad > M:                        # pad rows instead of one-giant-tile fallback
        patches = jnp.pad(patches, ((0, m_pad - M), (0, 0)))

    out2d = pl.pallas_call(
        functools.partial(gemm_bias_lrelu_kernel, negative_slope=negative_slope),
        out_shape=jax.ShapeDtypeStruct((m_pad, cout_pad), ACT_DTYPE),
        grid_spec=pltpu.PrefetchScalarGridSpec(
            num_scalar_prefetch=0,
            grid=(m_pad // tm,),
            in_specs=[
                pl.BlockSpec((tm, K), lambda i: (i, 0)),          # patches tile (pipelined)
                pl.BlockSpec((K, cout_pad), lambda i: (0, 0)),    # folded weight (resident)
                pl.BlockSpec((1, cout_pad), lambda i: (0, 0)),    # folded bias   (resident)
            ],
            out_specs=pl.BlockSpec((tm, cout_pad), lambda i: (i, 0)),
        ),
        compiler_params=pltpu.CompilerParams(
            dimension_semantics=("parallel",)),                   # shards across v7x's 2 TCs
    )(patches, w_mat, bias2d)

    return out2d[:M, :cout].reshape(B, ho, wo, cout)


def stage1_d_img_forward(image_nchw, params):
    """STAGE1_D_IMG.forward: returns img_embedding (B, ndf*8, H/16, W/16) in f32."""
    x = jnp.transpose(image_nchw, (0, 2, 3, 1))                   # NCHW -> NHWC
    for p in params:
        x = conv4x4_s2_bn_lrelu(x, p['w'], p['gamma'], p['beta'],
                                p['mean'], p['var'], p['bn_eps'])
    return jnp.transpose(x, (0, 3, 1, 2)).astype(jnp.float32)     # NHWC -> NCHW


def reference_forward(image_nchw, params):
    """Pure-JAX f32 reference mirroring the PyTorch module (eval-mode BN)."""
    x = image_nchw
    for p in params:
        x = lax.conv_general_dilated(
            x, p['w'], window_strides=(2, 2), padding=((1, 1), (1, 1)),
            dimension_numbers=('NCHW', 'OIHW', 'NCHW'),
            precision=lax.Precision.HIGHEST)
        g = p['gamma'][None, :, None, None]
        b = p['beta'][None, :, None, None]
        m = p['mean'][None, :, None, None]
        v = p['var'][None, :, None, None]
        x = (x - m) / jnp.sqrt(v + p['bn_eps']) * g + b           # identity for layer 1
        x = jnp.where(x > 0, x, 0.2 * x)                          # LeakyReLU(0.2)
    return x


if __name__ == "__main__":
    # Small cfg-consistent sizes: GAN.DF_DIM (ndf) = 16, 64x64 RGB input, batch 2.
    B, H, W = 2, 64, 64
    ndf = 16

    key = jax.random.PRNGKey(0)
    keys = iter(jax.random.split(key, 32))

    image = jax.random.normal(next(keys), (B, 3, H, W), dtype=jnp.float32)

    layer_channels = [(3, ndf), (ndf, ndf * 2), (ndf * 2, ndf * 4), (ndf * 4, ndf * 8)]
    params = []
    for li, (cin, cout) in enumerate(layer_channels):
        w = jax.random.normal(next(keys), (cout, cin, 4, 4), dtype=jnp.float32) * 0.05
        if li > 0:                         # layers 2-4 have BatchNorm (eval mode)
            gamma = 1.0 + 0.1 * jax.random.normal(next(keys), (cout,), dtype=jnp.float32)
            beta = 0.1 * jax.random.normal(next(keys), (cout,), dtype=jnp.float32)
            mean = 0.1 * jax.random.normal(next(keys), (cout,), dtype=jnp.float32)
            var = 0.5 + jax.random.uniform(next(keys), (cout,), dtype=jnp.float32)
            bn_eps = 1e-5
        else:                              # layer 1 has no BatchNorm -> identity affine
            gamma = jnp.ones((cout,), jnp.float32)
            beta = jnp.zeros((cout,), jnp.float32)
            mean = jnp.zeros((cout,), jnp.float32)
            var = jnp.ones((cout,), jnp.float32)
            bn_eps = 0.0
        params.append(dict(w=w, gamma=gamma, beta=beta, mean=mean, var=var, bn_eps=bn_eps))

    fwd = jax.jit(stage1_d_img_forward)
    out = fwd(image, params)
    out = jax.block_until_ready(out)

    ref = reference_forward(image, params)
    assert out.shape == (B, ndf * 8, H // 16, W // 16), out.shape
    max_err = float(jnp.max(jnp.abs(out - ref)))
    # bf16 operands / bf16 inter-layer activations across 4 chained convs: expected
    # worst-element deviation vs the f32 HIGHEST reference is ~1e-2; 2e-2 bounds it.
    assert jnp.allclose(out, ref, atol=2e-2, rtol=2e-2), max_err

    print("KERNEL_OK")
</pallas_src>

<mosaic_0001>
module attributes {stable_mosaic.version = 11 : i64} {
  func.func @gemm_bias_lrelu_kernel(%arg0: i32, %arg1: memref<1024x128xbf16, #tpu.memory_space<vmem>>, %arg2: memref<128x128xbf16, #tpu.memory_space<vmem>>, %arg3: memref<1x128xf32, #tpu.memory_space<vmem>>, %arg4: memref<1024x128xbf16, #tpu.memory_space<vmem>>) attributes {dimension_semantics = [#tpu.dimension_semantics<parallel>], iteration_bounds = array<i64: 2>, scalar_prefetch = 0 : i64, scratch_operands = 0 : i64, tpu.core_type = #tpu.core_type<tc>, window_params = [{transform_indices = @transform_0, window_bounds = array<i64: 1024, 128>}, {pipeline_mode = #tpu.pipeline_mode<synchronous>, transform_indices = @transform_1, window_bounds = array<i64: 128, 128>}, {pipeline_mode = #tpu.pipeline_mode<synchronous>, transform_indices = @transform_2, window_bounds = array<i64: 1, 128>}, {transform_indices = @transform_3, window_bounds = array<i64: 1024, 128>}]} {
    %c0 = arith.constant 0 : index
    %c0_0 = arith.constant 0 : index
    %0 = vector.load %arg1[%c0, %c0_0] : memref<1024x128xbf16, #tpu.memory_space<vmem>>, vector<1024x128xbf16>
    %c0_1 = arith.constant 0 : index
    %c0_2 = arith.constant 0 : index
    %1 = vector.load %arg2[%c0_1, %c0_2] : memref<128x128xbf16, #tpu.memory_space<vmem>>, vector<128x128xbf16>
    %cst = arith.constant dense<0.000000e+00> : vector<1024x128xf32>
    %2 = tpu.matmul %0, %1, %cst {dimension_numbers = #tpu.dot_dimension_numbers<[1], [0], [0], [1], [0, 0, 1, 1], [], []>} : vector<1024x128xbf16>, vector<128x128xbf16>, vector<1024x128xf32> -> vector<1024x128xf32>
    %c0_3 = arith.constant 0 : index
    %c0_4 = arith.constant 0 : index
    %3 = vector.load %arg3[%c0_3, %c0_4] : memref<1x128xf32, #tpu.memory_space<vmem>>, vector<1x128xf32>
    %4 = vector.broadcast %3 : vector<1x128xf32> to vector<1024x128xf32>
    %5 = arith.addf %2, %4 : vector<1024x128xf32>
    %cst_5 = arith.constant 0.000000e+00 : f32
    %6 = vector.broadcast %cst_5 : f32 to vector<1024x128xf32>
    %7 = arith.cmpf ogt, %5, %6 : vector<1024x128xf32>
    %cst_6 = arith.constant 2.000000e-01 : f32
    %8 = vector.broadcast %cst_6 : f32 to vector<1024x128xf32>
    %9 = arith.mulf %8, %5 : vector<1024x128xf32>
    %10 = arith.select %7, %5, %9 : vector<1024x128xi1>, vector<1024x128xf32>
    %11 = arith.truncf %10 : vector<1024x128xf32> to vector<1024x128xbf16>
    %c0_7 = arith.constant 0 : index
    %c0_8 = arith.constant 0 : index
    %12 = vector.load %arg4[%c0_7, %c0_8] : memref<1024x128xbf16, #tpu.memory_space<vmem>>, vector<1024x128xbf16>
    tpu.vector_store %arg4[%c0_7, %c0_8], %11 {strides = array<i32>} : memref<1024x128xbf16, #tpu.memory_space<vmem>>, vector<1024x128xbf16>,
    return
  }
  func.func @transform_0(%arg0: i32) -> (i32, i32) {
    %c0_i32 = arith.constant 0 : i32
    %c0_i32_0 = arith.constant 0 : i32
    return %arg0, %c0_i32 : i32, i32
  }
  func.func @transform_1(%arg0: i32) -> (i32, i32) {
    %c0_i32 = arith.constant 0 : i32
    %c0_i32_0 = arith.constant 0 : i32
    %c0_i32_1 = arith.constant 0 : i32
    return %c0_i32, %c0_i32_0 : i32, i32
  }
  func.func @transform_2(%arg0: i32) -> (i32, i32) {
    %c0_i32 = arith.constant 0 : i32
    %c0_i32_0 = arith.constant 0 : i32
    %c0_i32_1 = arith.constant 0 : i32
    return %c0_i32, %c0_i32_0 : i32, i32
  }
  func.func @transform_3(%arg0: i32) -> (i32, i32) {
    %c0_i32 = arith.constant 0 : i32
    %c0_i32_0 = arith.constant 0 : i32
    return %arg0, %c0_i32 : i32, i32
  }
}

module attributes {stable_mosaic.version = 11 : i64} {
  func.func @gemm_bias_lrelu_kernel(%arg0: i32, %arg1: memref<256x256xbf16, #tpu.memory_space<vmem>>, %arg2: memref<256x128xbf16, #tpu.memory_space<vmem>>, %arg3: memref<1x128xf32, #tpu.memory_space<vmem>>, %arg4: memref<256x128xbf16, #tpu.memory_space<vmem>>) attributes {dimension_semantics = [#tpu.dimension_semantics<parallel>], iteration_bounds = array<i64: 2>, scalar_prefetch = 0 : i64, scratch_operands = 0 : i64, tpu.core_type = #tpu.core_type<tc>, window_params = [{transform_indices = @transform_0, window_bounds = array<i64: 256, 256>}, {pipeline_mode = #tpu.pipeline_mode<synchronous>, transform_indices = @transform_1, window_bounds = array<i64: 256, 128>}, {pipeline_mode = #tpu.pipeline_mode<synchronous>, transform_indices = @transform_2, window_bounds = array<i64: 1, 128>}, {transform_indices = @transform_3, window_bounds = array<i64: 256, 128>}]} {
    %c0 = arith.constant 0 : index
    %c0_0 = arith.constant 0 : index
    %0 = vector.load %arg1[%c0, %c0_0] : memref<256x256xbf16, #tpu.memory_space<vmem>>, vector<256x256xbf16>
    %c0_1 = arith.constant 0 : index
    %c0_2 = arith.constant 0 : index
    %1 = vector.load %arg2[%c0_1, %c0_2] : memref<256x128xbf16, #tpu.memory_space<vmem>>, vector<256x128xbf16>
    %cst = arith.constant dense<0.000000e+00> : vector<256x128xf32>
    %2 = tpu.matmul %0, %1, %cst {dimension_numbers = #tpu.dot_dimension_numbers<[1], [0], [0], [1], [0, 0, 1, 1], [], []>} : vector<256x256xbf16>, vector<256x128xbf16>, vector<256x128xf32> -> vector<256x128xf32>
    %c0_3 = arith.constant 0 : index
    %c0_4 = arith.constant 0 : index
    %3 = vector.load %arg3[%c0_3, %c0_4] : memref<1x128xf32, #tpu.memory_space<vmem>>, vector<1x128xf32>
    %4 = vector.broadcast %3 : vector<1x128xf32> to vector<256x128xf32>
    %5 = arith.addf %2, %4 : vector<256x128xf32>
    %cst_5 = arith.constant 0.000000e+00 : f32
    %6 = vector.broadcast %cst_5 : f32 to vector<256x128xf32>
    %7 = arith.cmpf ogt, %5, %6 : vector<256x128xf32>
    %cst_6 = arith.constant 2.000000e-01 : f32
    %8 = vector.broadcast %cst_6 : f32 to vector<256x128xf32>
    %9 = arith.mulf %8, %5 : vector<256x128xf32>
    %10 = arith.select %7, %5, %9 : vector<256x128xi1>, vector<256x128xf32>
    %11 = arith.truncf %10 : vector<256x128xf32> to vector<256x128xbf16>
    %c0_7 = arith.constant 0 : index
    %c0_8 = arith.constant 0 : index
    %12 = vector.load %arg4[%c0_7, %c0_8] : memref<256x128xbf16, #tpu.memory_space<vmem>>, vector<256x128xbf16>
    tpu.vector_store %arg4[%c0_7, %c0_8], %11 {strides = array<i32>} : memref<256x128xbf16, #tpu.memory_space<vmem>>, vector<256x128xbf16>,
    return
  }
  func.func @transform_0(%arg0: i32) -> (i32, i32) {
    %c0_i32 = arith.constant 0 : i32
    %c0_i32_0 = arith.constant 0 : i32
    return %arg0, %c0_i32 : i32, i32
  }
  func.func @transform_1(%arg0: i32) -> (i32, i32) {
    %c0_i32 = arith.constant 0 : i32
    %c0_i32_0 = arith.constant 0 : i32
    %c0_i32_1 = arith.constant 0 : i32
    return %c0_i32, %c0_i32_0 : i32, i32
  }
  func.func @transform_2(%arg0: i32) -> (i32, i32) {
    %c0_i32 = arith.constant 0 : i32
    %c0_i32_0 = arith.constant 0 : i32
    %c0_i32_1 = arith.constant 0 : i32
    return %c0_i32, %c0_i32_0 : i32, i32
  }
  func.func @transform_3(%arg0: i32) -> (i32, i32) {
    %c0_i32 = arith.constant 0 : i32
    %c0_i32_0 = arith.constant 0 : i32
    return %arg0, %c0_i32 : i32, i32
  }
}

module attributes {stable_mosaic.version = 11 : i64} {
  func.func @gemm_bias_lrelu_kernel(%arg0: i32, %arg1: memref<64x512xbf16, #tpu.memory_space<vmem>>, %arg2: memref<512x128xbf16, #tpu.memory_space<vmem>>, %arg3: memref<1x128xf32, #tpu.memory_space<vmem>>, %arg4: memref<64x128xbf16, #tpu.memory_space<vmem>>) attributes {dimension_semantics = [#tpu.dimension_semantics<parallel>], iteration_bounds = array<i64: 2>, scalar_prefetch = 0 : i64, scratch_operands = 0 : i64, tpu.core_type = #tpu.core_type<tc>, window_params = [{transform_indices = @transform_0, window_bounds = array<i64: 64, 512>}, {pipeline_mode = #tpu.pipeline_mode<synchronous>, transform_indices = @transform_1, window_bounds = array<i64: 512, 128>}, {pipeline_mode = #tpu.pipeline_mode<synchronous>, transform_indices = @transform_2, window_bounds = array<i64: 1, 128>}, {transform_indices = @transform_3, window_bounds = array<i64: 64, 128>}]} {
    %c0 = arith.constant 0 : index
    %c0_0 = arith.constant 0 : index
    %0 = vector.load %arg1[%c0, %c0_0] : memref<64x512xbf16, #tpu.memory_space<vmem>>, vector<64x512xbf16>
    %c0_1 = arith.constant 0 : index
    %c0_2 = arith.constant 0 : index
    %1 = vector.load %arg2[%c0_1, %c0_2] : memref<512x128xbf16, #tpu.memory_space<vmem>>, vector<512x128xbf16>
    %cst = arith.constant dense<0.000000e+00> : vector<64x128xf32>
    %2 = tpu.matmul %0, %1, %cst {dimension_numbers = #tpu.dot_dimension_numbers<[1], [0], [0], [1], [0, 0, 1, 1], [], []>} : vector<64x512xbf16>, vector<512x128xbf16>, vector<64x128xf32> -> vector<64x128xf32>
    %c0_3 = arith.constant 0 : index
    %c0_4 = arith.constant 0 : index
    %3 = vector.load %arg3[%c0_3, %c0_4] : memref<1x128xf32, #tpu.memory_space<vmem>>, vector<1x128xf32>
    %4 = vector.broadcast %3 : vector<1x128xf32> to vector<64x128xf32>
    %5 = arith.addf %2, %4 : vector<64x128xf32>
    %cst_5 = arith.constant 0.000000e+00 : f32
    %6 = vector.broadcast %cst_5 : f32 to vector<64x128xf32>
    %7 = arith.cmpf ogt, %5, %6 : vector<64x128xf32>
    %cst_6 = arith.constant 2.000000e-01 : f32
    %8 = vector.broadcast %cst_6 : f32 to vector<64x128xf32>
    %9 = arith.mulf %8, %5 : vector<64x128xf32>
    %10 = arith.select %7, %5, %9 : vector<64x128xi1>, vector<64x128xf32>
    %11 = arith.truncf %10 : vector<64x128xf32> to vector<64x128xbf16>
    %c0_7 = arith.constant 0 : index
    %c0_8 = arith.constant 0 : index
    %12 = vector.load %arg4[%c0_7, %c0_8] : memref<64x128xbf16, #tpu.memory_space<vmem>>, vector<64x128xbf16>
    tpu.vector_store %arg4[%c0_7, %c0_8], %11 {strides = array<i32>} : memref<64x128xbf16, #tpu.memory_space<vmem>>, vector<64x128xbf16>,
    return
  }
  func.func @transform_0(%arg0: i32) -> (i32, i32) {
    %c0_i32 = arith.constant 0 : i32
    %c0_i32_0 = arith.constant 0 : i32
    return %arg0, %c0_i32 : i32, i32
  }
  func.func @transform_1(%arg0: i32) -> (i32, i32) {
    %c0_i32 = arith.constant 0 : i32
    %c0_i32_0 = arith.constant 0 : i32
    %c0_i32_1 = arith.constant 0 : i32
    return %c0_i32, %c0_i32_0 : i32, i32
  }
  func.func @transform_2(%arg0: i32) -> (i32, i32) {
    %c0_i32 = arith.constant 0 : i32
    %c0_i32_0 = arith.constant 0 : i32
    %c0_i32_1 = arith.constant 0 : i32
    return %c0_i32, %c0_i32_0 : i32, i32
  }
  func.func @transform_3(%arg0: i32) -> (i32, i32) {
    %c0_i32 = arith.constant 0 : i32
    %c0_i32_0 = arith.constant 0 : i32
    return %arg0, %c0_i32 : i32, i32
  }
}

module attributes {stable_mosaic.version = 11 : i64} {
  func.func @gemm_bias_lrelu_kernel(%arg0: i32, %arg1: memref<16x1024xbf16, #tpu.memory_space<vmem>>, %arg2: memref<1024x128xbf16, #tpu.memory_space<vmem>>, %arg3: memref<1x128xf32, #tpu.memory_space<vmem>>, %arg4: memref<16x128xbf16, #tpu.memory_space<vmem>>) attributes {dimension_semantics = [#tpu.dimension_semantics<parallel>], iteration_bounds = array<i64: 2>, scalar_prefetch = 0 : i64, scratch_operands = 0 : i64, tpu.core_type = #tpu.core_type<tc>, window_params = [{transform_indices = @transform_0, window_bounds = array<i64: 16, 1024>}, {pipeline_mode = #tpu.pipeline_mode<synchronous>, transform_indices = @transform_1, window_bounds = array<i64: 1024, 128>}, {pipeline_mode = #tpu.pipeline_mode<synchronous>, transform_indices = @transform_2, window_bounds = array<i64: 1, 128>}, {transform_indices = @transform_3, window_bounds = array<i64: 16, 128>}]} {
    %c0 = arith.constant 0 : index
    %c0_0 = arith.constant 0 : index
    %0 = vector.load %arg1[%c0, %c0_0] : memref<16x1024xbf16, #tpu.memory_space<vmem>>, vector<16x1024xbf16>
    %c0_1 = arith.constant 0 : index
    %c0_2 = arith.constant 0 : index
    %1 = vector.load %arg2[%c0_1, %c0_2] : memref<1024x128xbf16, #tpu.memory_space<vmem>>, vector<1024x128xbf16>
    %cst = arith.constant dense<0.000000e+00> : vector<16x128xf32>
    %2 = tpu.matmul %0, %1, %cst {dimension_numbers = #tpu.dot_dimension_numbers<[1], [0], [0], [1], [0, 0, 1, 1], [], []>} : vector<16x1024xbf16>, vector<1024x128xbf16>, vector<16x128xf32> -> vector<16x128xf32>
    %c0_3 = arith.constant 0 : index
    %c0_4 = arith.constant 0 : index
    %3 = vector.load %arg3[%c0_3, %c0_4] : memref<1x128xf32, #tpu.memory_space<vmem>>, vector<1x128xf32>
    %4 = vector.broadcast %3 : vector<1x128xf32> to vector<16x128xf32>
    %5 = arith.addf %2, %4 : vector<16x128xf32>
    %cst_5 = arith.constant 0.000000e+00 : f32
    %6 = vector.broadcast %cst_5 : f32 to vector<16x128xf32>
    %7 = arith.cmpf ogt, %5, %6 : vector<16x128xf32>
    %cst_6 = arith.constant 2.000000e-01 : f32
    %8 = vector.broadcast %cst_6 : f32 to vector<16x128xf32>
    %9 = arith.mulf %8, %5 : vector<16x128xf32>
    %10 = arith.select %7, %5, %9 : vector<16x128xi1>, vector<16x128xf32>
    %11 = arith.truncf %10 : vector<16x128xf32> to vector<16x128xbf16>
    %c0_7 = arith.constant 0 : index
    %c0_8 = arith.constant 0 : index
    %12 = vector.load %arg4[%c0_7, %c0_8] : memref<16x128xbf16, #tpu.memory_space<vmem>>, vector<16x128xbf16>
    tpu.vector_store %arg4[%c0_7, %c0_8], %11 {strides = array<i32>} : memref<16x128xbf16, #tpu.memory_space<vmem>>, vector<16x128xbf16>,
    return
  }
  func.func @transform_0(%arg0: i32) -> (i32, i32) {
    %c0_i32 = arith.constant 0 : i32
    %c0_i32_0 = arith.constant 0 : i32
    return %arg0, %c0_i32 : i32, i32
  }
  func.func @transform_1(%arg0: i32) -> (i32, i32) {
    %c0_i32 = arith.constant 0 : i32
    %c0_i32_0 = arith.constant 0 : i32
    %c0_i32_1 = arith.constant 0 : i32
    return %c0_i32, %c0_i32_0 : i32, i32
  }
  func.func @transform_2(%arg0: i32) -> (i32, i32) {
    %c0_i32 = arith.constant 0 : i32
    %c0_i32_0 = arith.constant 0 : i32
    %c0_i32_1 = arith.constant 0 : i32
    return %c0_i32, %c0_i32_0 : i32, i32
  }
  func.func @transform_3(%arg0: i32) -> (i32, i32) {
    %c0_i32 = arith.constant 0 : i32
    %c0_i32_0 = arith.constant 0 : i32
    return %arg0, %c0_i32 : i32, i32
  }
}

</mosaic_0001>

<llo_original>
// kernel: stage1_d_img_forward.4
$region0: #{stage1_d_img_forward.4}
  #allocation0 [shape = 'u32[]', space=smem, size = 0x4, offset = 0x4, fixed_abs, tag = 'smem constant byte address 0x4 - core index']
  #allocation1 [shape = 'u32[144,128]{1,0:T(1,128)}', space=vmem, size = 0x12000, scoped, tag = 'internal scratch']
  %s0 = inlined_call_operand.vmem [shape: bf16[2048,128], index: 0, kind: input, shape index: {}]
  %s1 = inlined_call_operand.vmem [shape: bf16[128,128], index: 1, kind: input, shape index: {}]
  %s2 = inlined_call_operand.vmem [shape: f32[1,128], index: 2, kind: input, shape index: {}]
  %s3 = inlined_call_operand.vmem [shape: bf16[2048,128], index: 3, kind: output, shape index: {}]
  %s4 = sld [smem:[#allocation0]]
  $region45: #{stage1_d_img_forward.4} parent=0
    _
  %s6 = ssub.s32 1, %s4
  %s7 = scalar_select 0, %s6, %s4
  loop: start=0, step=1, limit=4
  $region2: #{stage1_d_img_forward.4} parent=0 // loop_pre_header
    _
  $region3: #{stage1_d_img_forward.4} parent=0 // loop_header
    %s9 = sphi 0, %s13
    %p10 = scmp.ge.s32.totalorder %s9, 4
    %s19 = sphi 0, %s21
    %s22 = sphi 0, %s19
    %s23 = sphi 0, %s22
    %s39 = sphi 0, %s23
    %s43 = sphi 0, %s43
    %s45 = sphi 0, %s43
    %s46 = sphi 0, %s45
    %s60 = sphi 0, %s46
    %s64 = sphi 0, %s64
    %s66 = sphi 0, %s64
    %s67 = sphi 0, %s66
    %s81 = sphi 0, %s67
    %s87 = sphi 0, %s89
    %s90 = sphi 0, %s87
    %s91 = sphi 0, %s90
    %s107 = sphi 0, %s91
  $region4: #{stage1_d_img_forward.4} parent=0 // loop_header_branch
    %12 = sbr.rel (%p10) target = $region8
  $region5: #{stage1_d_img_forward.4} parent=0 // loop_body
    %s14 = ssub.s32 %s9, 1
    %s15 = ssub.s32 %s9, 2
    %s16 = sadd.s32 %s9, 1
    %s17 = ssub.s32 %s9, %s16
    %p18 = scmp.eq.s32.totalorder %s17, 0
    %s20 = sadd.s32 %s19, 1
    %s21 = scalar_select %p18, %s19, %s20
    %p24 = pneg %p18
    %p25 = scmp.eq.s32.totalorder %s9, 1
    %p26 = por %p24, %p25
    %p27 = scmp.ne.s32.totalorder %s19, %s22
    %p28 = scmp.eq.s32.totalorder %s9, 0
    %p29 = por %p27, %p28
    %p30 = scmp.ne.s32.totalorder %s19, %s22
    %p31 = scmp.eq.s32.totalorder %s14, 1
    %p32 = por %p30, %p31
    %p33 = scmp.ne.s32.totalorder %s22, %s23
    %p34 = scmp.eq.s32.totalorder %s14, 0
    %p35 = por %p33, %p34
    %p36 = scmp.ne.s32.totalorder %s22, %s23
    %p37 = scmp.eq.s32.totalorder %s15, 1
    %p38 = por %p36, %p37
    %p40 = scmp.ne.s32.totalorder %s23, %s39
    %p41 = scmp.eq.s32.totalorder %s15, 0
    %p42 = por %p40, %p41
    %s44 = sadd.s32 %s43, 1
    %p47 = scmp.eq.s32.totalorder %s9, 1
    %p48 = scmp.ne.s32.totalorder %s43, %s45
    %p49 = scmp.eq.s32.totalorder %s9, 0
    %p50 = por %p48, %p49
    %p51 = scmp.ne.s32.totalorder %s43, %s45
    %p52 = scmp.eq.s32.totalorder %s14, 1
    %p53 = por %p51, %p52
    %p54 = scmp.ne.s32.totalorder %s45, %s46
    %p55 = scmp.eq.s32.totalorder %s14, 0
    %p56 = por %p54, %p55
    %p57 = scmp.ne.s32.totalorder %s45, %s46
    %p58 = scmp.eq.s32.totalorder %s15, 1
    %p59 = por %p57, %p58
    %p61 = scmp.ne.s32.totalorder %s46, %s60
    %p62 = scmp.eq.s32.totalorder %s15, 0
    %p63 = por %p61, %p62
    %s65 = sadd.s32 %s64, 1
    %p68 = scmp.eq.s32.totalorder %s9, 1
    %p69 = scmp.ne.s32.totalorder %s64, %s66
    %p70 = scmp.eq.s32.totalorder %s9, 0
    %p71 = por %p69, %p70
    %p72 = scmp.ne.s32.totalorder %s64, %s66
    %p73 = scmp.eq.s32.totalorder %s14, 1
    %p74 = por %p72, %p73
    %p75 = scmp.ne.s32.totalorder %s66, %s67
    %p76 = scmp.eq.s32.totalorder %s14, 0
    %p77 = por %p75, %p76
    %p78 = scmp.ne.s32.totalorder %s66, %s67
    %p79 = scmp.eq.s32.totalorder %s15, 1
    %p80 = por %p78, %p79
    %p82 = scmp.ne.s32.totalorder %s67, %s81
    %p83 = scmp.eq.s32.totalorder %s15, 0
    %p84 = por %p82, %p83
    %s85 = ssub.s32 %s9, %s16
    %p86 = scmp.eq.s32.totalorder %s85, 0
    %s88 = sadd.s32 %s87, 1
    %s89 = scalar_select %p86, %s87, %s88
    %p92 = pneg %p86
    %p93 = scmp.eq.s32.totalorder %s9, 1
    %p94 = por %p92, %p93
    %p95 = scmp.ne.s32.totalorder %s87, %s90
    %p96 = scmp.eq.s32.totalorder %s9, 0
    %p97 = por %p95, %p96
    %p98 = scmp.ne.s32.totalorder %s87, %s90
    %p99 = scmp.eq.s32.totalorder %s14, 1
    %p100 = por %p98, %p99
    %p101 = scmp.ne.s32.totalorder %s90, %s91
    %p102 = scmp.eq.s32.totalorder %s14, 0
    %p103 = por %p101, %p102
    %p104 = scmp.ne.s32.totalorder %s90, %s91
    %p105 = scmp.eq.s32.totalorder %s15, 1
    %p106 = por %p104, %p105
    %p108 = scmp.ne.s32.totalorder %s91, %s107
    %p109 = scmp.eq.s32.totalorder %s15, 0
    %p110 = por %p108, %p109
    %p111 = scmp.le.s32.totalorder 1, %s9
    %p112 = scmp.lt.s32.totalorder %s9, 3
    %p113 = pnand %p111, %p112
    %p114 = pneg %p113
    // Predicated region
    $region9: #{stage1_d_img_forward.4} parent=5 // pred_check
      _
    $region10: #{stage1_d_img_forward.4} parent=5 // pred_check_branch
      %116 = sbr.rel (%p113) target = $region12
    $region11: #{stage1_d_img_forward.4} parent=5 // pred_region
      %s117 = ssub.s32 %s9, 1
      // Predicated region
      $region13: #{stage1_d_img_forward.4} parent=11 // pred_check
        %p118 = pneg %p56
      $region14: #{stage1_d_img_forward.4} parent=11 // pred_check_branch
        %120 = sbr.rel (%p118) target = $region16
      $region15: #{stage1_d_img_forward.4} parent=11 // pred_region
        _
      $region16: #{stage1_d_img_forward.4} parent=11 // pred_fallthru
        _
      // Predicated region
      $region17: #{stage1_d_img_forward.4} parent=11 // pred_check
        %p121 = pneg %p77
      $region18: #{stage1_d_img_forward.4} parent=11 // pred_check_branch
        %123 = sbr.rel (%p121) target = $region20
      $region19: #{stage1_d_img_forward.4} parent=11 // pred_region
        _
      $region20: #{stage1_d_img_forward.4} parent=11 // pred_fallthru
        _
    $region12: #{stage1_d_img_forward.4} parent=5 // pred_fallthru
      _
    %p124 = scmp.lt.s32.totalorder %s9, 2
    // Predicated region
    $region21: #{stage1_d_img_forward.4} parent=5 // pred_check
      %p125 = pneg %p124
    $region22: #{stage1_d_img_forward.4} parent=5 // pred_check_branch
      %127 = sbr.rel (%p125) target = $region24
    $region23: #{stage1_d_img_forward.4} parent=5 // pred_region
      // Predicated region
      $region25: #{stage1_d_img_forward.4} parent=23 // pred_check
        %p128 = pneg %p29
      $region26: #{stage1_d_img_forward.4} parent=23 // pred_check_branch
        %130 = sbr.rel (%p128) target = $region28
      $region27: #{stage1_d_img_forward.4} parent=23 // pred_region
        %s131 = smul.u32 128, %s9
        %p132 = scmp.lt.s32.totalorder %s131, 255
        %s133 = scalar_select %p132, %s131, 255
        %s134 = smul.addr %s133, 4
        %s135 = scalar_lea.vmem %s0, %s134
        %s136 = smul.u32 128, %s9
      $region28: #{stage1_d_img_forward.4} parent=23 // pred_fallthru
        _
    $region24: #{stage1_d_img_forward.4} parent=5 // pred_fallthru
      _
    %p137 = scmp.le.s32.totalorder 1, %s9
    %p138 = scmp.lt.s32.totalorder %s9, 3
    %p139 = pnand %p137, %p138
    %p140 = pneg %p139
    // Predicated region
    $region29: #{stage1_d_img_forward.4} parent=5 // pred_check
      _
    $region30: #{stage1_d_img_forward.4} parent=5 // pred_check_branch
      %142 = sbr.rel (%p139) target = $region32
    $region31: #{stage1_d_img_forward.4} parent=5 // pred_region
      %s143 = ssub.s32 %s9, 1
      %s144 = smul.u32 128, %s14
      %p145 = scmp.lt.s32.totalorder %s144, 255
      %s146 = scalar_select %p145, %s144, 255
      %s147 = smul.addr %s146, 4
      %s148 = scalar_lea.vmem %s0, %s147
      %p149 = pneg %p35
      %p150 = pneg %p32
      %p151 = pneg %p56
      %p152 = pneg %p53
      %p153 = pneg %p77
      %p154 = pneg %p74
      %p155 = pneg %p103
      %p156 = pneg %p100
      %s157 = smul.u32 128, %s14
      %p158 = scmp.lt.s32.totalorder %s157, 255
      %s159 = scalar_select %p158, %s157, 255
      %s160 = smul.addr %s159, 4
      %s161 = scalar_lea.vmem %s3, %s160
      %s162 = smul.u32 128, %s14
      %p163 = scmp.lt.s32.totalorder %s162, 255
      %s164 = scalar_select %p163, %s162, 255
      %s165 = smul.addr %s164, 4
      %s166 = scalar_lea.vmem %s0, %s165
      %s167 = smul.u32 128, %s14
      %s168 = smul.u32 128, %s14
      %p169 = scmp.lt.s32.totalorder %s168, 255
      %s170 = scalar_select %p169, %s168, 255
      %s171 = smul.addr %s170, 4
      %s172 = scalar_lea.vmem %s3, %s171
      %s173 = smul.u32 128, %s14
      %v175 = vld [vmem:[%s166] sm:$0xf]
      %v176 = vld [vmem:[%s166 + $0x4] sm:$0xf]
      %v177 = vld [vmem:[%s166 + $0x8] sm:$0xf]
      %v178 = vld [vmem:[%s166 + $0xc] sm:$0xf]
      %v179 = vld [vmem:[%s166 + $0x10] sm:$0xf]
      %v180 = vld [vmem:[%s166 + $0x14] sm:$0xf]
      %v181 = vld [vmem:[%s166 + $0x18] sm:$0xf]
      %v182 = vld [vmem:[%s166 + $0x1c] sm:$0xf]
      %v183 = vld [vmem:[%s166 + $0x20] sm:$0xf]
      %v184 = vld [vmem:[%s166 + $0x24] sm:$0xf]
      %v185 = vld [vmem:[%s166 + $0x28] sm:$0xf]
      %v186 = vld [vmem:[%s166 + $0x2c] sm:$0xf]
      %v187 = vld [vmem:[%s166 + $0x30] sm:$0xf]
      %v188 = vld [vmem:[%s166 + $0x34] sm:$0xf]
      %v189 = vld [vmem:[%s166 + $0x38] sm:$0xf]
      %v190 = vld [vmem:[%s166 + $0x3c] sm:$0xf]
      %v191 = vld [vmem:[%s166 + $0x40] sm:$0xf]
      %v192 = vld [vmem:[%s166 + $0x44] sm:$0xf]
      %v193 = vld [vmem:[%s166 + $0x48] sm:$0xf]
      %v194 = vld [vmem:[%s166 + $0x4c] sm:$0xf]
      %v195 = vld [vmem:[%s166 + $0x50] sm:$0xf]
      %v196 = vld [vmem:[%s166 + $0x54] sm:$0xf]
      %v197 = vld [vmem:[%s166 + $0x58] sm:$0xf]
      %v198 = vld [vmem:[%s166 + $0x5c] sm:$0xf]
      %v199 = vld [vmem:[%s166 + $0x60] sm:$0xf]
      %v200 = vld [vmem:[%s166 + $0x64] sm:$0xf]
      %v201 = vld [vmem:[%s166 + $0x68] sm:$0xf]
      %v202 = vld [vmem:[%s166 + $0x6c] sm:$0xf]
      %v203 = vld [vmem:[%s166 + $0x70] sm:$0xf]
      %v204 = vld [vmem:[%s166 + $0x74] sm:$0xf]
      %v205 = vld [vmem:[%s166 + $0x78] sm:$0xf]
      %v206 = vld [vmem:[%s166 + $0x7c] sm:$0xf]
      %v207 = vld [vmem:[%s166 + $0x80] sm:$0xf]
      %v208 = vld [vmem:[%s166 + $0x84] sm:$0xf]
      %v209 = vld [vmem:[%s166 + $0x88] sm:$0xf]
      %v210 = vld [vmem:[%s166 + $0x8c] sm:$0xf]
      %v211 = vld [vmem:[%s166 + $0x90] sm:$0xf]
      %v212 = vld [vmem:[%s166 + $0x94] sm:$0xf]
      %v213 = vld [vmem:[%s166 + $0x98] sm:$0xf]
      %v214 = vld [vmem:[%s166 + $0x9c] sm:$0xf]
      %v215 = vld [vmem:[%s166 + $0xa0] sm:$0xf]
      %v216 = vld [vmem:[%s166 + $0xa4] sm:$0xf]
      %v217 = vld [vmem:[%s166 + $0xa8] sm:$0xf]
      %v218 = vld [vmem:[%s166 + $0xac] sm:$0xf]
      %v219 = vld [vmem:[%s166 + $0xb0] sm:$0xf]
      %v220 = vld [vmem:[%s166 + $0xb4] sm:$0xf]
      %v221 = vld [vmem:[%s166 + $0xb8] sm:$0xf]
      %v222 = vld [vmem:[%s166 + $0xbc] sm:$0xf]
      %v223 = vld [vmem:[%s166 + $0xc0] sm:$0xf]
      %v224 = vld [vmem:[%s166 + $0xc4] sm:$0xf]
      %v225 = vld [vmem:[%s166 + $0xc8] sm:$0xf]
      %v226 = vld [vmem:[%s166 + $0xcc] sm:$0xf]
      %v227 = vld [vmem:[%s166 + $0xd0] sm:$0xf]
      %v228 = vld [vmem:[%s166 + $0xd4] sm:$0xf]
      %v229 = vld [vmem:[%s166 + $0xd8] sm:$0xf]
      %v230 = vld [vmem:[%s166 + $0xdc] sm:$0xf]
      %v231 = vld [vmem:[%s166 + $0xe0] sm:$0xf]
      %v232 = vld [vmem:[%s166 + $0xe4] sm:$0xf]
      %v233 = vld [vmem:[%s166 + $0xe8] sm:$0xf]
      %v234 = vld [vmem:[%s166 + $0xec] sm:$0xf]
      %v235 = vld [vmem:[%s166 + $0xf0] sm:$0xf]
      %v236 = vld [vmem:[%s166 + $0xf4] sm:$0xf]
      %v237 = vld [vmem:[%s166 + $0xf8] sm:$0xf]
      %v238 = vld [vmem:[%s166 + $0xfc] sm:$0xf]
      %v239 = vld [vmem:[%s166 + $0x100] sm:$0xf]
      %v240 = vld [vmem:[%s166 + $0x104] sm:$0xf]
      %v241 = vld [vmem:[%s166 + $0x108] sm:$0xf]
      %v242 = vld [vmem:[%s166 + $0x10c] sm:$0xf]
      %v243 = vld [vmem:[%s166 + $0x110] sm:$0xf]
      %v244 = vld [vmem:[%s166 + $0x114] sm:$0xf]
      %v245 = vld [vmem:[%s166 + $0x118] sm:$0xf]
      %v246 = vld [vmem:[%s166 + $0x11c] sm:$0xf]
      %v247 = vld [vmem:[%s166 + $0x120] sm:$0xf]
      %v248 = vld [vmem:[%s166 + $0x124] sm:$0xf]
      %v249 = vld [vmem:[%s166 + $0x128] sm:$0xf]
      %v250 = vld [vmem:[%s166 + $0x12c] sm:$0xf]
      %v251 = vld [vmem:[%s166 + $0x130] sm:$0xf]
      %v252 = vld [vmem:[%s166 + $0x134] sm:$0xf]
      %v253 = vld [vmem:[%s166 + $0x138] sm:$0xf]
      %v254 = vld [vmem:[%s166 + $0x13c] sm:$0xf]
      %v255 = vld [vmem:[%s166 + $0x140] sm:$0xf]
      %v256 = vld [vmem:[%s166 + $0x144] sm:$0xf]
      %v257 = vld [vmem:[%s166 + $0x148] sm:$0xf]
      %v258 = vld [vmem:[%s166 + $0x14c] sm:$0xf]
      %v259 = vld [vmem:[%s166 + $0x150] sm:$0xf]
      %v260 = vld [vmem:[%s166 + $0x154] sm:$0xf]
      %v261 = vld [vmem:[%s166 + $0x158] sm:$0xf]
      %v262 = vld [vmem:[%s166 + $0x15c] sm:$0xf]
      %v263 = vld [vmem:[%s166 + $0x160] sm:$0xf]
      %v264 = vld [vmem:[%s166 + $0x164] sm:$0xf]
      %v265 = vld [vmem:[%s166 + $0x168] sm:$0xf]
      %v266 = vld [vmem:[%s166 + $0x16c] sm:$0xf]
      %v267 = vld [vmem:[%s166 + $0x170] sm:$0xf]
      %v268 = vld [vmem:[%s166 + $0x174] sm:$0xf]
      %v269 = vld [vmem:[%s166 + $0x178] sm:$0xf]
      %v270 = vld [vmem:[%s166 + $0x17c] sm:$0xf]
      %v271 = vld [vmem:[%s166 + $0x180] sm:$0xf]
      %v272 = vld [vmem:[%s166 + $0x184] sm:$0xf]
      %v273 = vld [vmem:[%s166 + $0x188] sm:$0xf]
      %v274 = vld [vmem:[%s166 + $0x18c] sm:$0xf]
      %v275 = vld [vmem:[%s166 + $0x190] sm:$0xf]
      %v276 = vld [vmem:[%s166 + $0x194] sm:$0xf]
      %v277 = vld [vmem:[%s166 + $0x198] sm:$0xf]
      %v278 = vld [vmem:[%s166 + $0x19c] sm:$0xf]
      %v279 = vld [vmem:[%s166 + $0x1a0] sm:$0xf]
      %v280 = vld [vmem:[%s166 + $0x1a4] sm:$0xf]
      %v281 = vld [vmem:[%s166 + $0x1a8] sm:$0xf]
      %v282 = vld [vmem:[%s166 + $0x1ac] sm:$0xf]
      %v283 = vld [vmem:[%s166 + $0x1b0] sm:$0xf]
      %v284 = vld [vmem:[%s166 + $0x1b4] sm:$0xf]
      %v285 = vld [vmem:[%s166 + $0x1b8] sm:$0xf]
      %v286 = vld [vmem:[%s166 + $0x1bc] sm:$0xf]
      %v287 = vld [vmem:[%s166 + $0x1c0] sm:$0xf]
      %v288 = vld [vmem:[%s166 + $0x1c4] sm:$0xf]
      %v289 = vld [vmem:[%s166 + $0x1c8] sm:$0xf]
      %v290 = vld [vmem:[%s166 + $0x1cc] sm:$0xf]
      %v291 = vld [vmem:[%s166 + $0x1d0] sm:$0xf]
      %v292 = vld [vmem:[%s166 + $0x1d4] sm:$0xf]
      %v293 = vld [vmem:[%s166 + $0x1d8] sm:$0xf]
      %v294 = vld [vmem:[%s166 + $0x1dc] sm:$0xf]
      %v295 = vld [vmem:[%s166 + $0x1e0] sm:$0xf]
      %v296 = vld [vmem:[%s166 + $0x1e4] sm:$0xf]
      %v297 = vld [vmem:[%s166 + $0x1e8] sm:$0xf]
      %v298 = vld [vmem:[%s166 + $0x1ec] sm:$0xf]
      %v299 = vld [vmem:[%s166 + $0x1f0] sm:$0xf]
      %v300 = vld [vmem:[%s166 + $0x1f4] sm:$0xf]
      %v301 = vld [vmem:[%s166 + $0x1f8] sm:$0xf]
      %v302 = vld [vmem:[%s166 + $0x1fc] sm:$0xf]
      %v303 = vld [vmem:[%s1] sm:$0xf]
      %v304 = vld [vmem:[%s1 + $0x4] sm:$0xf]
      %v305 = vld [vmem:[%s1 + $0x8] sm:$0xf]
      %v306 = vld [vmem:[%s1 + $0xc] sm:$0xf]
      %v307 = vld [vmem:[%s1 + $0x10] sm:$0xf]
      %v308 = vld [vmem:[%s1 + $0x14] sm:$0xf]
      %v309 = vld [vmem:[%s1 + $0x18] sm:$0xf]
      %v310 = vld [vmem:[%s1 + $0x1c] sm:$0xf]
      %v311 = vld [vmem:[%s1 + $0x20] sm:$0xf]
      %v312 = vld [vmem:[%s1 + $0x24] sm:$0xf]
      %v313 = vld [vmem:[%s1 + $0x28] sm:$0xf]
      %v314 = vld [vmem:[%s1 + $0x2c] sm:$0xf]
      %v315 = vld [vmem:[%s1 + $0x30] sm:$0xf]
      %v316 = vld [vmem:[%s1 + $0x34] sm:$0xf]
      %v317 = vld [vmem:[%s1 + $0x38] sm:$0xf]
      %v318 = vld [vmem:[%s1 + $0x3c] sm:$0xf]
      %v319 = vld [vmem:[%s2] sm:$0x1]
      %v321 = vlaneseq
      %v322 = vshrl.u32 %v321, 7
      %v323 = vsub.s32 0, %v322
      %v324 = vrot.slane %v319, %v323
      %v454 = vunpack.c.l.b16 %v175
      %v455 = vunpack.c.l.b16 %v176
      %v456 = vunpack.c.l.b16 %v177
      %v457 = vunpack.c.l.b16 %v178
      %v458 = vunpack.c.l.b16 %v179
      %v459 = vunpack.c.l.b16 %v180
      %v460 = vunpack.c.l.b16 %v181
      %v461 = vunpack.c.l.b16 %v182
      %v462 = vunpack.c.l.b16 %v183
      %v463 = vunpack.c.l.b16 %v184
      %v464 = vunpack.c.l.b16 %v185
      %v465 = vunpack.c.l.b16 %v186
      %v466 = vunpack.c.l.b16 %v187
      %v467 = vunpack.c.l.b16 %v188
      %v468 = vunpack.c.l.b16 %v189
      %v469 = vunpack.c.l.b16 %v190
      %v470 = vunpack.c.l.b16 %v191
      %v471 = vunpack.c.l.b16 %v192
      %v472 = vunpack.c.l.b16 %v193
      %v473 = vunpack.c.l.b16 %v194
      %v474 = vunpack.c.l.b16 %v195
      %v475 = vunpack.c.l.b16 %v196
      %v476 = vunpack.c.l.b16 %v197
      %v477 = vunpack.c.l.b16 %v198
      %v478 = vunpack.c.l.b16 %v199
      %v479 = vunpack.c.l.b16 %v200
      %v480 = vunpack.c.l.b16 %v201
      %v481 = vunpack.c.l.b16 %v202
      %v482 = vunpack.c.l.b16 %v203
      %v483 = vunpack.c.l.b16 %v204
      %v484 = vunpack.c.l.b16 %v205
      %v485 = vunpack.c.l.b16 %v206
      %v486 = vunpack.c.l.b16 %v207
      %v487 = vunpack.c.l.b16 %v208
      %v488 = vunpack.c.l.b16 %v209
      %v489 = vunpack.c.l.b16 %v210
      %v490 = vunpack.c.l.b16 %v211
      %v491 = vunpack.c.l.b16 %v212
      %v492 = vunpack.c.l.b16 %v213
      %v493 = vunpack.c.l.b16 %v214
      %v494 = vunpack.c.l.b16 %v215
      %v495 = vunpack.c.l.b16 %v216
      %v496 = vunpack.c.l.b16 %v217
      %v497 = vunpack.c.l.b16 %v218
      %v498 = vunpack.c.l.b16 %v219
      %v499 = vunpack.c.l.b16 %v220
      %v500 = vunpack.c.l.b16 %v221
      %v501 = vunpack.c.l.b16 %v222
      %v502 = vunpack.c.l.b16 %v223
      %v503 = vunpack.c.l.b16 %v224
      %v504 = vunpack.c.l.b16 %v225
      %v505 = vunpack.c.l.b16 %v226
      %v506 = vunpack.c.l.b16 %v227
      %v507 = vunpack.c.l.b16 %v228
      %v508 = vunpack.c.l.b16 %v229
      %v509 = vunpack.c.l.b16 %v230
      %v510 = vunpack.c.l.b16 %v231
      %v511 = vunpack.c.l.b16 %v232
      %v512 = vunpack.c.l.b16 %v233
      %v513 = vunpack.c.l.b16 %v234
      %v514 = vunpack.c.l.b16 %v235
      %v515 = vunpack.c.l.b16 %v236
      %v516 = vunpack.c.l.b16 %v237
      %v517 = vunpack.c.l.b16 %v238
      %v518 = vunpack.c.l.b16 %v239
      %v519 = vunpack.c.l.b16 %v240
      %v520 = vunpack.c.l.b16 %v241
      %v521 = vunpack.c.l.b16 %v242
      %v522 = vunpack.c.l.b16 %v243
      %v523 = vunpack.c.l.b16 %v244
      %v524 = vunpack.c.l.b16 %v245
      %v525 = vunpack.c.l.b16 %v246
      %v526 = vunpack.c.l.b16 %v247
      %v527 = vunpack.c.l.b16 %v248
      %v528 = vunpack.c.l.b16 %v249
      %v529 = vunpack.c.l.b16 %v250
      %v530 = vunpack.c.l.b16 %v251
      %v531 = vunpack.c.l.b16 %v252
      %v532 = vunpack.c.l.b16 %v253
      %v533 = vunpack.c.l.b16 %v254
      %v534 = vunpack.c.l.b16 %v255
      %v535 = vunpack.c.l.b16 %v256
      %v536 = vunpack.c.l.b16 %v257
      %v537 = vunpack.c.l.b16 %v258
      %v538 = vunpack.c.l.b16 %v259
      %v539 = vunpack.c.l.b16 %v260
      %v540 = vunpack.c.l.b16 %v261
      %v541 = vunpack.c.l.b16 %v262
      %v542 = vunpack.c.l.b16 %v263
      %v543 = vunpack.c.l.b16 %v264
      %v544 = vunpack.c.l.b16 %v265
      %v545 = vunpack.c.l.b16 %v266
      %v546 = vunpack.c.l.b16 %v267
      %v547 = vunpack.c.l.b16 %v268
      %v548 = vunpack.c.l.b16 %v269
      %v549 = vunpack.c.l.b16 %v270
      %v550 = vunpack.c.l.b16 %v271
      %v551 = vunpack.c.l.b16 %v272
      %v552 = vunpack.c.l.b16 %v273
      %v553 = vunpack.c.l.b16 %v274
      %v554 = vunpack.c.l.b16 %v275
      %v555 = vunpack.c.l.b16 %v276
      %v556 = vunpack.c.l.b16 %v277
      %v557 = vunpack.c.l.b16 %v278
      %v558 = vunpack.c.l.b16 %v279
      %v559 = vunpack.c.l.b16 %v280
      %v560 = vunpack.c.l.b16 %v281
      %v561 = vunpack.c.l.b16 %v282
      %v562 = vunpack.c.l.b16 %v283
      %v563 = vunpack.c.l.b16 %v284
      %v564 = vunpack.c.l.b16 %v285
      %v565 = vunpack.c.l.b16 %v286
      %v566 = vunpack.c.l.b16 %v287
      %v567 = vunpack.c.l.b16 %v288
      %v568 = vunpack.c.l.b16 %v289
      %v569 = vunpack.c.l.b16 %v290
      %v570 = vunpack.c.l.b16 %v291
      %v571 = vunpack.c.l.b16 %v292
      %v572 = vunpack.c.l.b16 %v293
      %v573 = vunpack.c.l.b16 %v294
      %v574 = vunpack.c.l.b16 %v295
      %v575 = vunpack.c.l.b16 %v296
      %v576 = vunpack.c.l.b16 %v297
      %v577 = vunpack.c.l.b16 %v298
      %v578 = vunpack.c.l.b16 %v299
      %v579 = vunpack.c.l.b16 %v300
      %v580 = vunpack.c.l.b16 %v301
      %v581 = vunpack.c.l.b16 %v302
      %v582 = vpack.c.b16 %v455, %v454
      %v583 = vpack.c.b16 %v457, %v456
      %v584 = vpack.c.b16 %v459, %v458
      %v585 = vpack.c.b16 %v461, %v460
      %v586 = vpack.c.b16 %v463, %v462
      %v587 = vpack.c.b16 %v465, %v464
      %v588 = vpack.c.b16 %v467, %v466
      %v589 = vpack.c.b16 %v469, %v468
      %v590 = vpack.c.b16 %v471, %v470
      %v591 = vpack.c.b16 %v473, %v472
      %v592 = vpack.c.b16 %v475, %v474
      %v593 = vpack.c.b16 %v477, %v476
      %v594 = vpack.c.b16 %v479, %v478
      %v595 = vpack.c.b16 %v481, %v480
      %v596 = vpack.c.b16 %v483, %v482
      %v597 = vpack.c.b16 %v485, %v484
      %v598 = vpack.c.b16 %v487, %v486
      %v599 = vpack.c.b16 %v489, %v488
      %v600 = vpack.c.b16 %v491, %v490
      %v601 = vpack.c.b16 %v493, %v492
      %v602 = vpack.c.b16 %v495, %v494
      %v603 = vpack.c.b16 %v497, %v496
      %v604 = vpack.c.b16 %v499, %v498
      %v605 = vpack.c.b16 %v501, %v500
      %v606 = vpack.c.b16 %v503, %v502
      %v607 = vpack.c.b16 %v505, %v504
      %v608 = vpack.c.b16 %v507, %v506
      %v609 = vpack.c.b16 %v509, %v508
      %v610 = vpack.c.b16 %v511, %v510
      %v611 = vpack.c.b16 %v513, %v512
      %v612 = vpack.c.b16 %v515, %v514
      %v613 = vpack.c.b16 %v517, %v516
      %v614 = vpack.c.b16 %v519, %v518
      %v615 = vpack.c.b16 %v521, %v520
      %v616 = vpack.c.b16 %v523, %v522
      %v617 = vpack.c.b16 %v525, %v524
      %v618 = vpack.c.b16 %v527, %v526
      %v619 = vpack.c.b16 %v529, %v528
      %v620 = vpack.c.b16 %v531, %v530
      %v621 = vpack.c.b16 %v533, %v532
      %v622 = vpack.c.b16 %v535, %v534
      %v623 = vpack.c.b16 %v537, %v536
      %v624 = vpack.c.b16 %v539, %v538
      %v625 = vpack.c.b16 %v541, %v540
      %v626 = vpack.c.b16 %v543, %v542
      %v627 = vpack.c.b16 %v545, %v544
      %v628 = vpack.c.b16 %v547, %v546
      %v629 = vpack.c.b16 %v549, %v548
      %v630 = vpack.c.b16 %v551, %v550
      %v631 = vpack.c.b16 %v553, %v552
      %v632 = vpack.c.b16 %v555, %v554
      %v633 = vpack.c.b16 %v557, %v556
      %v634 = vpack.c.b16 %v559, %v558
      %v635 = vpack.c.b16 %v561, %v560
      %v636 = vpack.c.b16 %v563, %v562
      %v637 = vpack.c.b16 %v565, %v564
      %v638 = vpack.c.b16 %v567, %v566
      %v639 = vpack.c.b16 %v569, %v568
      %v640 = vpack.c.b16 %v571, %v570
      %v641 = vpack.c.b16 %v573, %v572
      %v642 = vpack.c.b16 %v575, %v574
      %v643 = vpack.c.b16 %v577, %v576
      %v644 = vpack.c.b16 %v579, %v578
      %v645 = vpack.c.b16 %v581, %v580
      %v726 = vunpack.c.l.b16 %v303
      %v727 = vunpack.c.l.b16 %v304
      %v728 = vunpack.c.l.b16 %v305
      %v729 = vunpack.c.l.b16 %v306
      %v730 = vunpack.c.l.b16 %v307
      %v731 = vunpack.c.l.b16 %v308
      %v732 = vunpack.c.l.b16 %v309
      %v733 = vunpack.c.l.b16 %v310
      %v734 = vunpack.c.l.b16 %v311
      %v735 = vunpack.c.l.b16 %v312
      %v736 = vunpack.c.l.b16 %v313
      %v737 = vunpack.c.l.b16 %v314
      %v738 = vunpack.c.l.b16 %v315
      %v739 = vunpack.c.l.b16 %v316
      %v740 = vunpack.c.l.b16 %v317
      %v741 = vunpack.c.l.b16 %v318
      %v742 = vpack.c.b16 %v727, %v726
      %v743 = vpack.c.b16 %v729, %v728
      %v744 = vpack.c.b16 %v731, %v730
      %v745 = vpack.c.b16 %v733, %v732
      %v746 = vpack.c.b16 %v735, %v734
      %v747 = vpack.c.b16 %v737, %v736
      %v748 = vpack.c.b16 %v739, %v738
      %v749 = vpack.c.b16 %v741, %v740
      %758 = vmatprep.subr.bf16.mxu0 0
      %759 = vmatpush1.bf16.msra.mxu0 %v742
      %760 = vmatprep.subr.bf16.mxu0 0
      %761 = vmatpush1.bf16.msra.mxu0 %v743
      %762 = vmatprep.subr.bf16.mxu0 0
      %763 = vmatpush1.bf16.msra.mxu0 %v744
      %764 = vmatprep.subr.bf16.mxu0 0
      %765 = vmatpush1.bf16.msra.mxu0 %v745
      %766 = vmatprep.subr.bf16.mxu0 0
      %767 = vmatpush1.bf16.msra.mxu0 %v746
      %768 = vmatprep.subr.bf16.mxu0 0
      %769 = vmatpush1.bf16.msra.mxu0 %v747
      %770 = vmatprep.subr.bf16.mxu0 0
      %771 = vmatpush1.bf16.msra.mxu0 %v748
      %772 = vmatprep.subr.bf16.mxu0 0
      %773 = vmatpush1.bf16.msra.mxu0 %v749
      %774 = vmatprep.subr.bf16.mxu0 0
      %775 = vmatpush1.bf16.msra.mxu0 0
      %776 = vmatprep.subr.bf16.mxu0 0
      %777 = vmatpush1.bf16.msra.mxu0 0
      %778 = vmatprep.subr.bf16.mxu0 0
      %779 = vmatpush1.bf16.msra.mxu0 0
      %780 = vmatprep.subr.bf16.mxu0 0
      %781 = vmatpush1.bf16.msra.mxu0 0
      %782 = vmatprep.subr.bf16.mxu0 0
      %783 = vmatpush1.bf16.msra.mxu0 0
      %784 = vmatprep.subr.bf16.mxu0 0
      %785 = vmatpush1.bf16.msra.mxu0 0
      %786 = vmatprep.subr.bf16.mxu0 0
      %787 = vmatpush1.bf16.msra.mxu0 0
      %788 = vmatprep.subr.bf16.mxu0 0
      %789 = vmatpush1.bf16.msra.mxu0 0
      %790 = vmatprep.mubr.bf16.mxu0 0
      %791 = vmatmul.mubr.bf16.gmra.mrb[0].mxu0 %v582
      %v792 = vpop.f32.mrb[0].mxu0
      %v793 = vadd.f32 %v324, %v792
      %v794 = vpop.f32.mrb[0].mxu0
      %v795 = vpop.f32.mrb[0].mxu0
      %v796 = vadd.f32 %v324, %v795
      %v797 = vpop.f32.mrb[0].mxu0
      %798 = vmatprep.mubr.bf16.mxu0 0
      %799 = vmatmul.mubr.bf16.gmra.mrb[0].mxu0 %v583
      %v800 = vpop.f32.mrb[0].mxu0
      %v801 = vadd.f32 %v324, %v800
      %v802 = vpop.f32.mrb[0].mxu0
      %v803 = vpop.f32.mrb[0].mxu0
      %v804 = vadd.f32 %v324, %v803
      %v805 = vpop.f32.mrb[0].mxu0
      %806 = vmatprep.mubr.bf16.mxu0 0
      %807 = vmatmul.mubr.bf16.gmra.mrb[0].mxu0 %v584
      %v808 = vpop.f32.mrb[0].mxu0
      %v809 = vadd.f32 %v324, %v808
      %v810 = vpop.f32.mrb[0].mxu0
      %v811 = vpop.f32.mrb[0].mxu0
      %v812 = vadd.f32 %v324, %v811
      %v813 = vpop.f32.mrb[0].mxu0
      %814 = vmatprep.mubr.bf16.mxu0 0
      %815 = vmatmul.mubr.bf16.gmra.mrb[0].mxu0 %v585
      %v816 = vpop.f32.mrb[0].mxu0
      %v817 = vadd.f32 %v324, %v816
      %v818 = vpop.f32.mrb[0].mxu0
      %v819 = vpop.f32.mrb[0].mxu0
      %v820 = vadd.f32 %v324, %v819
      %v821 = vpop.f32.mrb[0].mxu0
      %822 = vmatprep.mubr.bf16.mxu0 0
      %823 = vmatmul.mubr.bf16.gmra.mrb[0].mxu0 %v586
      %v824 = vpop.f32.mrb[0].mxu0
      %v825 = vadd.f32 %v324, %v824
      %v826 = vpop.f32.mrb[0].mxu0
      %v827 = vpop.f32.mrb[0].mxu0
      %v828 = vadd.f32 %v324, %v827
      %v829 = vpop.f32.mrb[0].mxu0
      %830 = vmatprep.mubr.bf16.mxu0 0
      %831 = vmatmul.mubr.bf16.gmra.mrb[0].mxu0 %v587
      %v832 = vpop.f32.mrb[0].mxu0
      %v833 = vadd.f32 %v324, %v832
      %v834 = vpop.f32.mrb[0].mxu0
      %v835 = vpop.f32.mrb[0].mxu0
      %v836 = vadd.f32 %v324, %v835
      %v837 = vpop.f32.mrb[0].mxu0
      %838 = vmatprep.mubr.bf16.mxu0 0
      %839 = vmatmul.mubr.bf16.gmra.mrb[0].mxu0 %v588
      %v840 = vpop.f32.mrb[0].mxu0
      %v841 = vadd.f32 %v324, %v840
      %v842 = vpop.f32.mrb[0].mxu0
      %v843 = vpop.f32.mrb[0].mxu0
      %v844 = vadd.f32 %v324, %v843
      %v845 = vpop.f32.mrb[0].mxu0
      %846 = vmatprep.mubr.bf16.mxu0 0
      %847 = vmatmul.mubr.bf16.gmra.mrb[0].mxu0 %v589
      %v848 = vpop.f32.mrb[0].mxu0
      %v849 = vadd.f32 %v324, %v848
      %v850 = vpop.f32.mrb[0].mxu0
      %v851 = vpop.f32.mrb[0].mxu0
      %v852 = vadd.f32 %v324, %v851
      %v853 = vpop.f32.mrb[0].mxu0
      %854 = vmatprep.mubr.bf16.mxu0 0
      %855 = vmatmul.mubr.bf16.gmra.mrb[0].mxu0 %v590
      %v856 = vpop.f32.mrb[0].mxu0
      %v857 = vadd.f32 %v324, %v856
      %v858 = vpop.f32.mrb[0].mxu0
      %v859 = vpop.f32.mrb[0].mxu0
      %v860 = vadd.f32 %v324, %v859
      %v861 = vpop.f32.mrb[0].mxu0
      %862 = vmatprep.mubr.bf16.mxu0 0
      %863 = vmatmul.mubr.bf16.gmra.mrb[0].mxu0 %v591
      %v864 = vpop.f32.mrb[0].mxu0
      %v865 = vadd.f32 %v324, %v864
      %v866 = vpop.f32.mrb[0].mxu0
      %v867 = vpop.f32.mrb[0].mxu0
      %v868 = vadd.f32 %v324, %v867
      %v869 = vpop.f32.mrb[0].mxu0
      %870 = vmatprep.mubr.bf16.mxu0 0
      %871 = vmatmul.mubr.bf16.gmra.mrb[0].mxu0 %v592
      %v872 = vpop.f32.mrb[0].mxu0
      %v873 = vadd.f32 %v324, %v872
      %v874 = vpop.f32.mrb[0].mxu0
      %v875 = vpop.f32.mrb[0].mxu0
      %v876 = vadd.f32 %v324, %v875
      %v877 = vpop.f32.mrb[0].mxu0
      %878 = vmatprep.mubr.bf16.mxu0 0
      %879 = vmatmul.mubr.bf16.gmra.mrb[0].mxu0 %v593
      %v880 = vpop.f32.mrb[0].mxu0
      %v881 = vadd.f32 %v324, %v880
      %v882 = vpop.f32.mrb[0].mxu0
      %v883 = vpop.f32.mrb[0].mxu0
      %v884 = vadd.f32 %v324, %v883
      %v885 = vpop.f32.mrb[0].mxu0
      %886 = vmatprep.mubr.bf16.mxu0 0
      %887 = vmatmul.mubr.bf16.gmra.mrb[0].mxu0 %v594
      %v888 = vpop.f32.mrb[0].mxu0
      %v889 = vadd.f32 %v324, %v888
      %v890 = vpop.f32.mrb[0].mxu0
      %v891 = vpop.f32.mrb[0].mxu0
      %v892 = vadd.f32 %v324, %v891
      %v893 = vpop.f32.mrb[0].mxu0
      %894 = vmatprep.mubr.bf16.mxu0 0
      %895 = vmatmul.mubr.bf16.gmra.mrb[0].mxu0 %v595
      %v896 = vpop.f32.mrb[0].mxu0
      %v897 = vadd.f32 %v324, %v896
      %v898 = vpop.f32.mrb[0].mxu0
      %v899 = vpop.f32.mrb[0].mxu0
      %v900 = vadd.f32 %v324, %v899
      %v901 = vpop.f32.mrb[0].mxu0
      %902 = vmatprep.mubr.bf16.mxu0 0
      %903 = vmatmul.mubr.bf16.gmra.mrb[0].mxu0 %v596
      %v904 = vpop.f32.mrb[0].mxu0
      %v905 = vadd.f32 %v324, %v904
      %v906 = vpop.f32.mrb[0].mxu0
      %v907 = vpop.f32.mrb[0].mxu0
      %v908 = vadd.f32 %v324, %v907
      %v909 = vpop.f32.mrb[0].mxu0
      %910 = vmatprep.mubr.bf16.mxu0 0
      %911 = vmatmul.mubr.bf16.gmra.mrb[0].mxu0 %v597
      %v912 = vpop.f32.mrb[0].mxu0
      %v913 = vadd.f32 %v324, %v912
      %v914 = vpop.f32.mrb[0].mxu0
      %v915 = vpop.f32.mrb[0].mxu0
      %v916 = vadd.f32 %v324, %v915
      %v917 = vpop.f32.mrb[0].mxu0
      %918 = vmatprep.mubr.bf16.mxu0 0
      %919 = vmatmul.mubr.bf16.gmra.mrb[0].mxu0 %v598
      %v920 = vpop.f32.mrb[0].mxu0
      %v921 = vadd.f32 %v324, %v920
      %v922 = vpop.f32.mrb[0].mxu0
      %v923 = vpop.f32.mrb[0].mxu0
      %v924 = vadd.f32 %v324, %v923
      %v925 = vpop.f32.mrb[0].mxu0
      %926 = vmatprep.mubr.bf16.mxu0 0
      %927 = vmatmul.mubr.bf16.gmra.mrb[0].mxu0 %v599
      %v928 = vpop.f32.mrb[0].mxu0
      %v929 = vadd.f32 %v324, %v928
      %v930 = vpop.f32.mrb[0].mxu0
      %v931 = vpop.f32.mrb[0].mxu0
      %v932 = vadd.f32 %v324, %v931
      %v933 = vpop.f32.mrb[0].mxu0
      %934 = vmatprep.mubr.bf16.mxu0 0
      %935 = vmatmul.mubr.bf16.gmra.mrb[0].mxu0 %v600
      %v936 = vpop.f32.mrb[0].mxu0
      %v937 = vadd.f32 %v324, %v936
      %v938 = vpop.f32.mrb[0].mxu0
      %v939 = vpop.f32.mrb[0].mxu0
      %v940 = vadd.f32 %v324, %v939
      %v941 = vpop.f32.mrb[0].mxu0
      %942 = vmatprep.mubr.bf16.mxu0 0
      %943 = vmatmul.mubr.bf16.gmra.mrb[0].mxu0 %v601
      %v944 = vpop.f32.mrb[0].mxu0
      %v945 = vadd.f32 %v324, %v944
      %v946 = vpop.f32.mrb[0].mxu0
      %v947 = vpop.f32.mrb[0].mxu0
      %v948 = vadd.f32 %v324, %v947
      %v949 = vpop.f32.mrb[0].mxu0
      %950 = vmatprep.mubr.bf16.mxu0 0
      %951 = vmatmul.mubr.bf16.gmra.mrb[0].mxu0 %v602
      %v952 = vpop.f32.mrb[0].mxu0
      %v953 = vadd.f32 %v324, %v952
      %v954 = vpop.f32.mrb[0].mxu0
      %v955 = vpop.f32.mrb[0].mxu0
      %v956 = vadd.f32 %v324, %v955
      %v957 = vpop.f32.mrb[0].mxu0
      %958 = vmatprep.mubr.bf16.mxu0 0
      %959 = vmatmul.mubr.bf16.gmra.mrb[0].mxu0 %v603
      %v960 = vpop.f32.mrb[0].mxu0
      %v961 = vadd.f32 %v324, %v960
      %v962 = vpop.f32.mrb[0].mxu0
      %v963 = vpop.f32.mrb[0].mxu0
      %v964 = vadd.f32 %v324, %v963
      %v965 = vpop.f32.mrb[0].mxu0
      %966 = vmatprep.mubr.bf16.mxu0 0
      %967 = vmatmul.mubr.bf16.gmra.mrb[0].mxu0 %v604
      %v968 = vpop.f32.mrb[0].mxu0
      %v969 = vadd.f32 %v324, %v968
      %v970 = vpop.f32.mrb[0].mxu0
      %v971 = vpop.f32.mrb[0].mxu0
      %v972 = vadd.f32 %v324, %v971
      %v973 = vpop.f32.mrb[0].mxu0
      %974 = vmatprep.mubr.bf16.mxu0 0
      %975 = vmatmul.mubr.bf16.gmra.mrb[0].mxu0 %v605
      %v976 = vpop.f32.mrb[0].mxu0
      %v977 = vadd.f32 %v324, %v976
      %v978 = vpop.f32.mrb[0].mxu0
      %v979 = vpop.f32.mrb[0].mxu0
      %v980 = vadd.f32 %v324, %v979
      %v981 = vpop.f32.mrb[0].mxu0
      %982 = vmatprep.mubr.bf16.mxu0 0
      %983 = vmatmul.mubr.bf16.gmra.mrb[0].mxu0 %v606
      %v984 = vpop.f32.mrb[0].mxu0
      %v985 = vadd.f32 %v324, %v984
      %v986 = vpop.f32.mrb[0].mxu0
      %v987 = vpop.f32.mrb[0].mxu0
      %v988 = vadd.f32 %v324, %v987
      %v989 = vpop.f32.mrb[0].mxu0
      %990 = vmatprep.mubr.bf16.mxu0 0
      %991 = vmatmul.mubr.bf16.gmra.mrb[0].mxu0 %v607
      %v992 = vpop.f32.mrb[0].mxu0
      %v993 = vadd.f32 %v324, %v992
      %v994 = vpop.f32.mrb[0].mxu0
      %v995 = vpop.f32.mrb[0].mxu0
      %v996 = vadd.f32 %v324, %v995
      %v997 = vpop.f32.mrb[0].mxu0
      %998 = vmatprep.mubr.bf16.mxu0 0
      %999 = vmatmul.mubr.bf16.gmra.mrb[0].mxu0 %v608
      %v1000 = vpop.f32.mrb[0].mxu0
      %v1001 = vadd.f32 %v324, %v1000
      %v1002 = vpop.f32.mrb[0].mxu0
      %v1003 = vpop.f32.mrb[0].mxu0
      %v1004 = vadd.f32 %v324, %v1003
      %v1005 = vpop.f32.mrb[0].mxu0
      %1006 = vmatprep.mubr.bf16.mxu0 0
      %1007 = vmatmul.mubr.bf16.gmra.mrb[0].mxu0 %v609
      %v1008 = vpop.f32.mrb[0].mxu0
      %v1009 = vadd.f32 %v324, %v1008
      %v1010 = vpop.f32.mrb[0].mxu0
      %v1011 = vpop.f32.mrb[0].mxu0
      %v1012 = vadd.f32 %v324, %v1011
      %v1013 = vpop.f32.mrb[0].mxu0
      %1014 = vmatprep.mubr.bf16.mxu0 0
      %1015 = vmatmul.mubr.bf16.gmra.mrb[0].mxu0 %v610
      %v1016 = vpop.f32.mrb[0].mxu0
      %v1017 = vadd.f32 %v324, %v1016
      %v1018 = vpop.f32.mrb[0].mxu0
      %v1019 = vpop.f32.mrb[0].mxu0
      %v1020 = vadd.f32 %v324, %v1019
      %v1021 = vpop.f32.mrb[0].mxu0
      %1022 = vmatprep.mubr.bf16.mxu0 0
      %1023 = vmatmul.mubr.bf16.gmra.mrb[0].mxu0 %v611
      %v1024 = vpop.f32.mrb[0].mxu0
      %v1025 = vadd.f32 %v324, %v1024
      %v1026 = vpop.f32.mrb[0].mxu0
      %v1027 = vpop.f32.mrb[0].mxu0
      %v1028 = vadd.f32 %v324, %v1027
      %v1029 = vpop.f32.mrb[0].mxu0
      %1030 = vmatprep.mubr.bf16.mxu0 0
      %1031 = vmatmul.mubr.bf16.gmra.mrb[0].mxu0 %v612
      %v1032 = vpop.f32.mrb[0].mxu0
      %v1033 = vadd.f32 %v324, %v1032
      %v1034 = vpop.f32.mrb[0].mxu0
      %v1035 = vpop.f32.mrb[0].mxu0
      %v1036 = vadd.f32 %v324, %v1035
      %v1037 = vpop.f32.mrb[0].mxu0
      %1038 = vmatprep.mubr.bf16.mxu0 0
      %1039 = vmatmul.mubr.bf16.gmra.mrb[0].mxu0 %v613
      %v1040 = vpop.f32.mrb[0].mxu0
      %v1041 = vadd.f32 %v324, %v1040
      %v1042 = vpop.f32.mrb[0].mxu0
      %v1043 = vpop.f32.mrb[0].mxu0
      %v1044 = vadd.f32 %v324, %v1043
      %v1045 = vpop.f32.mrb[0].mxu0
      %1046 = vmatprep.mubr.bf16.mxu0 0
      %1047 = vmatmul.mubr.bf16.gmra.mrb[0].mxu0 %v614
      %v1048 = vpop.f32.mrb[0].mxu0
      %v1049 = vadd.f32 %v324, %v1048
      %v1050 = vpop.f32.mrb[0].mxu0
      %v1051 = vpop.f32.mrb[0].mxu0
      %v1052 = vadd.f32 %v324, %v1051
      %v1053 = vpop.f32.mrb[0].mxu0
      %1054 = vmatprep.mubr.bf16.mxu0 0
      %1055 = vmatmul.mubr.bf16.gmra.mrb[0].mxu0 %v615
      %v1056 = vpop.f32.mrb[0].mxu0
      %v1057 = vadd.f32 %v324, %v1056
      %v1058 = vpop.f32.mrb[0].mxu0
      %v1059 = vpop.f32.mrb[0].mxu0
      %v1060 = vadd.f32 %v324, %v1059
      %v1061 = vpop.f32.mrb[0].mxu0
      %1062 = vmatprep.mubr.bf16.mxu0 0
      %1063 = vmatmul.mubr.bf16.gmra.mrb[0].mxu0 %v616
      %v1064 = vpop.f32.mrb[0].mxu0
      %v1065 = vadd.f32 %v324, %v1064
      %v1066 = vpop.f32.mrb[0].mxu0
      %v1067 = vpop.f32.mrb[0].mxu0
      %v1068 = vadd.f32 %v324, %v1067
      %v1069 = vpop.f32.mrb[0].mxu0
      %1070 = vmatprep.mubr.bf16.mxu0 0
      %1071 = vmatmul.mubr.bf16.gmra.mrb[0].mxu0 %v617
      %v1072 = vpop.f32.mrb[0].mxu0
      %v1073 = vadd.f32 %v324, %v1072
      %v1074 = vpop.f32.mrb[0].mxu0
      %v1075 = vpop.f32.mrb[0].mxu0
      %v1076 = vadd.f32 %v324, %v1075
      %v1077 = vpop.f32.mrb[0].mxu0
      %1078 = vmatprep.mubr.bf16.mxu0 0
      %1079 = vmatmul.mubr.bf16.gmra.mrb[0].mxu0 %v618
      %v1080 = vpop.f32.mrb[0].mxu0
      %v1081 = vadd.f32 %v324, %v1080
      %v1082 = vpop.f32.mrb[0].mxu0
      %v1083 = vpop.f32.mrb[0].mxu0
      %v1084 = vadd.f32 %v324, %v1083
      %v1085 = vpop.f32.mrb[0].mxu0
      %1086 = vmatprep.mubr.bf16.mxu0 0
      %1087 = vmatmul.mubr.bf16.gmra.mrb[0].mxu0 %v619
      %v1088 = vpop.f32.mrb[0].mxu0
      %v1089 = vadd.f32 %v324, %v1088
      %v1090 = vpop.f32.mrb[0].mxu0
      %v1091 = vpop.f32.mrb[0].mxu0
      %v1092 = vadd.f32 %v324, %v1091
      %v1093 = vpop.f32.mrb[0].mxu0
      %1094 = vmatprep.mubr.bf16.mxu0 0
      %1095 = vmatmul.mubr.bf16.gmra.mrb[0].mxu0 %v620
      %v1096 = vpop.f32.mrb[0].mxu0
      %v1097 = vadd.f32 %v324, %v1096
      %v1098 = vpop.f32.mrb[0].mxu0
      %v1099 = vpop.f32.mrb[0].mxu0
      %v1100 = vadd.f32 %v324, %v1099
      %v1101 = vpop.f32.mrb[0].mxu0
      %1102 = vmatprep.mubr.bf16.mxu0 0
      %1103 = vmatmul.mubr.bf16.gmra.mrb[0].mxu0 %v621
      %v1104 = vpop.f32.mrb[0].mxu0
      %v1105 = vadd.f32 %v324, %v1104
      %v1106 = vpop.f32.mrb[0].mxu0
      %v1107 = vpop.f32.mrb[0].mxu0
      %v1108 = vadd.f32 %v324, %v1107
      %v1109 = vpop.f32.mrb[0].mxu0
      %1110 = vmatprep.mubr.bf16.mxu0 0
      %1111 = vmatmul.mubr.bf16.gmra.mrb[0].mxu0 %v622
      %v1112 = vpop.f32.mrb[0].mxu0
      %v1113 = vadd.f32 %v324, %v1112
      %v1114 = vpop.f32.mrb[0].mxu0
      %v1115 = vpop.f32.mrb[0].mxu0
      %v1116 = vadd.f32 %v324, %v1115
      %v1117 = vpop.f32.mrb[0].mxu0
      %1118 = vmatprep.mubr.bf16.mxu0 0
      %1119 = vmatmul.mubr.bf16.gmra.mrb[0].mxu0 %v623
      %v1120 = vpop.f32.mrb[0].mxu0
      %v1121 = vadd.f32 %v324, %v1120
      %v1122 = vpop.f32.mrb[0].mxu0
      %v1123 = vpop.f32.mrb[0].mxu0
      %v1124 = vadd.f32 %v324, %v1123
      %v1125 = vpop.f32.mrb[0].mxu0
      %1126 = vmatprep.mubr.bf16.mxu0 0
      %1127 = vmatmul.mubr.bf16.gmra.mrb[0].mxu0 %v624
      %v1128 = vpop.f32.mrb[0].mxu0
      %v1129 = vadd.f32 %v324, %v1128
      %v1130 = vpop.f32.mrb[0].mxu0
      %v1131 = vpop.f32.mrb[0].mxu0
      %v1132 = vadd.f32 %v324, %v1131
      %v1133 = vpop.f32.mrb[0].mxu0
      %1134 = vmatprep.mubr.bf16.mxu0 0
      %1135 = vmatmul.mubr.bf16.gmra.mrb[0].mxu0 %v625
      %v1136 = vpop.f32.mrb[0].mxu0
      %v1137 = vadd.f32 %v324, %v1136
      %v1138 = vpop.f32.mrb[0].mxu0
      %v1139 = vpop.f32.mrb[0].mxu0
      %v1140 = vadd.f32 %v324, %v1139
      %v1141 = vpop.f32.mrb[0].mxu0
      %1142 = vmatprep.mubr.bf16.mxu0 0
      %1143 = vmatmul.mubr.bf16.gmra.mrb[0].mxu0 %v626
      %v1144 = vpop.f32.mrb[0].mxu0
      %v1145 = vadd.f32 %v324, %v1144
      %v1146 = vpop.f32.mrb[0].mxu0
      %v1147 = vpop.f32.mrb[0].mxu0
      %v1148 = vadd.f32 %v324, %v1147
      %v1149 = vpop.f32.mrb[0].mxu0
      %1150 = vmatprep.mubr.bf16.mxu0 0
      %1151 = vmatmul.mubr.bf16.gmra.mrb[0].mxu0 %v627
      %v1152 = vpop.f32.mrb[0].mxu0
      %v1153 = vadd.f32 %v324, %v1152
      %v1154 = vpop.f32.mrb[0].mxu0
      %v1155 = vpop.f32.mrb[0].mxu0
      %v1156 = vadd.f32 %v324, %v1155
      %v1157 = vpop.f32.mrb[0].mxu0
      %1158 = vmatprep.mubr.bf16.mxu0 0
      %1159 = vmatmul.mubr.bf16.gmra.mrb[0].mxu0 %v628
      %v1160 = vpop.f32.mrb[0].mxu0
      %v1161 = vadd.f32 %v324, %v1160
      %v1162 = vpop.f32.mrb[0].mxu0
      %v1163 = vpop.f32.mrb[0].mxu0
      %v1164 = vadd.f32 %v324, %v1163
      %v1165 = vpop.f32.mrb[0].mxu0
      %1166 = vmatprep.mubr.bf16.mxu0 0
      %1167 = vmatmul.mubr.bf16.gmra.mrb[0].mxu0 %v629
      %v1168 = vpop.f32.mrb[0].mxu0
      %v1169 = vadd.f32 %v324, %v1168
      %v1170 = vpop.f32.mrb[0].mxu0
      %v1171 = vpop.f32.mrb[0].mxu0
      %v1172 = vadd.f32 %v324, %v1171
      %v1173 = vpop.f32.mrb[0].mxu0
      %1174 = vmatprep.mubr.bf16.mxu0 0
      %1175 = vmatmul.mubr.bf16.gmra.mrb[0].mxu0 %v630
      %v1176 = vpop.f32.mrb[0].mxu0
      %v1177 = vadd.f32 %v324, %v1176
      %v1178 = vpop.f32.mrb[0].mxu0
      %v1179 = vpop.f32.mrb[0].mxu0
      %v1180 = vadd.f32 %v324, %v1179
      %v1181 = vpop.f32.mrb[0].mxu0
      %1182 = vmatprep.mubr.bf16.mxu0 0
      %1183 = vmatmul.mubr.bf16.gmra.mrb[0].mxu0 %v631
      %v1184 = vpop.f32.mrb[0].mxu0
      %v1185 = vadd.f32 %v324, %v1184
      %v1186 = vpop.f32.mrb[0].mxu0
      %v1187 = vpop.f32.mrb[0].mxu0
      %v1188 = vadd.f32 %v324, %v1187
      %v1189 = vpop.f32.mrb[0].mxu0
      %1190 = vmatprep.mubr.bf16.mxu0 0
      %1191 = vmatmul.mubr.bf16.gmra.mrb[0].mxu0 %v632
      %v1192 = vpop.f32.mrb[0].mxu0
      %v1193 = vadd.f32 %v324, %v1192
      %v1194 = vpop.f32.mrb[0].mxu0
      %v1195 = vpop.f32.mrb[0].mxu0
      %v1196 = vadd.f32 %v324, %v1195
      %v1197 = vpop.f32.mrb[0].mxu0
      %1198 = vmatprep.mubr.bf16.mxu0 0
      %1199 = vmatmul.mubr.bf16.gmra.mrb[0].mxu0 %v633
      %v1200 = vpop.f32.mrb[0].mxu0
      %v1201 = vadd.f32 %v324, %v1200
      %v1202 = vpop.f32.mrb[0].mxu0
      %v1203 = vpop.f32.mrb[0].mxu0
      %v1204 = vadd.f32 %v324, %v1203
      %v1205 = vpop.f32.mrb[0].mxu0
      %1206 = vmatprep.mubr.bf16.mxu0 0
      %1207 = vmatmul.mubr.bf16.gmra.mrb[0].mxu0 %v634
      %v1208 = vpop.f32.mrb[0].mxu0
      %v1209 = vadd.f32 %v324, %v1208
      %v1210 = vpop.f32.mrb[0].mxu0
      %v1211 = vpop.f32.mrb[0].mxu0
      %v1212 = vadd.f32 %v324, %v1211
      %v1213 = vpop.f32.mrb[0].mxu0
      %1214 = vmatprep.mubr.bf16.mxu0 0
      %1215 = vmatmul.mubr.bf16.gmra.mrb[0].mxu0 %v635
      %v1216 = vpop.f32.mrb[0].mxu0
      %v1217 = vadd.f32 %v324, %v1216
      %v1218 = vpop.f32.mrb[0].mxu0
      %v1219 = vpop.f32.mrb[0].mxu0
      %v1220 = vadd.f32 %v324, %v1219
      %v1221 = vpop.f32.mrb[0].mxu0
      %1222 = vmatprep.mubr.bf16.mxu0 0
      %1223 = vmatmul.mubr.bf16.gmra.mrb[0].mxu0 %v636
      %v1224 = vpop.f32.mrb[0].mxu0
      %v1225 = vadd.f32 %v324, %v1224
      %v1226 = vpop.f32.mrb[0].mxu0
      %v1227 = vpop.f32.mrb[0].mxu0
      %v1228 = vadd.f32 %v324, %v1227
      %v1229 = vpop.f32.mrb[0].mxu0
      %1230 = vmatprep.mubr.bf16.mxu0 0
      %1231 = vmatmul.mubr.bf16.gmra.mrb[0].mxu0 %v637
      %v1232 = vpop.f32.mrb[0].mxu0
      %v1233 = vadd.f32 %v324, %v1232
      %v1234 = vpop.f32.mrb[0].mxu0
      %v1235 = vpop.f32.mrb[0].mxu0
      %v1236 = vadd.f32 %v324, %v1235
      %v1237 = vpop.f32.mrb[0].mxu0
      %1238 = vmatprep.mubr.bf16.mxu0 0
      %1239 = vmatmul.mubr.bf16.gmra.mrb[0].mxu0 %v638
      %v1240 = vpop.f32.mrb[0].mxu0
      %v1241 = vadd.f32 %v324, %v1240
      %v1242 = vpop.f32.mrb[0].mxu0
      %v1243 = vpop.f32.mrb[0].mxu0
      %v1244 = vadd.f32 %v324, %v1243
      %v1245 = vpop.f32.mrb[0].mxu0
      %1246 = vmatprep.mubr.bf16.mxu0 0
      %1247 = vmatmul.mubr.bf16.gmra.mrb[0].mxu0 %v639
      %v1248 = vpop.f32.mrb[0].mxu0
      %v1249 = vadd.f32 %v324, %v1248
      %v1250 = vpop.f32.mrb[0].mxu0
      %v1251 = vpop.f32.mrb[0].mxu0
      %v1252 = vadd.f32 %v324, %v1251
      %v1253 = vpop.f32.mrb[0].mxu0
      %1254 = vmatprep.mubr.bf16.mxu0 0
      %1255 = vmatmul.mubr.bf16.gmra.mrb[0].mxu0 %v640
      %v1256 = vpop.f32.mrb[0].mxu0
      %v1257 = vadd.f32 %v324, %v1256
      %v1258 = vpop.f32.mrb[0].mxu0
      %v1259 = vpop.f32.mrb[0].mxu0
      %v1260 = vadd.f32 %v324, %v1259
      %v1261 = vpop.f32.mrb[0].mxu0
      %1262 = vmatprep.mubr.bf16.mxu0 0
      %1263 = vmatmul.mubr.bf16.gmra.mrb[0].mxu0 %v641
      %v1264 = vpop.f32.mrb[0].mxu0
      %v1265 = vadd.f32 %v324, %v1264
      %v1266 = vpop.f32.mrb[0].mxu0
      %v1267 = vpop.f32.mrb[0].mxu0
      %v1268 = vadd.f32 %v324, %v1267
      %v1269 = vpop.f32.mrb[0].mxu0
      %1270 = vmatprep.mubr.bf16.mxu0 0
      %1271 = vmatmul.mubr.bf16.gmra.mrb[0].mxu0 %v642
      %v1272 = vpop.f32.mrb[0].mxu0
      %v1273 = vadd.f32 %v324, %v1272
      %v1274 = vpop.f32.mrb[0].mxu0
      %v1275 = vpop.f32.mrb[0].mxu0
      %v1276 = vadd.f32 %v324, %v1275
      %v1277 = vpop.f32.mrb[0].mxu0
      %1278 = vmatprep.mubr.bf16.mxu0 0
      %1279 = vmatmul.mubr.bf16.gmra.mrb[0].mxu0 %v643
      %v1280 = vpop.f32.mrb[0].mxu0
      %v1281 = vadd.f32 %v324, %v1280
      %v1282 = vpop.f32.mrb[0].mxu0
      %v1283 = vpop.f32.mrb[0].mxu0
      %v1284 = vadd.f32 %v324, %v1283
      %v1285 = vpop.f32.mrb[0].mxu0
      %1286 = vmatprep.mubr.bf16.mxu0 0
      %1287 = vmatmul.mubr.bf16.gmra.mrb[0].mxu0 %v644
      %v1288 = vpop.f32.mrb[0].mxu0
      %v1289 = vadd.f32 %v324, %v1288
      %v1290 = vpop.f32.mrb[0].mxu0
      %v1291 = vpop.f32.mrb[0].mxu0
      %v1292 = vadd.f32 %v324, %v1291
      %v1293 = vpop.f32.mrb[0].mxu0
      %1294 = vmatprep.mubr.bf16.mxu0 0
      %1295 = vmatmul.mubr.bf16.gmra.mrb[0].mxu0 %v645
      %v1296 = vpop.f32.mrb[0].mxu0
      %v1297 = vadd.f32 %v324, %v1296
      %v1298 = vpop.f32.mrb[0].mxu0
      %v1299 = vpop.f32.mrb[0].mxu0
      %v1300 = vadd.f32 %v324, %v1299
      %v1301 = vpop.f32.mrb[0].mxu0
      %1302 = vdwg.mxu0
      %vm1303 = vcmp.gt.f32.partialorder %v793, 0.0
      %vm1304 = vcmp.gt.f32.partialorder %v796, 0.0
      %vm1305 = vcmp.gt.f32.partialorder %v801, 0.0
      %vm1306 = vcmp.gt.f32.partialorder %v804, 0.0
      %vm1307 = vcmp.gt.f32.partialorder %v809, 0.0
      %vm1308 = vcmp.gt.f32.partialorder %v812, 0.0
      %vm1309 = vcmp.gt.f32.partialorder %v817, 0.0
      %vm1310 = vcmp.gt.f32.partialorder %v820, 0.0
      %vm1311 = vcmp.gt.f32.partialorder %v825, 0.0
      %vm1312 = vcmp.gt.f32.partialorder %v828, 0.0
      %vm1313 = vcmp.gt.f32.partialorder %v833, 0.0
      %vm1314 = vcmp.gt.f32.partialorder %v836, 0.0
      %vm1315 = vcmp.gt.f32.partialorder %v841, 0.0
      %vm1316 = vcmp.gt.f32.partialorder %v844, 0.0
      %vm1317 = vcmp.gt.f32.partialorder %v849, 0.0
      %vm1318 = vcmp.gt.f32.partialorder %v852, 0.0
      %vm1319 = vcmp.gt.f32.partialorder %v857, 0.0
      %vm1320 = vcmp.gt.f32.partialorder %v860, 0.0
      %vm1321 = vcmp.gt.f32.partialorder %v865, 0.0
      %vm1322 = vcmp.gt.f32.partialorder %v868, 0.0
      %vm1323 = vcmp.gt.f32.partialorder %v873, 0.0
      %vm1324 = vcmp.gt.f32.partialorder %v876, 0.0
      %vm1325 = vcmp.gt.f32.partialorder %v881, 0.0
      %vm1326 = vcmp.gt.f32.partialorder %v884, 0.0
      %vm1327 = vcmp.gt.f32.partialorder %v889, 0.0
      %vm1328 = vcmp.gt.f32.partialorder %v892, 0.0
      %vm1329 = vcmp.gt.f32.partialorder %v897, 0.0
      %vm1330 = vcmp.gt.f32.partialorder %v900, 0.0
      %vm1331 = vcmp.gt.f32.partialorder %v905, 0.0
      %vm1332 = vcmp.gt.f32.partialorder %v908, 0.0
      %vm1333 = vcmp.gt.f32.partialorder %v913, 0.0
      %vm1334 = vcmp.gt.f32.partialorder %v916, 0.0
      %vm1335 = vcmp.gt.f32.partialorder %v921, 0.0
      %vm1336 = vcmp.gt.f32.partialorder %v924, 0.0
      %vm1337 = vcmp.gt.f32.partialorder %v929, 0.0
      %vm1338 = vcmp.gt.f32.partialorder %v932, 0.0
      %vm1339 = vcmp.gt.f32.partialorder %v937, 0.0
      %vm1340 = vcmp.gt.f32.partialorder %v940, 0.0
      %vm1341 = vcmp.gt.f32.partialorder %v945, 0.0
      %vm1342 = vcmp.gt.f32.partialorder %v948, 0.0
      %vm1343 = vcmp.gt.f32.partialorder %v953, 0.0
      %vm1344 = vcmp.gt.f32.partialorder %v956, 0.0
      %vm1345 = vcmp.gt.f32.partialorder %v961, 0.0
      %vm1346 = vcmp.gt.f32.partialorder %v964, 0.0
      %vm1347 = vcmp.gt.f32.partialorder %v969, 0.0
      %vm1348 = vcmp.gt.f32.partialorder %v972, 0.0
      %vm1349 = vcmp.gt.f32.partialorder %v977, 0.0
      %vm1350 = vcmp.gt.f32.partialorder %v980, 0.0
      %vm1351 = vcmp.gt.f32.partialorder %v985, 0.0
      %vm1352 = vcmp.gt.f32.partialorder %v988, 0.0
      %vm1353 = vcmp.gt.f32.partialorder %v993, 0.0
      %vm1354 = vcmp.gt.f32.partialorder %v996, 0.0
      %vm1355 = vcmp.gt.f32.partialorder %v1001, 0.0
      %vm1356 = vcmp.gt.f32.partialorder %v1004, 0.0
      %vm1357 = vcmp.gt.f32.partialorder %v1009, 0.0
      %vm1358 = vcmp.gt.f32.partialorder %v1012, 0.0
      %vm1359 = vcmp.gt.f32.partialorder %v1017, 0.0
      %vm1360 = vcmp.gt.f32.partialorder %v1020, 0.0
      %vm1361 = vcmp.gt.f32.partialorder %v1025, 0.0
      %vm1362 = vcmp.gt.f32.partialorder %v1028, 0.0
      %vm1363 = vcmp.gt.f32.partialorder %v1033, 0.0
      %vm1364 = vcmp.gt.f32.partialorder %v1036, 0.0
      %vm1365 = vcmp.gt.f32.partialorder %v1041, 0.0
      %vm1366 = vcmp.gt.f32.partialorder %v1044, 0.0
      %vm1367 = vcmp.gt.f32.partialorder %v1049, 0.0
      %vm1368 = vcmp.gt.f32.partialorder %v1052, 0.0
      %vm1369 = vcmp.gt.f32.partialorder %v1057, 0.0
      %vm1370 = vcmp.gt.f32.partialorder %v1060, 0.0
      %vm1371 = vcmp.gt.f32.partialorder %v1065, 0.0
      %vm1372 = vcmp.gt.f32.partialorder %v1068, 0.0
      %vm1373 = vcmp.gt.f32.partialorder %v1073, 0.0
      %vm1374 = vcmp.gt.f32.partialorder %v1076, 0.0
      %vm1375 = vcmp.gt.f32.partialorder %v1081, 0.0
      %vm1376 = vcmp.gt.f32.partialorder %v1084, 0.0
      %vm1377 = vcmp.gt.f32.partialorder %v1089, 0.0
      %vm1378 = vcmp.gt.f32.partialorder %v1092, 0.0
      %vm1379 = vcmp.gt.f32.partialorder %v1097, 0.0
      %vm1380 = vcmp.gt.f32.partialorder %v1100, 0.0
      %vm1381 = vcmp.gt.f32.partialorder %v1105, 0.0
      %vm1382 = vcmp.gt.f32.partialorder %v1108, 0.0
      %vm1383 = vcmp.gt.f32.partialorder %v1113, 0.0
      %vm1384 = vcmp.gt.f32.partialorder %v1116, 0.0
      %vm1385 = vcmp.gt.f32.partialorder %v1121, 0.0
      %vm1386 = vcmp.gt.f32.partialorder %v1124, 0.0
      %vm1387 = vcmp.gt.f32.partialorder %v1129, 0.0
      %vm1388 = vcmp.gt.f32.partialorder %v1132, 0.0
      %vm1389 = vcmp.gt.f32.partialorder %v1137, 0.0
      %vm1390 = vcmp.gt.f32.partialorder %v1140, 0.0
      %vm1391 = vcmp.gt.f32.partialorder %v1145, 0.0
      %vm1392 = vcmp.gt.f32.partialorder %v1148, 0.0
      %vm1393 = vcmp.gt.f32.partialorder %v1153, 0.0
      %vm1394 = vcmp.gt.f32.partialorder %v1156, 0.0
      %vm1395 = vcmp.gt.f32.partialorder %v1161, 0.0
      %vm1396 = vcmp.gt.f32.partialorder %v1164, 0.0
      %vm1397 = vcmp.gt.f32.partialorder %v1169, 0.0
      %vm1398 = vcmp.gt.f32.partialorder %v1172, 0.0
      %vm1399 = vcmp.gt.f32.partialorder %v1177, 0.0
      %vm1400 = vcmp.gt.f32.partialorder %v1180, 0.0
      %vm1401 = vcmp.gt.f32.partialorder %v1185, 0.0
      %vm1402 = vcmp.gt.f32.partialorder %v1188, 0.0
      %vm1403 = vcmp.gt.f32.partialorder %v1193, 0.0
      %vm1404 = vcmp.gt.f32.partialorder %v1196, 0.0
      %vm1405 = vcmp.gt.f32.partialorder %v1201, 0.0
      %vm1406 = vcmp.gt.f32.partialorder %v1204, 0.0
      %vm1407 = vcmp.gt.f32.partialorder %v1209, 0.0
      %vm1408 = vcmp.gt.f32.partialorder %v1212, 0.0
      %vm1409 = vcmp.gt.f32.partialorder %v1217, 0.0
      %vm1410 = vcmp.gt.f32.partialorder %v1220, 0.0
      %vm1411 = vcmp.gt.f32.partialorder %v1225, 0.0
      %vm1412 = vcmp.gt.f32.partialorder %v1228, 0.0
      %vm1413 = vcmp.gt.f32.partialorder %v1233, 0.0
      %vm1414 = vcmp.gt.f32.partialorder %v1236, 0.0
      %vm1415 = vcmp.gt.f32.partialorder %v1241, 0.0
      %vm1416 = vcmp.gt.f32.partialorder %v1244, 0.0
      %vm1417 = vcmp.gt.f32.partialorder %v1249, 0.0
      %vm1418 = vcmp.gt.f32.partialorder %v1252, 0.0
      %vm1419 = vcmp.gt.f32.partialorder %v1257, 0.0
      %vm1420 = vcmp.gt.f32.partialorder %v1260, 0.0
      %vm1421 = vcmp.gt.f32.partialorder %v1265, 0.0
      %vm1422 = vcmp.gt.f32.partialorder %v1268, 0.0
      %vm1423 = vcmp.gt.f32.partialorder %v1273, 0.0
      %vm1424 = vcmp.gt.f32.partialorder %v1276, 0.0
      %vm1425 = vcmp.gt.f32.partialorder %v1281, 0.0
      %vm1426 = vcmp.gt.f32.partialorder %v1284, 0.0
      %vm1427 = vcmp.gt.f32.partialorder %v1289, 0.0
      %vm1428 = vcmp.gt.f32.partialorder %v1292, 0.0
      %vm1429 = vcmp.gt.f32.partialorder %v1297, 0.0
      %vm1430 = vcmp.gt.f32.partialorder %v1300, 0.0
      %v1431 = vmul.f32 %v793, 0.2
      %v1432 = vmul.f32 %v796, 0.2
      %v1433 = vmul.f32 %v801, 0.2
      %v1434 = vmul.f32 %v804, 0.2
      %v1435 = vmul.f32 %v809, 0.2
      %v1436 = vmul.f32 %v812, 0.2
      %v1437 = vmul.f32 %v817, 0.2
      %v1438 = vmul.f32 %v820, 0.2
      %v1439 = vmul.f32 %v825, 0.2
      %v1440 = vmul.f32 %v828, 0.2
      %v1441 = vmul.f32 %v833, 0.2
      %v1442 = vmul.f32 %v836, 0.2
      %v1443 = vmul.f32 %v841, 0.2
      %v1444 = vmul.f32 %v844, 0.2
      %v1445 = vmul.f32 %v849, 0.2
      %v1446 = vmul.f32 %v852, 0.2
      %v1447 = vmul.f32 %v857, 0.2
      %v1448 = vmul.f32 %v860, 0.2
      %v1449 = vmul.f32 %v865, 0.2
      %v1450 = vmul.f32 %v868, 0.2
      %v1451 = vmul.f32 %v873, 0.2
      %v1452 = vmul.f32 %v876, 0.2
      %v1453 = vmul.f32 %v881, 0.2
      %v1454 = vmul.f32 %v884, 0.2
      %v1455 = vmul.f32 %v889, 0.2
      %v1456 = vmul.f32 %v892, 0.2
      %v1457 = vmul.f32 %v897, 0.2
      %v1458 = vmul.f32 %v900, 0.2
      %v1459 = vmul.f32 %v905, 0.2
      %v1460 = vmul.f32 %v908, 0.2
      %v1461 = vmul.f32 %v913, 0.2
      %v1462 = vmul.f32 %v916, 0.2
      %v1463 = vmul.f32 %v921, 0.2
      %v1464 = vmul.f32 %v924, 0.2
      %v1465 = vmul.f32 %v929, 0.2
      %v1466 = vmul.f32 %v932, 0.2
      %v1467 = vmul.f32 %v937, 0.2
      %v1468 = vmul.f32 %v940, 0.2
      %v1469 = vmul.f32 %v945, 0.2
      %v1470 = vmul.f32 %v948, 0.2
      %v1471 = vmul.f32 %v953, 0.2
      %v1472 = vmul.f32 %v956, 0.2
      %v1473 = vmul.f32 %v961, 0.2
      %v1474 = vmul.f32 %v964, 0.2
      %v1475 = vmul.f32 %v969, 0.2
      %v1476 = vmul.f32 %v972, 0.2
      %v1477 = vmul.f32 %v977, 0.2
      %v1478 = vmul.f32 %v980, 0.2
      %v1479 = vmul.f32 %v985, 0.2
      %v1480 = vmul.f32 %v988, 0.2
      %v1481 = vmul.f32 %v993, 0.2
      %v1482 = vmul.f32 %v996, 0.2
      %v1483 = vmul.f32 %v1001, 0.2
      %v1484 = vmul.f32 %v1004, 0.2
      %v1485 = vmul.f32 %v1009, 0.2
      %v1486 = vmul.f32 %v1012, 0.2
      %v1487 = vmul.f32 %v1017, 0.2
      %v1488 = vmul.f32 %v1020, 0.2
      %v1489 = vmul.f32 %v1025, 0.2
      %v1490 = vmul.f32 %v1028, 0.2
      %v1491 = vmul.f32 %v1033, 0.2
      %v1492 = vmul.f32 %v1036, 0.2
      %v1493 = vmul.f32 %v1041, 0.2
      %v1494 = vmul.f32 %v1044, 0.2
      %v1495 = vmul.f32 %v1049, 0.2
      %v1496 = vmul.f32 %v1052, 0.2
      %v1497 = vmul.f32 %v1057, 0.2
      %v1498 = vmul.f32 %v1060, 0.2
      %v1499 = vmul.f32 %v1065, 0.2
      %v1500 = vmul.f32 %v1068, 0.2
      %v1501 = vmul.f32 %v1073, 0.2
      %v1502 = vmul.f32 %v1076, 0.2
      %v1503 = vmul.f32 %v1081, 0.2
      %v1504 = vmul.f32 %v1084, 0.2
      %v1505 = vmul.f32 %v1089, 0.2
      %v1506 = vmul.f32 %v1092, 0.2
      %v1507 = vmul.f32 %v1097, 0.2
      %v1508 = vmul.f32 %v1100, 0.2
      %v1509 = vmul.f32 %v1105, 0.2
      %v1510 = vmul.f32 %v1108, 0.2
      %v1511 = vmul.f32 %v1113, 0.2
      %v1512 = vmul.f32 %v1116, 0.2
      %v1513 = vmul.f32 %v1121, 0.2
      %v1514 = vmul.f32 %v1124, 0.2
      %v1515 = vmul.f32 %v1129, 0.2
      %v1516 = vmul.f32 %v1132, 0.2
      %v1517 = vmul.f32 %v1137, 0.2
      %v1518 = vmul.f32 %v1140, 0.2
      %v1519 = vmul.f32 %v1145, 0.2
      %v1520 = vmul.f32 %v1148, 0.2
      %v1521 = vmul.f32 %v1153, 0.2
      %v1522 = vmul.f32 %v1156, 0.2
      %v1523 = vmul.f32 %v1161, 0.2
      %v1524 = vmul.f32 %v1164, 0.2
      %v1525 = vmul.f32 %v1169, 0.2
      %v1526 = vmul.f32 %v1172, 0.2
      %v1527 = vmul.f32 %v1177, 0.2
      %v1528 = vmul.f32 %v1180, 0.2
      %v1529 = vmul.f32 %v1185, 0.2
      %v1530 = vmul.f32 %v1188, 0.2
      %v1531 = vmul.f32 %v1193, 0.2
      %v1532 = vmul.f32 %v1196, 0.2
      %v1533 = vmul.f32 %v1201, 0.2
      %v1534 = vmul.f32 %v1204, 0.2
      %v1535 = vmul.f32 %v1209, 0.2
      %v1536 = vmul.f32 %v1212, 0.2
      %v1537 = vmul.f32 %v1217, 0.2
      %v1538 = vmul.f32 %v1220, 0.2
      %v1539 = vmul.f32 %v1225, 0.2
      %v1540 = vmul.f32 %v1228, 0.2
      %v1541 = vmul.f32 %v1233, 0.2
      %v1542 = vmul.f32 %v1236, 0.2
      %v1543 = vmul.f32 %v1241, 0.2
      %v1544 = vmul.f32 %v1244, 0.2
      %v1545 = vmul.f32 %v1249, 0.2
      %v1546 = vmul.f32 %v1252, 0.2
      %v1547 = vmul.f32 %v1257, 0.2
      %v1548 = vmul.f32 %v1260, 0.2
      %v1549 = vmul.f32 %v1265, 0.2
      %v1550 = vmul.f32 %v1268, 0.2
      %v1551 = vmul.f32 %v1273, 0.2
      %v1552 = vmul.f32 %v1276, 0.2
      %v1553 = vmul.f32 %v1281, 0.2
      %v1554 = vmul.f32 %v1284, 0.2
      %v1555 = vmul.f32 %v1289, 0.2
      %v1556 = vmul.f32 %v1292, 0.2
      %v1557 = vmul.f32 %v1297, 0.2
      %v1558 = vmul.f32 %v1300, 0.2
      %v1559 = vsel %vm1303, %v793, %v1431
      %v1560 = vsel %vm1304, %v796, %v1432
      %v1561 = vsel %vm1305, %v801, %v1433
      %v1562 = vsel %vm1306, %v804, %v1434
      %v1563 = vsel %vm1307, %v809, %v1435
      %v1564 = vsel %vm1308, %v812, %v1436
      %v1565 = vsel %vm1309, %v817, %v1437
      %v1566 = vsel %vm1310, %v820, %v1438
      %v1567 = vsel %vm1311, %v825, %v1439
      %v1568 = vsel %vm1312, %v828, %v1440
      %v1569 = vsel %vm1313, %v833, %v1441
      %v1570 = vsel %vm1314, %v836, %v1442
      %v1571 = vsel %vm1315, %v841, %v1443
      %v1572 = vsel %vm1316, %v844, %v1444
      %v1573 = vsel %vm1317, %v849, %v1445
      %v1574 = vsel %vm1318, %v852, %v1446
      %v1575 = vsel %vm1319, %v857, %v1447
      %v1576 = vsel %vm1320, %v860, %v1448
      %v1577 = vsel %vm1321, %v865, %v1449
      %v1578 = vsel %vm1322, %v868, %v1450
      %v1579 = vsel %vm1323, %v873, %v1451
      %v1580 = vsel %vm1324, %v876, %v1452
      %v1581 = vsel %vm1325, %v881, %v1453
      %v1582 = vsel %vm1326, %v884, %v1454
      %v1583 = vsel %vm1327, %v889, %v1455
      %v1584 = vsel %vm1328, %v892, %v1456
      %v1585 = vsel %vm1329, %v897, %v1457
      %v1586 = vsel %vm1330, %v900, %v1458
      %v1587 = vsel %vm1331, %v905, %v1459
      %v1588 = vsel %vm1332, %v908, %v1460
      %v1589 = vsel %vm1333, %v913, %v1461
      %v1590 = vsel %vm1334, %v916, %v1462
      %v1591 = vsel %vm1335, %v921, %v1463
      %v1592 = vsel %vm1336, %v924, %v1464
      %v1593 = vsel %vm1337, %v929, %v1465
      %v1594 = vsel %vm1338, %v932, %v1466
      %v1595 = vsel %vm1339, %v937, %v1467
      %v1596 = vsel %vm1340, %v940, %v1468
      %v1597 = vsel %vm1341, %v945, %v1469
      %v1598 = vsel %vm1342, %v948, %v1470
      %v1599 = vsel %vm1343, %v953, %v1471
      %v1600 = vsel %vm1344, %v956, %v1472
      %v1601 = vsel %vm1345, %v961, %v1473
      %v1602 = vsel %vm1346, %v964, %v1474
      %v1603 = vsel %vm1347, %v969, %v1475
      %v1604 = vsel %vm1348, %v972, %v1476
      %v1605 = vsel %vm1349, %v977, %v1477
      %v1606 = vsel %vm1350, %v980, %v1478
      %v1607 = vsel %vm1351, %v985, %v1479
      %v1608 = vsel %vm1352, %v988, %v1480
      %v1609 = vsel %vm1353, %v993, %v1481
      %v1610 = vsel %vm1354, %v996, %v1482
      %v1611 = vsel %vm1355, %v1001, %v1483
      %v1612 = vsel %vm1356, %v1004, %v1484
      %v1613 = vsel %vm1357, %v1009, %v1485
      %v1614 = vsel %vm1358, %v1012, %v1486
      %v1615 = vsel %vm1359, %v1017, %v1487
      %v1616 = vsel %vm1360, %v1020, %v1488
      %v1617 = vsel %vm1361, %v1025, %v1489
      %v1618 = vsel %vm1362, %v1028, %v1490
      %v1619 = vsel %vm1363, %v1033, %v1491
      %v1620 = vsel %vm1364, %v1036, %v1492
      %v1621 = vsel %vm1365, %v1041, %v1493
      %v1622 = vsel %vm1366, %v1044, %v1494
      %v1623 = vsel %vm1367, %v1049, %v1495
      %v1624 = vsel %vm1368, %v1052, %v1496
      %v1625 = vsel %vm1369, %v1057, %v1497
      %v1626 = vsel %vm1370, %v1060, %v1498
      %v1627 = vsel %vm1371, %v1065, %v1499
      %v1628 = vsel %vm1372, %v1068, %v1500
      %v1629 = vsel %vm1373, %v1073, %v1501
      %v1630 = vsel %vm1374, %v1076, %v1502
      %v1631 = vsel %vm1375, %v1081, %v1503
      %v1632 = vsel %vm1376, %v1084, %v1504
      %v1633 = vsel %vm1377, %v1089, %v1505
      %v1634 = vsel %vm1378, %v1092, %v1506
      %v1635 = vsel %vm1379, %v1097, %v1507
      %v1636 = vsel %vm1380, %v1100, %v1508
      %v1637 = vsel %vm1381, %v1105, %v1509
      %v1638 = vsel %vm1382, %v1108, %v1510
      %v1639 = vsel %vm1383, %v1113, %v1511
      %v1640 = vsel %vm1384, %v1116, %v1512
      %v1641 = vsel %vm1385, %v1121, %v1513
      %v1642 = vsel %vm1386, %v1124, %v1514
      %v1643 = vsel %vm1387, %v1129, %v1515
      %v1644 = vsel %vm1388, %v1132, %v1516
      %v1645 = vsel %vm1389, %v1137, %v1517
      %v1646 = vsel %vm1390, %v1140, %v1518
      %v1647 = vsel %vm1391, %v1145, %v1519
      %v1648 = vsel %vm1392, %v1148, %v1520
      %v1649 = vsel %vm1393, %v1153, %v1521
      %v1650 = vsel %vm1394, %v1156, %v1522
      %v1651 = vsel %vm1395, %v1161, %v1523
      %v1652 = vsel %vm1396, %v1164, %v1524
      %v1653 = vsel %vm1397, %v1169, %v1525
      %v1654 = vsel %vm1398, %v1172, %v1526
      %v1655 = vsel %vm1399, %v1177, %v1527
      %v1656 = vsel %vm1400, %v1180, %v1528
      %v1657 = vsel %vm1401, %v1185, %v1529
      %v1658 = vsel %vm1402, %v1188, %v1530
      %v1659 = vsel %vm1403, %v1193, %v1531
      %v1660 = vsel %vm1404, %v1196, %v1532
      %v1661 = vsel %vm1405, %v1201, %v1533
      %v1662 = vsel %vm1406, %v1204, %v1534
      %v1663 = vsel %vm1407, %v1209, %v1535
      %v1664 = vsel %vm1408, %v1212, %v1536
      %v1665 = vsel %vm1409, %v1217, %v1537
      %v1666 = vsel %vm1410, %v1220, %v1538
      %v1667 = vsel %vm1411, %v1225, %v1539
      %v1668 = vsel %vm1412, %v1228, %v1540
      %v1669 = vsel %vm1413, %v1233, %v1541
      %v1670 = vsel %vm1414, %v1236, %v1542
      %v1671 = vsel %vm1415, %v1241, %v1543
      %v1672 = vsel %vm1416, %v1244, %v1544
      %v1673 = vsel %vm1417, %v1249, %v1545
      %v1674 = vsel %vm1418, %v1252, %v1546
      %v1675 = vsel %vm1419, %v1257, %v1547
      %v1676 = vsel %vm1420, %v1260, %v1548
      %v1677 = vsel %vm1421, %v1265, %v1549
      %v1678 = vsel %vm1422, %v1268, %v1550
      %v1679 = vsel %vm1423, %v1273, %v1551
      %v1680 = vsel %vm1424, %v1276, %v1552
      %v1681 = vsel %vm1425, %v1281, %v1553
      %v1682 = vsel %vm1426, %v1284, %v1554
      %v1683 = vsel %vm1427, %v1289, %v1555
      %v1684 = vsel %vm1428, %v1292, %v1556
      %v1685 = vsel %vm1429, %v1297, %v1557
      %v1686 = vsel %vm1430, %v1300, %v1558
      %v1687 = vpack.c.bf16 %v1560, %v1559
      %v1688 = vpack.c.bf16 %v1562, %v1561
      %v1689 = vpack.c.bf16 %v1564, %v1563
      %v1690 = vpack.c.bf16 %v1566, %v1565
      %v1691 = vpack.c.bf16 %v1568, %v1567
      %v1692 = vpack.c.bf16 %v1570, %v1569
      %v1693 = vpack.c.bf16 %v1572, %v1571
      %v1694 = vpack.c.bf16 %v1574, %v1573
      %v1695 = vpack.c.bf16 %v1576, %v1575
      %v1696 = vpack.c.bf16 %v1578, %v1577
      %v1697 = vpack.c.bf16 %v1580, %v1579
      %v1698 = vpack.c.bf16 %v1582, %v1581
      %v1699 = vpack.c.bf16 %v1584, %v1583
      %v1700 = vpack.c.bf16 %v1586, %v1585
      %v1701 = vpack.c.bf16 %v1588, %v1587
      %v1702 = vpack.c.bf16 %v1590, %v1589
      %v1703 = vpack.c.bf16 %v1592, %v1591
      %v1704 = vpack.c.bf16 %v1594, %v1593
      %v1705 = vpack.c.bf16 %v1596, %v1595
      %v1706 = vpack.c.bf16 %v1598, %v1597
      %v1707 = vpack.c.bf16 %v1600, %v1599
      %v1708 = vpack.c.bf16 %v1602, %v1601
      %v1709 = vpack.c.bf16 %v1604, %v1603
      %v1710 = vpack.c.bf16 %v1606, %v1605
      %v1711 = vpack.c.bf16 %v1608, %v1607
      %v1712 = vpack.c.bf16 %v1610, %v1609
      %v1713 = vpack.c.bf16 %v1612, %v1611
      %v1714 = vpack.c.bf16 %v1614, %v1613
      %v1715 = vpack.c.bf16 %v1616, %v1615
      %v1716 = vpack.c.bf16 %v1618, %v1617
      %v1717 = vpack.c.bf16 %v1620, %v1619
      %v1718 = vpack.c.bf16 %v1622, %v1621
      %v1719 = vpack.c.bf16 %v1624, %v1623
      %v1720 = vpack.c.bf16 %v1626, %v1625
      %v1721 = vpack.c.bf16 %v1628, %v1627
      %v1722 = vpack.c.bf16 %v1630, %v1629
      %v1723 = vpack.c.bf16 %v1632, %v1631
      %v1724 = vpack.c.bf16 %v1634, %v1633
      %v1725 = vpack.c.bf16 %v1636, %v1635
      %v1726 = vpack.c.bf16 %v1638, %v1637
      %v1727 = vpack.c.bf16 %v1640, %v1639
      %v1728 = vpack.c.bf16 %v1642, %v1641
      %v1729 = vpack.c.bf16 %v1644, %v1643
      %v1730 = vpack.c.bf16 %v1646, %v1645
      %v1731 = vpack.c.bf16 %v1648, %v1647
      %v1732 = vpack.c.bf16 %v1650, %v1649
      %v1733 = vpack.c.bf16 %v1652, %v1651
      %v1734 = vpack.c.bf16 %v1654, %v1653
      %v1735 = vpack.c.bf16 %v1656, %v1655
      %v1736 = vpack.c.bf16 %v1658, %v1657
      %v1737 = vpack.c.bf16 %v1660, %v1659
      %v1738 = vpack.c.bf16 %v1662, %v1661
      %v1739 = vpack.c.bf16 %v1664, %v1663
      %v1740 = vpack.c.bf16 %v1666, %v1665
      %v1741 = vpack.c.bf16 %v1668, %v1667
      %v1742 = vpack.c.bf16 %v1670, %v1669
      %v1743 = vpack.c.bf16 %v1672, %v1671
      %v1744 = vpack.c.bf16 %v1674, %v1673
      %v1745 = vpack.c.bf16 %v1676, %v1675
      %v1746 = vpack.c.bf16 %v1678, %v1677
      %v1747 = vpack.c.bf16 %v1680, %v1679
      %v1748 = vpack.c.bf16 %v1682, %v1681
      %v1749 = vpack.c.bf16 %v1684, %v1683
      %v1750 = vpack.c.bf16 %v1686, %v1685
      %v1815 = vunpack.c.l.b16 %v1687
      %v1816 = vunpack.c.h.b16 %v1687
      %v1817 = vunpack.c.l.b16 %v1688
      %v1818 = vunpack.c.h.b16 %v1688
      %v1819 = vunpack.c.l.b16 %v1689
      %v1820 = vunpack.c.h.b16 %v1689
      %v1821 = vunpack.c.l.b16 %v1690
      %v1822 = vunpack.c.h.b16 %v1690
      %v1823 = vunpack.c.l.b16 %v1691
      %v1824 = vunpack.c.h.b16 %v1691
      %v1825 = vunpack.c.l.b16 %v1692
      %v1826 = vunpack.c.h.b16 %v1692
      %v1827 = vunpack.c.l.b16 %v1693
      %v1828 = vunpack.c.h.b16 %v1693
      %v1829 = vunpack.c.l.b16 %v1694
      %v1830 = vunpack.c.h.b16 %v1694
      %v1831 = vunpack.c.l.b16 %v1695
      %v1832 = vunpack.c.h.b16 %v1695
      %v1833 = vunpack.c.l.b16 %v1696
      %v1834 = vunpack.c.h.b16 %v1696
      %v1835 = vunpack.c.l.b16 %v1697
      %v1836 = vunpack.c.h.b16 %v1697
      %v1837 = vunpack.c.l.b16 %v1698
      %v1838 = vunpack.c.h.b16 %v1698
      %v1839 = vunpack.c.l.b16 %v1699
      %v1840 = vunpack.c.h.b16 %v1699
      %v1841 = vunpack.c.l.b16 %v1700
      %v1842 = vunpack.c.h.b16 %v1700
      %v1843 = vunpack.c.l.b16 %v1701
      %v1844 = vunpack.c.h.b16 %v1701
      %v1845 = vunpack.c.l.b16 %v1702
      %v1846 = vunpack.c.h.b16 %v1702
      %v1847 = vunpack.c.l.b16 %v1703
      %v1848 = vunpack.c.h.b16 %v1703
      %v1849 = vunpack.c.l.b16 %v1704
      %v1850 = vunpack.c.h.b16 %v1704
      %v1851 = vunpack.c.l.b16 %v1705
      %v1852 = vunpack.c.h.b16 %v1705
      %v1853 = vunpack.c.l.b16 %v1706
      %v1854 = vunpack.c.h.b16 %v1706
      %v1855 = vunpack.c.l.b16 %v1707
      %v1856 = vunpack.c.h.b16 %v1707
      %v1857 = vunpack.c.l.b16 %v1708
      %v1858 = vunpack.c.h.b16 %v1708
      %v1859 = vunpack.c.l.b16 %v1709
      %v1860 = vunpack.c.h.b16 %v1709
      %v1861 = vunpack.c.l.b16 %v1710
      %v1862 = vunpack.c.h.b16 %v1710
      %v1863 = vunpack.c.l.b16 %v1711
      %v1864 = vunpack.c.h.b16 %v1711
      %v1865 = vunpack.c.l.b16 %v1712
      %v1866 = vunpack.c.h.b16 %v1712
      %v1867 = vunpack.c.l.b16 %v1713
      %v1868 = vunpack.c.h.b16 %v1713
      %v1869 = vunpack.c.l.b16 %v1714
      %v1870 = vunpack.c.h.b16 %v1714
      %v1871 = vunpack.c.l.b16 %v1715
      %v1872 = vunpack.c.h.b16 %v1715
      %v1873 = vunpack.c.l.b16 %v1716
      %v1874 = vunpack.c.h.b16 %v1716
      %v1875 = vunpack.c.l.b16 %v1717
      %v1876 = vunpack.c.h.b16 %v1717
      %v1877 = vunpack.c.l.b16 %v1718
      %v1878 = vunpack.c.h.b16 %v1718
      %v1879 = vunpack.c.l.b16 %v1719
      %v1880 = vunpack.c.h.b16 %v1719
      %v1881 = vunpack.c.l.b16 %v1720
      %v1882 = vunpack.c.h.b16 %v1720
      %v1883 = vunpack.c.l.b16 %v1721
      %v1884 = vunpack.c.h.b16 %v1721
      %v1885 = vunpack.c.l.b16 %v1722
      %v1886 = vunpack.c.h.b16 %v1722
      %v1887 = vunpack.c.l.b16 %v1723
      %v1888 = vunpack.c.h.b16 %v1723
      %v1889 = vunpack.c.l.b16 %v1724
      %v1890 = vunpack.c.h.b16 %v1724
      %v1891 = vunpack.c.l.b16 %v1725
      %v1892 = vunpack.c.h.b16 %v1725
      %v1893 = vunpack.c.l.b16 %v1726
      %v1894 = vunpack.c.h.b16 %v1726
      %v1895 = vunpack.c.l.b16 %v1727
      %v1896 = vunpack.c.h.b16 %v1727
      %v1897 = vunpack.c.l.b16 %v1728
      %v1898 = vunpack.c.h.b16 %v1728
      %v1899 = vunpack.c.l.b16 %v1729
      %v1900 = vunpack.c.h.b16 %v1729
      %v1901 = vunpack.c.l.b16 %v1730
      %v1902 = vunpack.c.h.b16 %v1730
      %v1903 = vunpack.c.l.b16 %v1731
      %v1904 = vunpack.c.h.b16 %v1731
      %v1905 = vunpack.c.l.b16 %v1732
      %v1906 = vunpack.c.h.b16 %v1732
      %v1907 = vunpack.c.l.b16 %v1733
      %v1908 = vunpack.c.h.b16 %v1733
      %v1909 = vunpack.c.l.b16 %v1734
      %v1910 = vunpack.c.h.b16 %v1734
      %v1911 = vunpack.c.l.b16 %v1735
      %v1912 = vunpack.c.h.b16 %v1735
      %v1913 = vunpack.c.l.b16 %v1736
      %v1914 = vunpack.c.h.b16 %v1736
      %v1915 = vunpack.c.l.b16 %v1737
      %v1916 = vunpack.c.h.b16 %v1737
      %v1917 = vunpack.c.l.b16 %v1738
      %v1918 = vunpack.c.h.b16 %v1738
      %v1919 = vunpack.c.l.b16 %v1739
      %v1920 = vunpack.c.h.b16 %v1739
      %v1921 = vunpack.c.l.b16 %v1740
      %v1922 = vunpack.c.h.b16 %v1740
      %v1923 = vunpack.c.l.b16 %v1741
      %v1924 = vunpack.c.h.b16 %v1741
      %v1925 = vunpack.c.l.b16 %v1742
      %v1926 = vunpack.c.h.b16 %v1742
      %v1927 = vunpack.c.l.b16 %v1743
      %v1928 = vunpack.c.h.b16 %v1743
      %v1929 = vunpack.c.l.b16 %v1744
      %v1930 = vunpack.c.h.b16 %v1744
      %v1931 = vunpack.c.l.b16 %v1745
      %v1932 = vunpack.c.h.b16 %v1745
      %v1933 = vunpack.c.l.b16 %v1746
      %v1934 = vunpack.c.h.b16 %v1746
      %v1935 = vunpack.c.l.b16 %v1747
      %v1936 = vunpack.c.h.b16 %v1747
      %v1937 = vunpack.c.l.b16 %v1748
      %v1938 = vunpack.c.h.b16 %v1748
      %v1939 = vunpack.c.l.b16 %v1749
      %v1940 = vunpack.c.h.b16 %v1749
      %v1941 = vunpack.c.l.b16 %v1750
      %v1942 = vunpack.c.h.b16 %v1750
      %v1943 = vpack.c.b16 %v1815, %v1815
      %v1944 = vpack.c.b16 %v1816, %v1816
      %v1945 = vpack.c.b16 %v1817, %v1817
      %v1946 = vpack.c.b16 %v1818, %v1818
      %v1947 = vpack.c.b16 %v1819, %v1819
      %v1948 = vpack.c.b16 %v1820, %v1820
      %v1949 = vpack.c.b16 %v1821, %v1821
      %v1950 = vpack.c.b16 %v1822, %v1822
      %v1951 = vpack.c.b16 %v1823, %v1823
      %v1952 = vpack.c.b16 %v1824, %v1824
      %v1953 = vpack.c.b16 %v1825, %v1825
      %v1954 = vpack.c.b16 %v1826, %v1826
      %v1955 = vpack.c.b16 %v1827, %v1827
      %v1956 = vpack.c.b16 %v1828, %v1828
      %v1957 = vpack.c.b16 %v1829, %v1829
      %v1958 = vpack.c.b16 %v1830, %v1830
      %v1959 = vpack.c.b16 %v1831, %v1831
      %v1960 = vpack.c.b16 %v1832, %v1832
      %v1961 = vpack.c.b16 %v1833, %v1833
      %v1962 = vpack.c.b16 %v1834, %v1834
      %v1963 = vpack.c.b16 %v1835, %v1835
      %v1964 = vpack.c.b16 %v1836, %v1836
      %v1965 = vpack.c.b16 %v1837, %v1837
      %v1966 = vpack.c.b16 %v1838, %v1838
      %v1967 = vpack.c.b16 %v1839, %v1839
      %v1968 = vpack.c.b16 %v1840, %v1840
      %v1969 = vpack.c.b16 %v1841, %v1841
      %v1970 = vpack.c.b16 %v1842, %v1842
      %v1971 = vpack.c.b16 %v1843, %v1843
      %v1972 = vpack.c.b16 %v1844, %v1844
      %v1973 = vpack.c.b16 %v1845, %v1845
      %v1974 = vpack.c.b16 %v1846, %v1846
      %v1975 = vpack.c.b16 %v1847, %v1847
      %v1976 = vpack.c.b16 %v1848, %v1848
      %v1977 = vpack.c.b16 %v1849, %v1849
      %v1978 = vpack.c.b16 %v1850, %v1850
      %v1979 = vpack.c.b16 %v1851, %v1851
      %v1980 = vpack.c.b16 %v1852, %v1852
      %v1981 = vpack.c.b16 %v1853, %v1853
      %v1982 = vpack.c.b16 %v1854, %v1854
      %v1983 = vpack.c.b16 %v1855, %v1855
      %v1984 = vpack.c.b16 %v1856, %v1856
      %v1985 = vpack.c.b16 %v1857, %v1857
      %v1986 = vpack.c.b16 %v1858, %v1858
      %v1987 = vpack.c.b16 %v1859, %v1859
      %v1988 = vpack.c.b16 %v1860, %v1860
      %v1989 = vpack.c.b16 %v1861, %v1861
      %v1990 = vpack.c.b16 %v1862, %v1862
      %v1991 = vpack.c.b16 %v1863, %v1863
      %v1992 = vpack.c.b16 %v1864, %v1864
      %v1993 = vpack.c.b16 %v1865, %v1865
      %v1994 = vpack.c.b16 %v1866, %v1866
      %v1995 = vpack.c.b16 %v1867, %v1867
      %v1996 = vpack.c.b16 %v1868, %v1868
      %v1997 = vpack.c.b16 %v1869, %v1869
      %v1998 = vpack.c.b16 %v1870, %v1870
      %v1999 = vpack.c.b16 %v1871, %v1871
      %v2000 = vpack.c.b16 %v1872, %v1872
      %v2001 = vpack.c.b16 %v1873, %v1873
      %v2002 = vpack.c.b16 %v1874, %v1874
      %v2003 = vpack.c.b16 %v1875, %v1875
      %v2004 = vpack.c.b16 %v1876, %v1876
      %v2005 = vpack.c.b16 %v1877, %v1877
      %v2006 = vpack.c.b16 %v1878, %v1878
      %v2007 = vpack.c.b16 %v1879, %v1879
      %v2008 = vpack.c.b16 %v1880, %v1880
      %v2009 = vpack.c.b16 %v1881, %v1881
      %v2010 = vpack.c.b16 %v1882, %v1882
      %v2011 = vpack.c.b16 %v1883, %v1883
      %v2012 = vpack.c.b16 %v1884, %v1884
      %v2013 = vpack.c.b16 %v1885, %v1885
      %v2014 = vpack.c.b16 %v1886, %v1886
      %v2015 = vpack.c.b16 %v1887, %v1887
      %v2016 = vpack.c.b16 %v1888, %v1888
      %v2017 = vpack.c.b16 %v1889, %v1889
      %v2018 = vpack.c.b16 %v1890, %v1890
      %v2019 = vpack.c.b16 %v1891, %v1891
      %v2020 = vpack.c.b16 %v1892, %v1892
      %v2021 = vpack.c.b16 %v1893, %v1893
      %v2022 = vpack.c.b16 %v1894, %v1894
      %v2023 = vpack.c.b16 %v1895, %v1895
      %v2024 = vpack.c.b16 %v1896, %v1896
      %v2025 = vpack.c.b16 %v1897, %v1897
      %v2026 = vpack.c.b16 %v1898, %v1898
      %v2027 = vpack.c.b16 %v1899, %v1899
      %v2028 = vpack.c.b16 %v1900, %v1900
      %v2029 = vpack.c.b16 %v1901, %v1901
      %v2030 = vpack.c.b16 %v1902, %v1902
      %v2031 = vpack.c.b16 %v1903, %v1903
      %v2032 = vpack.c.b16 %v1904, %v1904
      %v2033 = vpack.c.b16 %v1905, %v1905
      %v2034 = vpack.c.b16 %v1906, %v1906
      %v2035 = vpack.c.b16 %v1907, %v1907
      %v2036 = vpack.c.b16 %v1908, %v1908
      %v2037 = vpack.c.b16 %v1909, %v1909
      %v2038 = vpack.c.b16 %v1910, %v1910
      %v2039 = vpack.c.b16 %v1911, %v1911
      %v2040 = vpack.c.b16 %v1912, %v1912
      %v2041 = vpack.c.b16 %v1913, %v1913
      %v2042 = vpack.c.b16 %v1914, %v1914
      %v2043 = vpack.c.b16 %v1915, %v1915
      %v2044 = vpack.c.b16 %v1916, %v1916
      %v2045 = vpack.c.b16 %v1917, %v1917
      %v2046 = vpack.c.b16 %v1918, %v1918
      %v2047 = vpack.c.b16 %v1919, %v1919
      %v2048 = vpack.c.b16 %v1920, %v1920
      %v2049 = vpack.c.b16 %v1921, %v1921
      %v2050 = vpack.c.b16 %v1922, %v1922
      %v2051 = vpack.c.b16 %v1923, %v1923
      %v2052 = vpack.c.b16 %v1924, %v1924
      %v2053 = vpack.c.b16 %v1925, %v1925
      %v2054 = vpack.c.b16 %v1926, %v1926
      %v2055 = vpack.c.b16 %v1927, %v1927
      %v2056 = vpack.c.b16 %v1928, %v1928
      %v2057 = vpack.c.b16 %v1929, %v1929
      %v2058 = vpack.c.b16 %v1930, %v1930
      %v2059 = vpack.c.b16 %v1931, %v1931
      %v2060 = vpack.c.b16 %v1932, %v1932
      %v2061 = vpack.c.b16 %v1933, %v1933
      %v2062 = vpack.c.b16 %v1934, %v1934
      %v2063 = vpack.c.b16 %v1935, %v1935
      %v2064 = vpack.c.b16 %v1936, %v1936
      %v2065 = vpack.c.b16 %v1937, %v1937
      %v2066 = vpack.c.b16 %v1938, %v1938
      %v2067 = vpack.c.b16 %v1939, %v1939
      %v2068 = vpack.c.b16 %v1940, %v1940
      %v2069 = vpack.c.b16 %v1941, %v1941
      %v2070 = vpack.c.b16 %v1942, %v1942
      %2199 = vst [vmem:[%s172] sm:$0xf] %v1943
      %2200 = vst [vmem:[%s172 + $0x4] sm:$0xf] %v1944
      %2201 = vst [vmem:[%s172 + $0x8] sm:$0xf] %v1945
      %2202 = vst [vmem:[%s172 + $0xc] sm:$0xf] %v1946
      %2203 = vst [vmem:[%s172 + $0x10] sm:$0xf] %v1947
      %2204 = vst [vmem:[%s172 + $0x14] sm:$0xf] %v1948
      %2205 = vst [vmem:[%s172 + $0x18] sm:$0xf] %v1949
      %2206 = vst [vmem:[%s172 + $0x1c] sm:$0xf] %v1950
      %2207 = vst [vmem:[%s172 + $0x20] sm:$0xf] %v1951
      %2208 = vst [vmem:[%s172 + $0x24] sm:$0xf] %v1952
      %2209 = vst [vmem:[%s172 + $0x28] sm:$0xf] %v1953
      %2210 = vst [vmem:[%s172 + $0x2c] sm:$0xf] %v1954
      %2211 = vst [vmem:[%s172 + $0x30] sm:$0xf] %v1955
      %2212 = vst [vmem:[%s172 + $0x34] sm:$0xf] %v1956
      %2213 = vst [vmem:[%s172 + $0x38] sm:$0xf] %v1957
      %2214 = vst [vmem:[%s172 + $0x3c] sm:$0xf] %v1958
      %2215 = vst [vmem:[%s172 + $0x40] sm:$0xf] %v1959
      %2216 = vst [vmem:[%s172 + $0x44] sm:$0xf] %v1960
      %2217 = vst [vmem:[%s172 + $0x48] sm:$0xf] %v1961
      %2218 = vst [vmem:[%s172 + $0x4c] sm:$0xf] %v1962
      %2219 = vst [vmem:[%s172 + $0x50] sm:$0xf] %v1963
      %2220 = vst [vmem:[%s172 + $0x54] sm:$0xf] %v1964
      %2221 = vst [vmem:[%s172 + $0x58] sm:$0xf] %v1965
      %2222 = vst [vmem:[%s172 + $0x5c] sm:$0xf] %v1966
      %2223 = vst [vmem:[%s172 + $0x60] sm:$0xf] %v1967
      %2224 = vst [vmem:[%s172 + $0x64] sm:$0xf] %v1968
      %2225 = vst [vmem:[%s172 + $0x68] sm:$0xf] %v1969
      %2226 = vst [vmem:[%s172 + $0x6c] sm:$0xf] %v1970
      %2227 = vst [vmem:[%s172 + $0x70] sm:$0xf] %v1971
      %2228 = vst [vmem:[%s172 + $0x74] sm:$0xf] %v1972
      %2229 = vst [vmem:[%s172 + $0x78] sm:$0xf] %v1973
      %2230 = vst [vmem:[%s172 + $0x7c] sm:$0xf] %v1974
      %2231 = vst [vmem:[%s172 + $0x80] sm:$0xf] %v1975
      %2232 = vst [vmem:[%s172 + $0x84] sm:$0xf] %v1976
      %2233 = vst [vmem:[%s172 + $0x88] sm:$0xf] %v1977
      %2234 = vst [vmem:[%s172 + $0x8c] sm:$0xf] %v1978
      %2235 = vst [vmem:[%s172 + $0x90] sm:$0xf] %v1979
      %2236 = vst [vmem:[%s172 + $0x94] sm:$0xf] %v1980
      %2237 = vst [vmem:[%s172 + $0x98] sm:$0xf] %v1981
      %2238 = vst [vmem:[%s172 + $0x9c] sm:$0xf] %v1982
      %2239 = vst [vmem:[%s172 + $0xa0] sm:$0xf] %v1983
      %2240 = vst [vmem:[%s172 + $0xa4] sm:$0xf] %v1984
      %2241 = vst [vmem:[%s172 + $0xa8] sm:$0xf] %v1985
      %2242 = vst [vmem:[%s172 + $0xac] sm:$0xf] %v1986
      %2243 = vst [vmem:[%s172 + $0xb0] sm:$0xf] %v1987
      %2244 = vst [vmem:[%s172 + $0xb4] sm:$0xf] %v1988
      %2245 = vst [vmem:[%s172 + $0xb8] sm:$0xf] %v1989
      %2246 = vst [vmem:[%s172 + $0xbc] sm:$0xf] %v1990
      %2247 = vst [vmem:[%s172 + $0xc0] sm:$0xf] %v1991
      %2248 = vst [vmem:[%s172 + $0xc4] sm:$0xf] %v1992
      %2249 = vst [vmem:[%s172 + $0xc8] sm:$0xf] %v1993
      %2250 = vst [vmem:[%s172 + $0xcc] sm:$0xf] %v1994
      %2251 = vst [vmem:[%s172 + $0xd0] sm:$0xf] %v1995
      %2252 = vst [vmem:[%s172 + $0xd4] sm:$0xf] %v1996
      %2253 = vst [vmem:[%s172 + $0xd8] sm:$0xf] %v1997
      %2254 = vst [vmem:[%s172 + $0xdc] sm:$0xf] %v1998
      %2255 = vst [vmem:[%s172 + $0xe0] sm:$0xf] %v1999
      %2256 = vst [vmem:[%s172 + $0xe4] sm:$0xf] %v2000
      %2257 = vst [vmem:[%s172 + $0xe8] sm:$0xf] %v2001
      %2258 = vst [vmem:[%s172 + $0xec] sm:$0xf] %v2002
      %2259 = vst [vmem:[%s172 + $0xf0] sm:$0xf] %v2003
      %2260 = vst [vmem:[%s172 + $0xf4] sm:$0xf] %v2004
      %2261 = vst [vmem:[%s172 + $0xf8] sm:$0xf] %v2005
      %2262 = vst [vmem:[%s172 + $0xfc] sm:$0xf] %v2006
      %2263 = vst [vmem:[%s172 + $0x100] sm:$0xf] %v2007
      %2264 = vst [vmem:[%s172 + $0x104] sm:$0xf] %v2008
      %2265 = vst [vmem:[%s172 + $0x108] sm:$0xf] %v2009
      %2266 = vst [vmem:[%s172 + $0x10c] sm:$0xf] %v2010
      %2267 = vst [vmem:[%s172 + $0x110] sm:$0xf] %v2011
      %2268 = vst [vmem:[%s172 + $0x114] sm:$0xf] %v2012
      %2269 = vst [vmem:[%s172 + $0x118] sm:$0xf] %v2013
      %2270 = vst [vmem:[%s172 + $0x11c] sm:$0xf] %v2014
      %2271 = vst [vmem:[%s172 + $0x120] sm:$0xf] %v2015
      %2272 = vst [vmem:[%s172 + $0x124] sm:$0xf] %v2016
      %2273 = vst [vmem:[%s172 + $0x128] sm:$0xf] %v2017
      %2274 = vst [vmem:[%s172 + $0x12c] sm:$0xf] %v2018
      %2275 = vst [vmem:[%s172 + $0x130] sm:$0xf] %v2019
      %2276 = vst [vmem:[%s172 + $0x134] sm:$0xf] %v2020
      %2277 = vst [vmem:[%s172 + $0x138] sm:$0xf] %v2021
      %2278 = vst [vmem:[%s172 + $0x13c] sm:$0xf] %v2022
      %2279 = vst [vmem:[%s172 + $0x140] sm:$0xf] %v2023
      %2280 = vst [vmem:[%s172 + $0x144] sm:$0xf] %v2024
      %2281 = vst [vmem:[%s172 + $0x148] sm:$0xf] %v2025
      %2282 = vst [vmem:[%s172 + $0x14c] sm:$0xf] %v2026
      %2283 = vst [vmem:[%s172 + $0x150] sm:$0xf] %v2027
      %2284 = vst [vmem:[%s172 + $0x154] sm:$0xf] %v2028
      %2285 = vst [vmem:[%s172 + $0x158] sm:$0xf] %v2029
      %2286 = vst [vmem:[%s172 + $0x15c] sm:$0xf] %v2030
      %2287 = vst [vmem:[%s172 + $0x160] sm:$0xf] %v2031
      %2288 = vst [vmem:[%s172 + $0x164] sm:$0xf] %v2032
      %2289 = vst [vmem:[%s172 + $0x168] sm:$0xf] %v2033
      %2290 = vst [vmem:[%s172 + $0x16c] sm:$0xf] %v2034
      %2291 = vst [vmem:[%s172 + $0x170] sm:$0xf] %v2035
      %2292 = vst [vmem:[%s172 + $0x174] sm:$0xf] %v2036
      %2293 = vst [vmem:[%s172 + $0x178] sm:$0xf] %v2037
      %2294 = vst [vmem:[%s172 + $0x17c] sm:$0xf] %v2038
      %2295 = vst [vmem:[%s172 + $0x180] sm:$0xf] %v2039
      %2296 = vst [vmem:[%s172 + $0x184] sm:$0xf] %v2040
      %2297 = vst [vmem:[%s172 + $0x188] sm:$0xf] %v2041
      %2298 = vst [vmem:[%s172 + $0x18c] sm:$0xf] %v2042
      %2299 = vst [vmem:[%s172 + $0x190] sm:$0xf] %v2043
      %2300 = vst [vmem:[%s172 + $0x194] sm:$0xf] %v2044
      %2301 = vst [vmem:[%s172 + $0x198] sm:$0xf] %v2045
      %2302 = vst [vmem:[%s172 + $0x19c] sm:$0xf] %v2046
      %2303 = vst [vmem:[%s172 + $0x1a0] sm:$0xf] %v2047
      %2304 = vst [vmem:[%s172 + $0x1a4] sm:$0xf] %v2048
      %2305 = vst [vmem:[%s172 + $0x1a8] sm:$0xf] %v2049
      %2306 = vst [vmem:[%s172 + $0x1ac] sm:$0xf] %v2050
      %2307 = vst [vmem:[%s172 + $0x1b0] sm:$0xf] %v2051
      %2308 = vst [vmem:[%s172 + $0x1b4] sm:$0xf] %v2052
      %2309 = vst [vmem:[%s172 + $0x1b8] sm:$0xf] %v2053
      %2310 = vst [vmem:[%s172 + $0x1bc] sm:$0xf] %v2054
      %2311 = vst [vmem:[%s172 + $0x1c0] sm:$0xf] %v2055
      %2312 = vst [vmem:[%s172 + $0x1c4] sm:$0xf] %v2056
      %2313 = vst [vmem:[%s172 + $0x1c8] sm:$0xf] %v2057
      %2314 = vst [vmem:[%s172 + $0x1cc] sm:$0xf] %v2058
      %2315 = vst [vmem:[%s172 + $0x1d0] sm:$0xf] %v2059
      %2316 = vst [vmem:[%s172 + $0x1d4] sm:$0xf] %v2060
      %2317 = vst [vmem:[%s172 + $0x1d8] sm:$0xf] %v2061
      %2318 = vst [vmem:[%s172 + $0x1dc] sm:$0xf] %v2062
      %2319 = vst [vmem:[%s172 + $0x1e0] sm:$0xf] %v2063
      %2320 = vst [vmem:[%s172 + $0x1e4] sm:$0xf] %v2064
      %2321 = vst [vmem:[%s172 + $0x1e8] sm:$0xf] %v2065
      %2322 = vst [vmem:[%s172 + $0x1ec] sm:$0xf] %v2066
      %2323 = vst [vmem:[%s172 + $0x1f0] sm:$0xf] %v2067
      %2324 = vst [vmem:[%s172 + $0x1f4] sm:$0xf] %v2068
      %2325 = vst [vmem:[%s172 + $0x1f8] sm:$0xf] %v2069
      %2326 = vst [vmem:[%s172 + $0x1fc] sm:$0xf] %v2070
      %s2327 = smul.u32 128, %s14
      %p2328 = scmp.lt.s32.totalorder %s2327, 255
      %s2329 = scalar_select %p2328, %s2327, 255
      %s2330 = smul.addr %s2329, 4
      %s2331 = scalar_lea.vmem %s3, %s2330
      // Predicated region
      $region33: #{stage1_d_img_forward.4} parent=31 // pred_check
        %p2332 = pneg %p100
      $region34: #{stage1_d_img_forward.4} parent=31 // pred_check_branch
        %2334 = sbr.rel (%p2332) target = $region36
      $region35: #{stage1_d_img_forward.4} parent=31 // pred_region
        %s2335 = smul.u32 128, %s14
      $region36: #{stage1_d_img_forward.4} parent=31 // pred_fallthru
        _
    $region32: #{stage1_d_img_forward.4} parent=5 // pred_fallthru
      _
    %p2336 = scmp.le.s32.totalorder 2, %s9
    // Predicated region
    $region37: #{stage1_d_img_forward.4} parent=5 // pred_check
      %p2337 = pneg %p2336
    $region38: #{stage1_d_img_forward.4} parent=5 // pred_check_branch
      %2339 = sbr.rel (%p2337) target = $region40
    $region39: #{stage1_d_img_forward.4} parent=5 // pred_region
      %s2340 = ssub.s32 %s9, 2
      // Predicated region
      $region41: #{stage1_d_img_forward.4} parent=39 // pred_check
        %p2341 = pneg %p106
      $region42: #{stage1_d_img_forward.4} parent=39 // pred_check_branch
        %2343 = sbr.rel (%p2341) target = $region44
      $region43: #{stage1_d_img_forward.4} parent=39 // pred_region
        %s2344 = smul.u32 128, %s15
        %p2345 = scmp.lt.s32.totalorder %s2344, 255
        %s2346 = scalar_select %p2345, %s2344, 255
        %s2347 = smul.addr %s2346, 4
        %s2348 = scalar_lea.vmem %s3, %s2347
      $region44: #{stage1_d_img_forward.4} parent=39 // pred_fallthru
        _
    $region40: #{stage1_d_img_forward.4} parent=5 // pred_fallthru
      _
  $region6: #{stage1_d_img_forward.4} parent=0 // loop_footer
    %s13 = sadd.s32 1, %s9
  $region7: #{stage1_d_img_forward.4} parent=0 // loop_footer_branch
    %8 = sbr.rel target = $region3
  $region8: #{stage1_d_img_forward.4} parent=0 // loop_exit
    _

// kernel: stage1_d_img_forward.5
$region0: #{stage1_d_img_forward.5}
  #allocation0 [shape = 'u32[]', space=smem, size = 0x4, offset = 0x4, fixed_abs, tag = 'smem constant byte address 0x4 - core index']
  #allocation1 [shape = 'u32[144,128]{1,0:T(1,128)}', space=vmem, size = 0x12000, scoped, tag = 'internal scratch']
  %s0 = inlined_call_operand.vmem [shape: bf16[512,256], index: 0, kind: input, shape index: {}]
  %s1 = inlined_call_operand.vmem [shape: bf16[256,128], index: 1, kind: input, shape index: {}]
  %s2 = inlined_call_operand.vmem [shape: f32[1,128], index: 2, kind: input, shape index: {}]
  %s3 = inlined_call_operand.vmem [shape: bf16[512,128], index: 3, kind: output, shape index: {}]
  %s4 = sld [smem:[#allocation0]]
  $region45: #{stage1_d_img_forward.5} parent=0
    _
  %s6 = ssub.s32 1, %s4
  %s7 = scalar_select 0, %s6, %s4
  loop: start=0, step=1, limit=4
  $region2: #{stage1_d_img_forward.5} parent=0 // loop_pre_header
    _
  $region3: #{stage1_d_img_forward.5} parent=0 // loop_header
    %s9 = sphi 0, %s13
    %p10 = scmp.ge.s32.totalorder %s9, 4
    %s19 = sphi 0, %s21
    %s22 = sphi 0, %s19
    %s23 = sphi 0, %s22
    %s39 = sphi 0, %s23
    %s43 = sphi 0, %s43
    %s45 = sphi 0, %s43
    %s46 = sphi 0, %s45
    %s60 = sphi 0, %s46
    %s64 = sphi 0, %s64
    %s66 = sphi 0, %s64
    %s67 = sphi 0, %s66
    %s81 = sphi 0, %s67
    %s87 = sphi 0, %s89
    %s90 = sphi 0, %s87
    %s91 = sphi 0, %s90
    %s107 = sphi 0, %s91
  $region4: #{stage1_d_img_forward.5} parent=0 // loop_header_branch
    %12 = sbr.rel (%p10) target = $region8
  $region5: #{stage1_d_img_forward.5} parent=0 // loop_body
    %s14 = ssub.s32 %s9, 1
    %s15 = ssub.s32 %s9, 2
    %s16 = sadd.s32 %s9, 1
    %s17 = ssub.s32 %s9, %s16
    %p18 = scmp.eq.s32.totalorder %s17, 0
    %s20 = sadd.s32 %s19, 1
    %s21 = scalar_select %p18, %s19, %s20
    %p24 = pneg %p18
    %p25 = scmp.eq.s32.totalorder %s9, 1
    %p26 = por %p24, %p25
    %p27 = scmp.ne.s32.totalorder %s19, %s22
    %p28 = scmp.eq.s32.totalorder %s9, 0
    %p29 = por %p27, %p28
    %p30 = scmp.ne.s32.totalorder %s19, %s22
    %p31 = scmp.eq.s32.totalorder %s14, 1
    %p32 = por %p30, %p31
    %p33 = scmp.ne.s32.totalorder %s22, %s23
    %p34 = scmp.eq.s32.totalorder %s14, 0
    %p35 = por %p33, %p34
    %p36 = scmp.ne.s32.totalorder %s22, %s23
    %p37 = scmp.eq.s32.totalorder %s15, 1
    %p38 = por %p36, %p37
    %p40 = scmp.ne.s32.totalorder %s23, %s39
    %p41 = scmp.eq.s32.totalorder %s15, 0
    %p42 = por %p40, %p41
    %s44 = sadd.s32 %s43, 1
    %p47 = scmp.eq.s32.totalorder %s9, 1
    %p48 = scmp.ne.s32.totalorder %s43, %s45
    %p49 = scmp.eq.s32.totalorder %s9, 0
    %p50 = por %p48, %p49
    %p51 = scmp.ne.s32.totalorder %s43, %s45
    %p52 = scmp.eq.s32.totalorder %s14, 1
    %p53 = por %p51, %p52
    %p54 = scmp.ne.s32.totalorder %s45, %s46
    %p55 = scmp.eq.s32.totalorder %s14, 0
    %p56 = por %p54, %p55
    %p57 = scmp.ne.s32.totalorder %s45, %s46
    %p58 = scmp.eq.s32.totalorder %s15, 1
    %p59 = por %p57, %p58
    %p61 = scmp.ne.s32.totalorder %s46, %s60
    %p62 = scmp.eq.s32.totalorder %s15, 0
    %p63 = por %p61, %p62
    %s65 = sadd.s32 %s64, 1
    %p68 = scmp.eq.s32.totalorder %s9, 1
    %p69 = scmp.ne.s32.totalorder %s64, %s66
    %p70 = scmp.eq.s32.totalorder %s9, 0
    %p71 = por %p69, %p70
    %p72 = scmp.ne.s32.totalorder %s64, %s66
    %p73 = scmp.eq.s32.totalorder %s14, 1
    %p74 = por %p72, %p73
    %p75 = scmp.ne.s32.totalorder %s66, %s67
    %p76 = scmp.eq.s32.totalorder %s14, 0
    %p77 = por %p75, %p76
    %p78 = scmp.ne.s32.totalorder %s66, %s67
    %p79 = scmp.eq.s32.totalorder %s15, 1
    %p80 = por %p78, %p79
    %p82 = scmp.ne.s32.totalorder %s67, %s81
    %p83 = scmp.eq.s32.totalorder %s15, 0
    %p84 = por %p82, %p83
    %s85 = ssub.s32 %s9, %s16
    %p86 = scmp.eq.s32.totalorder %s85, 0
    %s88 = sadd.s32 %s87, 1
    %s89 = scalar_select %p86, %s87, %s88
    %p92 = pneg %p86
    %p93 = scmp.eq.s32.totalorder %s9, 1
    %p94 = por %p92, %p93
    %p95 = scmp.ne.s32.totalorder %s87, %s90
    %p96 = scmp.eq.s32.totalorder %s9, 0
    %p97 = por %p95, %p96
    %p98 = scmp.ne.s32.totalorder %s87, %s90
    %p99 = scmp.eq.s32.totalorder %s14, 1
    %p100 = por %p98, %p99
    %p101 = scmp.ne.s32.totalorder %s90, %s91
    %p102 = scmp.eq.s32.totalorder %s14, 0
    %p103 = por %p101, %p102
    %p104 = scmp.ne.s32.totalorder %s90, %s91
    %p105 = scmp.eq.s32.totalorder %s15, 1
    %p106 = por %p104, %p105
    %p108 = scmp.ne.s32.totalorder %s91, %s107
    %p109 = scmp.eq.s32.totalorder %s15, 0
    %p110 = por %p108, %p109
    %p111 = scmp.le.s32.totalorder 1, %s9
    %p112 = scmp.lt.s32.totalorder %s9, 3
    %p113 = pnand %p111, %p112
    %p114 = pneg %p113
    // Predicated region
    $region9: #{stage1_d_img_forward.5} parent=5 // pred_check
      _
    $region10: #{stage1_d_img_forward.5} parent=5 // pred_check_branch
      %116 = sbr.rel (%p113) target = $region12
    $region11: #{stage1_d_img_forward.5} parent=5 // pred_region
      %s117 = ssub.s32 %s9, 1
      // Predicated region
      $region13: #{stage1_d_img_forward.5} parent=11 // pred_check
        %p118 = pneg %p56
      $region14: #{stage1_d_img_forward.5} parent=11 // pred_check_branch
        %120 = sbr.rel (%p118) target = $region16
      $region15: #{stage1_d_img_forward.5} parent=11 // pred_region
        _
      $region16: #{stage1_d_img_forward.5} parent=11 // pred_fallthru
        _
      // Predicated region
      $region17: #{stage1_d_img_forward.5} parent=11 // pred_check
        %p121 = pneg %p77
      $region18: #{stage1_d_img_forward.5} parent=11 // pred_check_branch
        %123 = sbr.rel (%p121) target = $region20
      $region19: #{stage1_d_img_forward.5} parent=11 // pred_region
        _
      $region20: #{stage1_d_img_forward.5} parent=11 // pred_fallthru
        _
    $region12: #{stage1_d_img_forward.5} parent=5 // pred_fallthru
      _
    %p124 = scmp.lt.s32.totalorder %s9, 2
    // Predicated region
    $region21: #{stage1_d_img_forward.5} parent=5 // pred_check
      %p125 = pneg %p124
    $region22: #{stage1_d_img_forward.5} parent=5 // pred_check_branch
      %127 = sbr.rel (%p125) target = $region24
    $region23: #{stage1_d_img_forward.5} parent=5 // pred_region
      // Predicated region
      $region25: #{stage1_d_img_forward.5} parent=23 // pred_check
        %p128 = pneg %p29
      $region26: #{stage1_d_img_forward.5} parent=23 // pred_check_branch
        %130 = sbr.rel (%p128) target = $region28
      $region27: #{stage1_d_img_forward.5} parent=23 // pred_region
        %s131 = smul.u32 32, %s9
        %p132 = scmp.lt.s32.totalorder %s131, 63
        %s133 = scalar_select %p132, %s131, 63
        %s134 = smul.addr %s133, 2
        %s135 = smul.addr %s134, 4
        %s136 = scalar_lea.vmem %s0, %s135
        %s137 = smul.u32 32, %s9
      $region28: #{stage1_d_img_forward.5} parent=23 // pred_fallthru
        _
    $region24: #{stage1_d_img_forward.5} parent=5 // pred_fallthru
      _
    %p138 = scmp.le.s32.totalorder 1, %s9
    %p139 = scmp.lt.s32.totalorder %s9, 3
    %p140 = pnand %p138, %p139
    %p141 = pneg %p140
    // Predicated region
    $region29: #{stage1_d_img_forward.5} parent=5 // pred_check
      _
    $region30: #{stage1_d_img_forward.5} parent=5 // pred_check_branch
      %143 = sbr.rel (%p140) target = $region32
    $region31: #{stage1_d_img_forward.5} parent=5 // pred_region
      %s144 = ssub.s32 %s9, 1
      %s145 = smul.u32 32, %s14
      %p146 = scmp.lt.s32.totalorder %s145, 63
      %s147 = scalar_select %p146, %s145, 63
      %s148 = smul.addr %s147, 2
      %s149 = smul.addr %s148, 4
      %s150 = scalar_lea.vmem %s0, %s149
      %p151 = pneg %p35
      %p152 = pneg %p32
      %p153 = pneg %p56
      %p154 = pneg %p53
      %p155 = pneg %p77
      %p156 = pneg %p74
      %p157 = pneg %p103
      %p158 = pneg %p100
      %s159 = smul.u32 32, %s14
      %p160 = scmp.lt.s32.totalorder %s159, 63
      %s161 = scalar_select %p160, %s159, 63
      %s162 = smul.addr %s161, 4
      %s163 = scalar_lea.vmem %s3, %s162
      %s164 = smul.u32 32, %s14
      %p165 = scmp.lt.s32.totalorder %s164, 63
      %s166 = scalar_select %p165, %s164, 63
      %s167 = smul.addr %s166, 2
      %s168 = smul.addr %s167, 4
      %s169 = scalar_lea.vmem %s0, %s168
      %s170 = smul.u32 32, %s14
      %s171 = smul.u32 32, %s14
      %p172 = scmp.lt.s32.totalorder %s171, 63
      %s173 = scalar_select %p172, %s171, 63
      %s174 = smul.addr %s173, 4
      %s175 = scalar_lea.vmem %s3, %s174
      %s176 = smul.u32 32, %s14
      %v178 = vld [vmem:[%s169] sm:$0xff]
      %v179 = vld [vmem:[%s169 + $0x8] sm:$0xff]
      %v180 = vld [vmem:[%s169 + $0x10] sm:$0xff]
      %v181 = vld [vmem:[%s169 + $0x18] sm:$0xff]
      %v182 = vld [vmem:[%s169 + $0x20] sm:$0xff]
      %v183 = vld [vmem:[%s169 + $0x28] sm:$0xff]
      %v184 = vld [vmem:[%s169 + $0x30] sm:$0xff]
      %v185 = vld [vmem:[%s169 + $0x38] sm:$0xff]
      %v186 = vld [vmem:[%s169 + $0x40] sm:$0xff]
      %v187 = vld [vmem:[%s169 + $0x48] sm:$0xff]
      %v188 = vld [vmem:[%s169 + $0x50] sm:$0xff]
      %v189 = vld [vmem:[%s169 + $0x58] sm:$0xff]
      %v190 = vld [vmem:[%s169 + $0x60] sm:$0xff]
      %v191 = vld [vmem:[%s169 + $0x68] sm:$0xff]
      %v192 = vld [vmem:[%s169 + $0x70] sm:$0xff]
      %v193 = vld [vmem:[%s169 + $0x78] sm:$0xff]
      %v194 = vld [vmem:[%s169 + $0x80] sm:$0xff]
      %v195 = vld [vmem:[%s169 + $0x88] sm:$0xff]
      %v196 = vld [vmem:[%s169 + $0x90] sm:$0xff]
      %v197 = vld [vmem:[%s169 + $0x98] sm:$0xff]
      %v198 = vld [vmem:[%s169 + $0xa0] sm:$0xff]
      %v199 = vld [vmem:[%s169 + $0xa8] sm:$0xff]
      %v200 = vld [vmem:[%s169 + $0xb0] sm:$0xff]
      %v201 = vld [vmem:[%s169 + $0xb8] sm:$0xff]
      %v202 = vld [vmem:[%s169 + $0xc0] sm:$0xff]
      %v203 = vld [vmem:[%s169 + $0xc8] sm:$0xff]
      %v204 = vld [vmem:[%s169 + $0xd0] sm:$0xff]
      %v205 = vld [vmem:[%s169 + $0xd8] sm:$0xff]
      %v206 = vld [vmem:[%s169 + $0xe0] sm:$0xff]
      %v207 = vld [vmem:[%s169 + $0xe8] sm:$0xff]
      %v208 = vld [vmem:[%s169 + $0xf0] sm:$0xff]
      %v209 = vld [vmem:[%s169 + $0xf8] sm:$0xff]
      %v210 = vld [vmem:[%s1] sm:$0xf]
      %v211 = vld [vmem:[%s1 + $0x4] sm:$0xf]
      %v212 = vld [vmem:[%s1 + $0x8] sm:$0xf]
      %v213 = vld [vmem:[%s1 + $0xc] sm:$0xf]
      %v214 = vld [vmem:[%s1 + $0x10] sm:$0xf]
      %v215 = vld [vmem:[%s1 + $0x14] sm:$0xf]
      %v216 = vld [vmem:[%s1 + $0x18] sm:$0xf]
      %v217 = vld [vmem:[%s1 + $0x1c] sm:$0xf]
      %v218 = vld [vmem:[%s1 + $0x20] sm:$0xf]
      %v219 = vld [vmem:[%s1 + $0x24] sm:$0xf]
      %v220 = vld [vmem:[%s1 + $0x28] sm:$0xf]
      %v221 = vld [vmem:[%s1 + $0x2c] sm:$0xf]
      %v222 = vld [vmem:[%s1 + $0x30] sm:$0xf]
      %v223 = vld [vmem:[%s1 + $0x34] sm:$0xf]
      %v224 = vld [vmem:[%s1 + $0x38] sm:$0xf]
      %v225 = vld [vmem:[%s1 + $0x3c] sm:$0xf]
      %v226 = vld [vmem:[%s1 + $0x40] sm:$0xf]
      %v227 = vld [vmem:[%s1 + $0x44] sm:$0xf]
      %v228 = vld [vmem:[%s1 + $0x48] sm:$0xf]
      %v229 = vld [vmem:[%s1 + $0x4c] sm:$0xf]
      %v230 = vld [vmem:[%s1 + $0x50] sm:$0xf]
      %v231 = vld [vmem:[%s1 + $0x54] sm:$0xf]
      %v232 = vld [vmem:[%s1 + $0x58] sm:$0xf]
      %v233 = vld [vmem:[%s1 + $0x5c] sm:$0xf]
      %v234 = vld [vmem:[%s1 + $0x60] sm:$0xf]
      %v235 = vld [vmem:[%s1 + $0x64] sm:$0xf]
      %v236 = vld [vmem:[%s1 + $0x68] sm:$0xf]
      %v237 = vld [vmem:[%s1 + $0x6c] sm:$0xf]
      %v238 = vld [vmem:[%s1 + $0x70] sm:$0xf]
      %v239 = vld [vmem:[%s1 + $0x74] sm:$0xf]
      %v240 = vld [vmem:[%s1 + $0x78] sm:$0xf]
      %v241 = vld [vmem:[%s1 + $0x7c] sm:$0xf]
      %v242 = vld [vmem:[%s2] sm:$0x1]
      %v244 = vlaneseq
      %v245 = vshrl.u32 %v244, 7
      %v246 = vsub.s32 0, %v245
      %v247 = vrot.slane %v242, %v246
      %v281 = vunpack.c.l.b16 %v178
      %v282 = vunpack.c.h.b16 %v178
      %v283 = vunpack.c.l.b16 %v179
      %v284 = vunpack.c.h.b16 %v179
      %v285 = vunpack.c.l.b16 %v180
      %v286 = vunpack.c.h.b16 %v180
      %v287 = vunpack.c.l.b16 %v181
      %v288 = vunpack.c.h.b16 %v181
      %v289 = vunpack.c.l.b16 %v182
      %v290 = vunpack.c.h.b16 %v182
      %v291 = vunpack.c.l.b16 %v183
      %v292 = vunpack.c.h.b16 %v183
      %v293 = vunpack.c.l.b16 %v184
      %v294 = vunpack.c.h.b16 %v184
      %v295 = vunpack.c.l.b16 %v185
      %v296 = vunpack.c.h.b16 %v185
      %v297 = vunpack.c.l.b16 %v186
      %v298 = vunpack.c.h.b16 %v186
      %v299 = vunpack.c.l.b16 %v187
      %v300 = vunpack.c.h.b16 %v187
      %v301 = vunpack.c.l.b16 %v188
      %v302 = vunpack.c.h.b16 %v188
      %v303 = vunpack.c.l.b16 %v189
      %v304 = vunpack.c.h.b16 %v189
      %v305 = vunpack.c.l.b16 %v190
      %v306 = vunpack.c.h.b16 %v190
      %v307 = vunpack.c.l.b16 %v191
      %v308 = vunpack.c.h.b16 %v191
      %v309 = vunpack.c.l.b16 %v192
      %v310 = vunpack.c.h.b16 %v192
      %v311 = vunpack.c.l.b16 %v193
      %v312 = vunpack.c.h.b16 %v193
      %v313 = vunpack.c.l.b16 %v194
      %v314 = vunpack.c.h.b16 %v194
      %v315 = vunpack.c.l.b16 %v195
      %v316 = vunpack.c.h.b16 %v195
      %v317 = vunpack.c.l.b16 %v196
      %v318 = vunpack.c.h.b16 %v196
      %v319 = vunpack.c.l.b16 %v197
      %v320 = vunpack.c.h.b16 %v197
      %v321 = vunpack.c.l.b16 %v198
      %v322 = vunpack.c.h.b16 %v198
      %v323 = vunpack.c.l.b16 %v199
      %v324 = vunpack.c.h.b16 %v199
      %v325 = vunpack.c.l.b16 %v200
      %v326 = vunpack.c.h.b16 %v200
      %v327 = vunpack.c.l.b16 %v201
      %v328 = vunpack.c.h.b16 %v201
      %v329 = vunpack.c.l.b16 %v202
      %v330 = vunpack.c.h.b16 %v202
      %v331 = vunpack.c.l.b16 %v203
      %v332 = vunpack.c.h.b16 %v203
      %v333 = vunpack.c.l.b16 %v204
      %v334 = vunpack.c.h.b16 %v204
      %v335 = vunpack.c.l.b16 %v205
      %v336 = vunpack.c.h.b16 %v205
      %v337 = vunpack.c.l.b16 %v206
      %v338 = vunpack.c.h.b16 %v206
      %v339 = vunpack.c.l.b16 %v207
      %v340 = vunpack.c.h.b16 %v207
      %v341 = vunpack.c.l.b16 %v208
      %v342 = vunpack.c.h.b16 %v208
      %v343 = vunpack.c.l.b16 %v209
      %v344 = vunpack.c.h.b16 %v209
      %v345 = vpack.c.b16 %v283, %v281
      %v346 = vpack.c.b16 %v284, %v282
      %v347 = vpack.c.b16 %v287, %v285
      %v348 = vpack.c.b16 %v288, %v286
      %v349 = vpack.c.b16 %v291, %v289
      %v350 = vpack.c.b16 %v292, %v290
      %v351 = vpack.c.b16 %v295, %v293
      %v352 = vpack.c.b16 %v296, %v294
      %v353 = vpack.c.b16 %v299, %v297
      %v354 = vpack.c.b16 %v300, %v298
      %v355 = vpack.c.b16 %v303, %v301
      %v356 = vpack.c.b16 %v304, %v302
      %v357 = vpack.c.b16 %v307, %v305
      %v358 = vpack.c.b16 %v308, %v306
      %v359 = vpack.c.b16 %v311, %v309
      %v360 = vpack.c.b16 %v312, %v310
      %v361 = vpack.c.b16 %v315, %v313
      %v362 = vpack.c.b16 %v316, %v314
      %v363 = vpack.c.b16 %v319, %v317
      %v364 = vpack.c.b16 %v320, %v318
      %v365 = vpack.c.b16 %v323, %v321
      %v366 = vpack.c.b16 %v324, %v322
      %v367 = vpack.c.b16 %v327, %v325
      %v368 = vpack.c.b16 %v328, %v326
      %v369 = vpack.c.b16 %v331, %v329
      %v370 = vpack.c.b16 %v332, %v330
      %v371 = vpack.c.b16 %v335, %v333
      %v372 = vpack.c.b16 %v336, %v334
      %v373 = vpack.c.b16 %v339, %v337
      %v374 = vpack.c.b16 %v340, %v338
      %v375 = vpack.c.b16 %v343, %v341
      %v376 = vpack.c.b16 %v344, %v342
      %v441 = vunpack.c.l.b16 %v210
      %v442 = vunpack.c.l.b16 %v211
      %v443 = vunpack.c.l.b16 %v212
      %v444 = vunpack.c.l.b16 %v213
      %v445 = vunpack.c.l.b16 %v214
      %v446 = vunpack.c.l.b16 %v215
      %v447 = vunpack.c.l.b16 %v216
      %v448 = vunpack.c.l.b16 %v217
      %v449 = vunpack.c.l.b16 %v218
      %v450 = vunpack.c.l.b16 %v219
      %v451 = vunpack.c.l.b16 %v220
      %v452 = vunpack.c.l.b16 %v221
      %v453 = vunpack.c.l.b16 %v222
      %v454 = vunpack.c.l.b16 %v223
      %v455 = vunpack.c.l.b16 %v224
      %v456 = vunpack.c.l.b16 %v225
      %v457 = vunpack.c.l.b16 %v226
      %v458 = vunpack.c.l.b16 %v227
      %v459 = vunpack.c.l.b16 %v228
      %v460 = vunpack.c.l.b16 %v229
      %v461 = vunpack.c.l.b16 %v230
      %v462 = vunpack.c.l.b16 %v231
      %v463 = vunpack.c.l.b16 %v232
      %v464 = vunpack.c.l.b16 %v233
      %v465 = vunpack.c.l.b16 %v234
      %v466 = vunpack.c.l.b16 %v235
      %v467 = vunpack.c.l.b16 %v236
      %v468 = vunpack.c.l.b16 %v237
      %v469 = vunpack.c.l.b16 %v238
      %v470 = vunpack.c.l.b16 %v239
      %v471 = vunpack.c.l.b16 %v240
      %v472 = vunpack.c.l.b16 %v241
      %v473 = vpack.c.b16 %v442, %v441
      %v474 = vpack.c.b16 %v444, %v443
      %v475 = vpack.c.b16 %v446, %v445
      %v476 = vpack.c.b16 %v448, %v447
      %v477 = vpack.c.b16 %v450, %v449
      %v478 = vpack.c.b16 %v452, %v451
      %v479 = vpack.c.b16 %v454, %v453
      %v480 = vpack.c.b16 %v456, %v455
      %v481 = vpack.c.b16 %v458, %v457
      %v482 = vpack.c.b16 %v460, %v459
      %v483 = vpack.c.b16 %v462, %v461
      %v484 = vpack.c.b16 %v464, %v463
      %v485 = vpack.c.b16 %v466, %v465
      %v486 = vpack.c.b16 %v468, %v467
      %v487 = vpack.c.b16 %v470, %v469
      %v488 = vpack.c.b16 %v472, %v471
      %505 = vmatprep.subr.bf16.mxu0 0
      %506 = vmatpush1.bf16.msra.mxu0 %v473
      %507 = vmatprep.subr.bf16.mxu0 0
      %508 = vmatpush1.bf16.msra.mxu0 %v474
      %509 = vmatprep.subr.bf16.mxu0 0
      %510 = vmatpush1.bf16.msra.mxu0 %v475
      %511 = vmatprep.subr.bf16.mxu0 0
      %512 = vmatpush1.bf16.msra.mxu0 %v476
      %513 = vmatprep.subr.bf16.mxu0 0
      %514 = vmatpush1.bf16.msra.mxu0 %v477
      %515 = vmatprep.subr.bf16.mxu0 0
      %516 = vmatpush1.bf16.msra.mxu0 %v478
      %517 = vmatprep.subr.bf16.mxu0 0
      %518 = vmatpush1.bf16.msra.mxu0 %v479
      %519 = vmatprep.subr.bf16.mxu0 0
      %520 = vmatpush1.bf16.msra.mxu0 %v480
      %521 = vmatprep.subr.bf16.mxu0 0
      %522 = vmatpush1.bf16.msra.mxu0 %v481
      %523 = vmatprep.subr.bf16.mxu0 0
      %524 = vmatpush1.bf16.msra.mxu0 %v482
      %525 = vmatprep.subr.bf16.mxu0 0
      %526 = vmatpush1.bf16.msra.mxu0 %v483
      %527 = vmatprep.subr.bf16.mxu0 0
      %528 = vmatpush1.bf16.msra.mxu0 %v484
      %529 = vmatprep.subr.bf16.mxu0 0
      %530 = vmatpush1.bf16.msra.mxu0 %v485
      %531 = vmatprep.subr.bf16.mxu0 0
      %532 = vmatpush1.bf16.msra.mxu0 %v486
      %533 = vmatprep.subr.bf16.mxu0 0
      %534 = vmatpush1.bf16.msra.mxu0 %v487
      %535 = vmatprep.subr.bf16.mxu0 0
      %536 = vmatpush1.bf16.msra.mxu0 %v488
      %537 = vmatprep.mubr.bf16.mxu0 %v346
      %538 = vmatmul.mubr.bf16.gmra.mrb[0].mxu0 %v345
      %v539 = vpop.f32.mrb[0].mxu0
      %v540 = vadd.f32 %v247, %v539
      %v541 = vpop.f32.mrb[0].mxu0
      %v542 = vpop.f32.mrb[0].mxu0
      %v543 = vadd.f32 %v247, %v542
      %v544 = vpop.f32.mrb[0].mxu0
      %545 = vmatprep.mubr.bf16.mxu0 %v348
      %546 = vmatmul.mubr.bf16.gmra.mrb[0].mxu0 %v347
      %v547 = vpop.f32.mrb[0].mxu0
      %v548 = vadd.f32 %v247, %v547
      %v549 = vpop.f32.mrb[0].mxu0
      %v550 = vpop.f32.mrb[0].mxu0
      %v551 = vadd.f32 %v247, %v550
      %v552 = vpop.f32.mrb[0].mxu0
      %553 = vmatprep.mubr.bf16.mxu0 %v350
      %554 = vmatmul.mubr.bf16.gmra.mrb[0].mxu0 %v349
      %v555 = vpop.f32.mrb[0].mxu0
      %v556 = vadd.f32 %v247, %v555
      %v557 = vpop.f32.mrb[0].mxu0
      %v558 = vpop.f32.mrb[0].mxu0
      %v559 = vadd.f32 %v247, %v558
      %v560 = vpop.f32.mrb[0].mxu0
      %561 = vmatprep.mubr.bf16.mxu0 %v352
      %562 = vmatmul.mubr.bf16.gmra.mrb[0].mxu0 %v351
      %v563 = vpop.f32.mrb[0].mxu0
      %v564 = vadd.f32 %v247, %v563
      %v565 = vpop.f32.mrb[0].mxu0
      %v566 = vpop.f32.mrb[0].mxu0
      %v567 = vadd.f32 %v247, %v566
      %v568 = vpop.f32.mrb[0].mxu0
      %569 = vmatprep.mubr.bf16.mxu0 %v354
      %570 = vmatmul.mubr.bf16.gmra.mrb[0].mxu0 %v353
      %v571 = vpop.f32.mrb[0].mxu0
      %v572 = vadd.f32 %v247, %v571
      %v573 = vpop.f32.mrb[0].mxu0
      %v574 = vpop.f32.mrb[0].mxu0
      %v575 = vadd.f32 %v247, %v574
      %v576 = vpop.f32.mrb[0].mxu0
      %577 = vmatprep.mubr.bf16.mxu0 %v356
      %578 = vmatmul.mubr.bf16.gmra.mrb[0].mxu0 %v355
      %v579 = vpop.f32.mrb[0].mxu0
      %v580 = vadd.f32 %v247, %v579
      %v581 = vpop.f32.mrb[0].mxu0
      %v582 = vpop.f32.mrb[0].mxu0
      %v583 = vadd.f32 %v247, %v582
      %v584 = vpop.f32.mrb[0].mxu0
      %585 = vmatprep.mubr.bf16.mxu0 %v358
      %586 = vmatmul.mubr.bf16.gmra.mrb[0].mxu0 %v357
      %v587 = vpop.f32.mrb[0].mxu0
      %v588 = vadd.f32 %v247, %v587
      %v589 = vpop.f32.mrb[0].mxu0
      %v590 = vpop.f32.mrb[0].mxu0
      %v591 = vadd.f32 %v247, %v590
      %v592 = vpop.f32.mrb[0].mxu0
      %593 = vmatprep.mubr.bf16.mxu0 %v360
      %594 = vmatmul.mubr.bf16.gmra.mrb[0].mxu0 %v359
      %v595 = vpop.f32.mrb[0].mxu0
      %v596 = vadd.f32 %v247, %v595
      %v597 = vpop.f32.mrb[0].mxu0
      %v598 = vpop.f32.mrb[0].mxu0
      %v599 = vadd.f32 %v247, %v598
      %v600 = vpop.f32.mrb[0].mxu0
      %601 = vmatprep.mubr.bf16.mxu0 %v362
      %602 = vmatmul.mubr.bf16.gmra.mrb[0].mxu0 %v361
      %v603 = vpop.f32.mrb[0].mxu0
      %v604 = vadd.f32 %v247, %v603
      %v605 = vpop.f32.mrb[0].mxu0
      %v606 = vpop.f32.mrb[0].mxu0
      %v607 = vadd.f32 %v247, %v606
      %v608 = vpop.f32.mrb[0].mxu0
      %609 = vmatprep.mubr.bf16.mxu0 %v364
      %610 = vmatmul.mubr.bf16.gmra.mrb[0].mxu0 %v363
      %v611 = vpop.f32.mrb[0].mxu0
      %v612 = vadd.f32 %v247, %v611
      %v613 = vpop.f32.mrb[0].mxu0
      %v614 = vpop.f32.mrb[0].mxu0
      %v615 = vadd.f32 %v247, %v614
      %v616 = vpop.f32.mrb[0].mxu0
      %617 = vmatprep.mubr.bf16.mxu0 %v366
      %618 = vmatmul.mubr.bf16.gmra.mrb[0].mxu0 %v365
      %v619 = vpop.f32.mrb[0].mxu0
      %v620 = vadd.f32 %v247, %v619
      %v621 = vpop.f32.mrb[0].mxu0
      %v622 = vpop.f32.mrb[0].mxu0
      %v623 = vadd.f32 %v247, %v622
      %v624 = vpop.f32.mrb[0].mxu0
      %625 = vmatprep.mubr.bf16.mxu0 %v368
      %626 = vmatmul.mubr.bf16.gmra.mrb[0].mxu0 %v367
      %v627 = vpop.f32.mrb[0].mxu0
      %v628 = vadd.f32 %v247, %v627
      %v629 = vpop.f32.mrb[0].mxu0
      %v630 = vpop.f32.mrb[0].mxu0
      %v631 = vadd.f32 %v247, %v630
      %v632 = vpop.f32.mrb[0].mxu0
      %633 = vmatprep.mubr.bf16.mxu0 %v370
      %634 = vmatmul.mubr.bf16.gmra.mrb[0].mxu0 %v369
      %v635 = vpop.f32.mrb[0].mxu0
      %v636 = vadd.f32 %v247, %v635
      %v637 = vpop.f32.mrb[0].mxu0
      %v638 = vpop.f32.mrb[0].mxu0
      %v639 = vadd.f32 %v247, %v638
      %v640 = vpop.f32.mrb[0].mxu0
      %641 = vmatprep.mubr.bf16.mxu0 %v372
      %642 = vmatmul.mubr.bf16.gmra.mrb[0].mxu0 %v371
      %v643 = vpop.f32.mrb[0].mxu0
      %v644 = vadd.f32 %v247, %v643
      %v645 = vpop.f32.mrb[0].mxu0
      %v646 = vpop.f32.mrb[0].mxu0
      %v647 = vadd.f32 %v247, %v646
      %v648 = vpop.f32.mrb[0].mxu0
      %649 = vmatprep.mubr.bf16.mxu0 %v374
      %650 = vmatmul.mubr.bf16.gmra.mrb[0].mxu0 %v373
      %v651 = vpop.f32.mrb[0].mxu0
      %v652 = vadd.f32 %v247, %v651
      %v653 = vpop.f32.mrb[0].mxu0
      %v654 = vpop.f32.mrb[0].mxu0
      %v655 = vadd.f32 %v247, %v654
      %v656 = vpop.f32.mrb[0].mxu0
      %657 = vmatprep.mubr.bf16.mxu0 %v376
      %658 = vmatmul.mubr.bf16.gmra.mrb[0].mxu0 %v375
      %v659 = vpop.f32.mrb[0].mxu0
      %v660 = vadd.f32 %v247, %v659
      %v661 = vpop.f32.mrb[0].mxu0
      %v662 = vpop.f32.mrb[0].mxu0
      %v663 = vadd.f32 %v247, %v662
      %v664 = vpop.f32.mrb[0].mxu0
      %665 = vdwg.mxu0
      %vm666 = vcmp.gt.f32.partialorder %v540, 0.0
      %vm667 = vcmp.gt.f32.partialorder %v543, 0.0
      %vm668 = vcmp.gt.f32.partialorder %v548, 0.0
      %vm669 = vcmp.gt.f32.partialorder %v551, 0.0
      %vm670 = vcmp.gt.f32.partialorder %v556, 0.0
      %vm671 = vcmp.gt.f32.partialorder %v559, 0.0
      %vm672 = vcmp.gt.f32.partialorder %v564, 0.0
      %vm673 = vcmp.gt.f32.partialorder %v567, 0.0
      %vm674 = vcmp.gt.f32.partialorder %v572, 0.0
      %vm675 = vcmp.gt.f32.partialorder %v575, 0.0
      %vm676 = vcmp.gt.f32.partialorder %v580, 0.0
      %vm677 = vcmp.gt.f32.partialorder %v583, 0.0
      %vm678 = vcmp.gt.f32.partialorder %v588, 0.0
      %vm679 = vcmp.gt.f32.partialorder %v591, 0.0
      %vm680 = vcmp.gt.f32.partialorder %v596, 0.0
      %vm681 = vcmp.gt.f32.partialorder %v599, 0.0
      %vm682 = vcmp.gt.f32.partialorder %v604, 0.0
      %vm683 = vcmp.gt.f32.partialorder %v607, 0.0
      %vm684 = vcmp.gt.f32.partialorder %v612, 0.0
      %vm685 = vcmp.gt.f32.partialorder %v615, 0.0
      %vm686 = vcmp.gt.f32.partialorder %v620, 0.0
      %vm687 = vcmp.gt.f32.partialorder %v623, 0.0
      %vm688 = vcmp.gt.f32.partialorder %v628, 0.0
      %vm689 = vcmp.gt.f32.partialorder %v631, 0.0
      %vm690 = vcmp.gt.f32.partialorder %v636, 0.0
      %vm691 = vcmp.gt.f32.partialorder %v639, 0.0
      %vm692 = vcmp.gt.f32.partialorder %v644, 0.0
      %vm693 = vcmp.gt.f32.partialorder %v647, 0.0
      %vm694 = vcmp.gt.f32.partialorder %v652, 0.0
      %vm695 = vcmp.gt.f32.partialorder %v655, 0.0
      %vm696 = vcmp.gt.f32.partialorder %v660, 0.0
      %vm697 = vcmp.gt.f32.partialorder %v663, 0.0
      %v698 = vmul.f32 %v540, 0.2
      %v699 = vmul.f32 %v543, 0.2
      %v700 = vmul.f32 %v548, 0.2
      %v701 = vmul.f32 %v551, 0.2
      %v702 = vmul.f32 %v556, 0.2
      %v703 = vmul.f32 %v559, 0.2
      %v704 = vmul.f32 %v564, 0.2
      %v705 = vmul.f32 %v567, 0.2
      %v706 = vmul.f32 %v572, 0.2
      %v707 = vmul.f32 %v575, 0.2
      %v708 = vmul.f32 %v580, 0.2
      %v709 = vmul.f32 %v583, 0.2
      %v710 = vmul.f32 %v588, 0.2
      %v711 = vmul.f32 %v591, 0.2
      %v712 = vmul.f32 %v596, 0.2
      %v713 = vmul.f32 %v599, 0.2
      %v714 = vmul.f32 %v604, 0.2
      %v715 = vmul.f32 %v607, 0.2
      %v716 = vmul.f32 %v612, 0.2
      %v717 = vmul.f32 %v615, 0.2
      %v718 = vmul.f32 %v620, 0.2
      %v719 = vmul.f32 %v623, 0.2
      %v720 = vmul.f32 %v628, 0.2
      %v721 = vmul.f32 %v631, 0.2
      %v722 = vmul.f32 %v636, 0.2
      %v723 = vmul.f32 %v639, 0.2
      %v724 = vmul.f32 %v644, 0.2
      %v725 = vmul.f32 %v647, 0.2
      %v726 = vmul.f32 %v652, 0.2
      %v727 = vmul.f32 %v655, 0.2
      %v728 = vmul.f32 %v660, 0.2
      %v729 = vmul.f32 %v663, 0.2
      %v730 = vsel %vm666, %v540, %v698
      %v731 = vsel %vm667, %v543, %v699
      %v732 = vsel %vm668, %v548, %v700
      %v733 = vsel %vm669, %v551, %v701
      %v734 = vsel %vm670, %v556, %v702
      %v735 = vsel %vm671, %v559, %v703
      %v736 = vsel %vm672, %v564, %v704
      %v737 = vsel %vm673, %v567, %v705
      %v738 = vsel %vm674, %v572, %v706
      %v739 = vsel %vm675, %v575, %v707
      %v740 = vsel %vm676, %v580, %v708
      %v741 = vsel %vm677, %v583, %v709
      %v742 = vsel %vm678, %v588, %v710
      %v743 = vsel %vm679, %v591, %v711
      %v744 = vsel %vm680, %v596, %v712
      %v745 = vsel %vm681, %v599, %v713
      %v746 = vsel %vm682, %v604, %v714
      %v747 = vsel %vm683, %v607, %v715
      %v748 = vsel %vm684, %v612, %v716
      %v749 = vsel %vm685, %v615, %v717
      %v750 = vsel %vm686, %v620, %v718
      %v751 = vsel %vm687, %v623, %v719
      %v752 = vsel %vm688, %v628, %v720
      %v753 = vsel %vm689, %v631, %v721
      %v754 = vsel %vm690, %v636, %v722
      %v755 = vsel %vm691, %v639, %v723
      %v756 = vsel %vm692, %v644, %v724
      %v757 = vsel %vm693, %v647, %v725
      %v758 = vsel %vm694, %v652, %v726
      %v759 = vsel %vm695, %v655, %v727
      %v760 = vsel %vm696, %v660, %v728
      %v761 = vsel %vm697, %v663, %v729
      %v762 = vpack.c.bf16 %v731, %v730
      %v763 = vpack.c.bf16 %v733, %v732
      %v764 = vpack.c.bf16 %v735, %v734
      %v765 = vpack.c.bf16 %v737, %v736
      %v766 = vpack.c.bf16 %v739, %v738
      %v767 = vpack.c.bf16 %v741, %v740
      %v768 = vpack.c.bf16 %v743, %v742
      %v769 = vpack.c.bf16 %v745, %v744
      %v770 = vpack.c.bf16 %v747, %v746
      %v771 = vpack.c.bf16 %v749, %v748
      %v772 = vpack.c.bf16 %v751, %v750
      %v773 = vpack.c.bf16 %v753, %v752
      %v774 = vpack.c.bf16 %v755, %v754
      %v775 = vpack.c.bf16 %v757, %v756
      %v776 = vpack.c.bf16 %v759, %v758
      %v777 = vpack.c.bf16 %v761, %v760
      %v794 = vunpack.c.l.b16 %v762
      %v795 = vunpack.c.h.b16 %v762
      %v796 = vunpack.c.l.b16 %v763
      %v797 = vunpack.c.h.b16 %v763
      %v798 = vunpack.c.l.b16 %v764
      %v799 = vunpack.c.h.b16 %v764
      %v800 = vunpack.c.l.b16 %v765
      %v801 = vunpack.c.h.b16 %v765
      %v802 = vunpack.c.l.b16 %v766
      %v803 = vunpack.c.h.b16 %v766
      %v804 = vunpack.c.l.b16 %v767
      %v805 = vunpack.c.h.b16 %v767
      %v806 = vunpack.c.l.b16 %v768
      %v807 = vunpack.c.h.b16 %v768
      %v808 = vunpack.c.l.b16 %v769
      %v809 = vunpack.c.h.b16 %v769
      %v810 = vunpack.c.l.b16 %v770
      %v811 = vunpack.c.h.b16 %v770
      %v812 = vunpack.c.l.b16 %v771
      %v813 = vunpack.c.h.b16 %v771
      %v814 = vunpack.c.l.b16 %v772
      %v815 = vunpack.c.h.b16 %v772
      %v816 = vunpack.c.l.b16 %v773
      %v817 = vunpack.c.h.b16 %v773
      %v818 = vunpack.c.l.b16 %v774
      %v819 = vunpack.c.h.b16 %v774
      %v820 = vunpack.c.l.b16 %v775
      %v821 = vunpack.c.h.b16 %v775
      %v822 = vunpack.c.l.b16 %v776
      %v823 = vunpack.c.h.b16 %v776
      %v824 = vunpack.c.l.b16 %v777
      %v825 = vunpack.c.h.b16 %v777
      %v826 = vpack.c.b16 %v794, %v794
      %v827 = vpack.c.b16 %v795, %v795
      %v828 = vpack.c.b16 %v796, %v796
      %v829 = vpack.c.b16 %v797, %v797
      %v830 = vpack.c.b16 %v798, %v798
      %v831 = vpack.c.b16 %v799, %v799
      %v832 = vpack.c.b16 %v800, %v800
      %v833 = vpack.c.b16 %v801, %v801
      %v834 = vpack.c.b16 %v802, %v802
      %v835 = vpack.c.b16 %v803, %v803
      %v836 = vpack.c.b16 %v804, %v804
      %v837 = vpack.c.b16 %v805, %v805
      %v838 = vpack.c.b16 %v806, %v806
      %v839 = vpack.c.b16 %v807, %v807
      %v840 = vpack.c.b16 %v808, %v808
      %v841 = vpack.c.b16 %v809, %v809
      %v842 = vpack.c.b16 %v810, %v810
      %v843 = vpack.c.b16 %v811, %v811
      %v844 = vpack.c.b16 %v812, %v812
      %v845 = vpack.c.b16 %v813, %v813
      %v846 = vpack.c.b16 %v814, %v814
      %v847 = vpack.c.b16 %v815, %v815
      %v848 = vpack.c.b16 %v816, %v816
      %v849 = vpack.c.b16 %v817, %v817
      %v850 = vpack.c.b16 %v818, %v818
      %v851 = vpack.c.b16 %v819, %v819
      %v852 = vpack.c.b16 %v820, %v820
      %v853 = vpack.c.b16 %v821, %v821
      %v854 = vpack.c.b16 %v822, %v822
      %v855 = vpack.c.b16 %v823, %v823
      %v856 = vpack.c.b16 %v824, %v824
      %v857 = vpack.c.b16 %v825, %v825
      %890 = vst [vmem:[%s175] sm:$0xf] %v826
      %891 = vst [vmem:[%s175 + $0x4] sm:$0xf] %v827
      %892 = vst [vmem:[%s175 + $0x8] sm:$0xf] %v828
      %893 = vst [vmem:[%s175 + $0xc] sm:$0xf] %v829
      %894 = vst [vmem:[%s175 + $0x10] sm:$0xf] %v830
      %895 = vst [vmem:[%s175 + $0x14] sm:$0xf] %v831
      %896 = vst [vmem:[%s175 + $0x18] sm:$0xf] %v832
      %897 = vst [vmem:[%s175 + $0x1c] sm:$0xf] %v833
      %898 = vst [vmem:[%s175 + $0x20] sm:$0xf] %v834
      %899 = vst [vmem:[%s175 + $0x24] sm:$0xf] %v835
      %900 = vst [vmem:[%s175 + $0x28] sm:$0xf] %v836
      %901 = vst [vmem:[%s175 + $0x2c] sm:$0xf] %v837
      %902 = vst [vmem:[%s175 + $0x30] sm:$0xf] %v838
      %903 = vst [vmem:[%s175 + $0x34] sm:$0xf] %v839
      %904 = vst [vmem:[%s175 + $0x38] sm:$0xf] %v840
      %905 = vst [vmem:[%s175 + $0x3c] sm:$0xf] %v841
      %906 = vst [vmem:[%s175 + $0x40] sm:$0xf] %v842
      %907 = vst [vmem:[%s175 + $0x44] sm:$0xf] %v843
      %908 = vst [vmem:[%s175 + $0x48] sm:$0xf] %v844
      %909 = vst [vmem:[%s175 + $0x4c] sm:$0xf] %v845
      %910 = vst [vmem:[%s175 + $0x50] sm:$0xf] %v846
      %911 = vst [vmem:[%s175 + $0x54] sm:$0xf] %v847
      %912 = vst [vmem:[%s175 + $0x58] sm:$0xf] %v848
      %913 = vst [vmem:[%s175 + $0x5c] sm:$0xf] %v849
      %914 = vst [vmem:[%s175 + $0x60] sm:$0xf] %v850
      %915 = vst [vmem:[%s175 + $0x64] sm:$0xf] %v851
      %916 = vst [vmem:[%s175 + $0x68] sm:$0xf] %v852
      %917 = vst [vmem:[%s175 + $0x6c] sm:$0xf] %v853
      %918 = vst [vmem:[%s175 + $0x70] sm:$0xf] %v854
      %919 = vst [vmem:[%s175 + $0x74] sm:$0xf] %v855
      %920 = vst [vmem:[%s175 + $0x78] sm:$0xf] %v856
      %921 = vst [vmem:[%s175 + $0x7c] sm:$0xf] %v857
      %s922 = smul.u32 32, %s14
      %p923 = scmp.lt.s32.totalorder %s922, 63
      %s924 = scalar_select %p923, %s922, 63
      %s925 = smul.addr %s924, 4
      %s926 = scalar_lea.vmem %s3, %s925
      // Predicated region
      $region33: #{stage1_d_img_forward.5} parent=31 // pred_check
        %p927 = pneg %p100
      $region34: #{stage1_d_img_forward.5} parent=31 // pred_check_branch
        %929 = sbr.rel (%p927) target = $region36
      $region35: #{stage1_d_img_forward.5} parent=31 // pred_region
        %s930 = smul.u32 32, %s14
      $region36: #{stage1_d_img_forward.5} parent=31 // pred_fallthru
        _
    $region32: #{stage1_d_img_forward.5} parent=5 // pred_fallthru
      _
    %p931 = scmp.le.s32.totalorder 2, %s9
    // Predicated region
    $region37: #{stage1_d_img_forward.5} parent=5 // pred_check
      %p932 = pneg %p931
    $region38: #{stage1_d_img_forward.5} parent=5 // pred_check_branch
      %934 = sbr.rel (%p932) target = $region40
    $region39: #{stage1_d_img_forward.5} parent=5 // pred_region
      %s935 = ssub.s32 %s9, 2
      // Predicated region
      $region41: #{stage1_d_img_forward.5} parent=39 // pred_check
        %p936 = pneg %p106
      $region42: #{stage1_d_img_forward.5} parent=39 // pred_check_branch
        %938 = sbr.rel (%p936) target = $region44
      $region43: #{stage1_d_img_forward.5} parent=39 // pred_region
        %s939 = smul.u32 32, %s15
        %p940 = scmp.lt.s32.totalorder %s939, 63
        %s941 = scalar_select %p940, %s939, 63
        %s942 = smul.addr %s941, 4
        %s943 = scalar_lea.vmem %s3, %s942
      $region44: #{stage1_d_img_forward.5} parent=39 // pred_fallthru
        _
    $region40: #{stage1_d_img_forward.5} parent=5 // pred_fallthru
      _
  $region6: #{stage1_d_img_forward.5} parent=0 // loop_footer
    %s13 = sadd.s32 1, %s9
  $region7: #{stage1_d_img_forward.5} parent=0 // loop_footer_branch
    %8 = sbr.rel target = $region3
  $region8: #{stage1_d_img_forward.5} parent=0 // loop_exit
    _

// kernel: stage1_d_img_forward.6
$region0: #{stage1_d_img_forward.6}
  #allocation0 [shape = 'u32[]', space=smem, size = 0x4, offset = 0x4, fixed_abs, tag = 'smem constant byte address 0x4 - core index']
  #allocation1 [shape = 'u32[144,128]{1,0:T(1,128)}', space=vmem, size = 0x12000, scoped, tag = 'internal scratch']
  %s0 = inlined_call_operand.vmem [shape: bf16[128,512], index: 0, kind: input, shape index: {}]
  %s1 = inlined_call_operand.vmem [shape: bf16[512,128], index: 1, kind: input, shape index: {}]
  %s2 = inlined_call_operand.vmem [shape: f32[1,128], index: 2, kind: input, shape index: {}]
  %s3 = inlined_call_operand.vmem [shape: bf16[128,128], index: 3, kind: output, shape index: {}]
  %s4 = sld [smem:[#allocation0]]
  $region45: #{stage1_d_img_forward.6} parent=0
    _
  %s6 = ssub.s32 1, %s4
  %s7 = scalar_select 0, %s6, %s4
  loop: start=0, step=1, limit=4
  $region2: #{stage1_d_img_forward.6} parent=0 // loop_pre_header
    _
  $region3: #{stage1_d_img_forward.6} parent=0 // loop_header
    %s9 = sphi 0, %s13
    %p10 = scmp.ge.s32.totalorder %s9, 4
    %s19 = sphi 0, %s21
    %s22 = sphi 0, %s19
    %s23 = sphi 0, %s22
    %s39 = sphi 0, %s23
    %s43 = sphi 0, %s43
    %s45 = sphi 0, %s43
    %s46 = sphi 0, %s45
    %s60 = sphi 0, %s46
    %s64 = sphi 0, %s64
    %s66 = sphi 0, %s64
    %s67 = sphi 0, %s66
    %s81 = sphi 0, %s67
    %s87 = sphi 0, %s89
    %s90 = sphi 0, %s87
    %s91 = sphi 0, %s90
    %s107 = sphi 0, %s91
  $region4: #{stage1_d_img_forward.6} parent=0 // loop_header_branch
    %12 = sbr.rel (%p10) target = $region8
  $region5: #{stage1_d_img_forward.6} parent=0 // loop_body
    %s14 = ssub.s32 %s9, 1
    %s15 = ssub.s32 %s9, 2
    %s16 = sadd.s32 %s9, 1
    %s17 = ssub.s32 %s9, %s16
    %p18 = scmp.eq.s32.totalorder %s17, 0
    %s20 = sadd.s32 %s19, 1
    %s21 = scalar_select %p18, %s19, %s20
    %p24 = pneg %p18
    %p25 = scmp.eq.s32.totalorder %s9, 1
    %p26 = por %p24, %p25
    %p27 = scmp.ne.s32.totalorder %s19, %s22
    %p28 = scmp.eq.s32.totalorder %s9, 0
    %p29 = por %p27, %p28
    %p30 = scmp.ne.s32.totalorder %s19, %s22
    %p31 = scmp.eq.s32.totalorder %s14, 1
    %p32 = por %p30, %p31
    %p33 = scmp.ne.s32.totalorder %s22, %s23
    %p34 = scmp.eq.s32.totalorder %s14, 0
    %p35 = por %p33, %p34
    %p36 = scmp.ne.s32.totalorder %s22, %s23
    %p37 = scmp.eq.s32.totalorder %s15, 1
    %p38 = por %p36, %p37
    %p40 = scmp.ne.s32.totalorder %s23, %s39
    %p41 = scmp.eq.s32.totalorder %s15, 0
    %p42 = por %p40, %p41
    %s44 = sadd.s32 %s43, 1
    %p47 = scmp.eq.s32.totalorder %s9, 1
    %p48 = scmp.ne.s32.totalorder %s43, %s45
    %p49 = scmp.eq.s32.totalorder %s9, 0
    %p50 = por %p48, %p49
    %p51 = scmp.ne.s32.totalorder %s43, %s45
    %p52 = scmp.eq.s32.totalorder %s14, 1
    %p53 = por %p51, %p52
    %p54 = scmp.ne.s32.totalorder %s45, %s46
    %p55 = scmp.eq.s32.totalorder %s14, 0
    %p56 = por %p54, %p55
    %p57 = scmp.ne.s32.totalorder %s45, %s46
    %p58 = scmp.eq.s32.totalorder %s15, 1
    %p59 = por %p57, %p58
    %p61 = scmp.ne.s32.totalorder %s46, %s60
    %p62 = scmp.eq.s32.totalorder %s15, 0
    %p63 = por %p61, %p62
    %s65 = sadd.s32 %s64, 1
    %p68 = scmp.eq.s32.totalorder %s9, 1
    %p69 = scmp.ne.s32.totalorder %s64, %s66
    %p70 = scmp.eq.s32.totalorder %s9, 0
    %p71 = por %p69, %p70
    %p72 = scmp.ne.s32.totalorder %s64, %s66
    %p73 = scmp.eq.s32.totalorder %s14, 1
    %p74 = por %p72, %p73
    %p75 = scmp.ne.s32.totalorder %s66, %s67
    %p76 = scmp.eq.s32.totalorder %s14, 0
    %p77 = por %p75, %p76
    %p78 = scmp.ne.s32.totalorder %s66, %s67
    %p79 = scmp.eq.s32.totalorder %s15, 1
    %p80 = por %p78, %p79
    %p82 = scmp.ne.s32.totalorder %s67, %s81
    %p83 = scmp.eq.s32.totalorder %s15, 0
    %p84 = por %p82, %p83
    %s85 = ssub.s32 %s9, %s16
    %p86 = scmp.eq.s32.totalorder %s85, 0
    %s88 = sadd.s32 %s87, 1
    %s89 = scalar_select %p86, %s87, %s88
    %p92 = pneg %p86
    %p93 = scmp.eq.s32.totalorder %s9, 1
    %p94 = por %p92, %p93
    %p95 = scmp.ne.s32.totalorder %s87, %s90
    %p96 = scmp.eq.s32.totalorder %s9, 0
    %p97 = por %p95, %p96
    %p98 = scmp.ne.s32.totalorder %s87, %s90
    %p99 = scmp.eq.s32.totalorder %s14, 1
    %p100 = por %p98, %p99
    %p101 = scmp.ne.s32.totalorder %s90, %s91
    %p102 = scmp.eq.s32.totalorder %s14, 0
    %p103 = por %p101, %p102
    %p104 = scmp.ne.s32.totalorder %s90, %s91
    %p105 = scmp.eq.s32.totalorder %s15, 1
    %p106 = por %p104, %p105
    %p108 = scmp.ne.s32.totalorder %s91, %s107
    %p109 = scmp.eq.s32.totalorder %s15, 0
    %p110 = por %p108, %p109
    %p111 = scmp.le.s32.totalorder 1, %s9
    %p112 = scmp.lt.s32.totalorder %s9, 3
    %p113 = pnand %p111, %p112
    %p114 = pneg %p113
    // Predicated region
    $region9: #{stage1_d_img_forward.6} parent=5 // pred_check
      _
    $region10: #{stage1_d_img_forward.6} parent=5 // pred_check_branch
      %116 = sbr.rel (%p113) target = $region12
    $region11: #{stage1_d_img_forward.6} parent=5 // pred_region
      %s117 = ssub.s32 %s9, 1
      // Predicated region
      $region13: #{stage1_d_img_forward.6} parent=11 // pred_check
        %p118 = pneg %p56
      $region14: #{stage1_d_img_forward.6} parent=11 // pred_check_branch
        %120 = sbr.rel (%p118) target = $region16
      $region15: #{stage1_d_img_forward.6} parent=11 // pred_region
        _
      $region16: #{stage1_d_img_forward.6} parent=11 // pred_fallthru
        _
      // Predicated region
      $region17: #{stage1_d_img_forward.6} parent=11 // pred_check
        %p121 = pneg %p77
      $region18: #{stage1_d_img_forward.6} parent=11 // pred_check_branch
        %123 = sbr.rel (%p121) target = $region20
      $region19: #{stage1_d_img_forward.6} parent=11 // pred_region
        _
      $region20: #{stage1_d_img_forward.6} parent=11 // pred_fallthru
        _
    $region12: #{stage1_d_img_forward.6} parent=5 // pred_fallthru
      _
    %p124 = scmp.lt.s32.totalorder %s9, 2
    // Predicated region
    $region21: #{stage1_d_img_forward.6} parent=5 // pred_check
      %p125 = pneg %p124
    $region22: #{stage1_d_img_forward.6} parent=5 // pred_check_branch
      %127 = sbr.rel (%p125) target = $region24
    $region23: #{stage1_d_img_forward.6} parent=5 // pred_region
      // Predicated region
      $region25: #{stage1_d_img_forward.6} parent=23 // pred_check
        %p128 = pneg %p29
      $region26: #{stage1_d_img_forward.6} parent=23 // pred_check_branch
        %130 = sbr.rel (%p128) target = $region28
      $region27: #{stage1_d_img_forward.6} parent=23 // pred_region
        %s131 = smul.u32 8, %s9
        %p132 = scmp.lt.s32.totalorder %s131, 15
        %s133 = scalar_select %p132, %s131, 15
        %s134 = smul.addr %s133, 4
        %s135 = smul.addr %s134, 4
        %s136 = scalar_lea.vmem %s0, %s135
        %s137 = smul.u32 8, %s9
      $region28: #{stage1_d_img_forward.6} parent=23 // pred_fallthru
        _
    $region24: #{stage1_d_img_forward.6} parent=5 // pred_fallthru
      _
    %p138 = scmp.le.s32.totalorder 1, %s9
    %p139 = scmp.lt.s32.totalorder %s9, 3
    %p140 = pnand %p138, %p139
    %p141 = pneg %p140
    // Predicated region
    $region29: #{stage1_d_img_forward.6} parent=5 // pred_check
      _
    $region30: #{stage1_d_img_forward.6} parent=5 // pred_check_branch
      %143 = sbr.rel (%p140) target = $region32
    $region31: #{stage1_d_img_forward.6} parent=5 // pred_region
      %s144 = ssub.s32 %s9, 1
      %s145 = smul.u32 8, %s14
      %p146 = scmp.lt.s32.totalorder %s145, 15
      %s147 = scalar_select %p146, %s145, 15
      %s148 = smul.addr %s147, 4
      %s149 = smul.addr %s148, 4
      %s150 = scalar_lea.vmem %s0, %s149
      %p151 = pneg %p35
      %p152 = pneg %p32
      %p153 = pneg %p56
      %p154 = pneg %p53
      %p155 = pneg %p77
      %p156 = pneg %p74
      %p157 = pneg %p103
      %p158 = pneg %p100
      %s159 = smul.u32 8, %s14
      %p160 = scmp.lt.s32.totalorder %s159, 15
      %s161 = scalar_select %p160, %s159, 15
      %s162 = smul.addr %s161, 4
      %s163 = scalar_lea.vmem %s3, %s162
      %s164 = smul.u32 8, %s14
      %p165 = scmp.lt.s32.totalorder %s164, 15
      %s166 = scalar_select %p165, %s164, 15
      %s167 = smul.addr %s166, 4
      %s168 = smul.addr %s167, 4
      %s169 = scalar_lea.vmem %s0, %s168
      %s170 = smul.u32 8, %s14
      %s171 = smul.u32 8, %s14
      %p172 = scmp.lt.s32.totalorder %s171, 15
      %s173 = scalar_select %p172, %s171, 15
      %s174 = smul.addr %s173, 4
      %s175 = scalar_lea.vmem %s3, %s174
      %s176 = smul.u32 8, %s14
      %v178 = vld [vmem:[%s169] sm:$0xff]
      %v179 = vld [vmem:[%s169 + $0x8] sm:$0xff]
      %v180 = vld [vmem:[%s169 + $0x10] sm:$0xff]
      %v181 = vld [vmem:[%s169 + $0x18] sm:$0xff]
      %v182 = vld [vmem:[%s169 + $0x20] sm:$0xff]
      %v183 = vld [vmem:[%s169 + $0x28] sm:$0xff]
      %v184 = vld [vmem:[%s169 + $0x30] sm:$0xff]
      %v185 = vld [vmem:[%s169 + $0x38] sm:$0xff]
      %v186 = vld [vmem:[%s169 + $0x40] sm:$0xff]
      %v187 = vld [vmem:[%s169 + $0x48] sm:$0xff]
      %v188 = vld [vmem:[%s169 + $0x50] sm:$0xff]
      %v189 = vld [vmem:[%s169 + $0x58] sm:$0xff]
      %v190 = vld [vmem:[%s169 + $0x60] sm:$0xff]
      %v191 = vld [vmem:[%s169 + $0x68] sm:$0xff]
      %v192 = vld [vmem:[%s169 + $0x70] sm:$0xff]
      %v193 = vld [vmem:[%s169 + $0x78] sm:$0xff]
      %v194 = vld [vmem:[%s1] sm:$0xf]
      %v195 = vld [vmem:[%s1 + $0x4] sm:$0xf]
      %v196 = vld [vmem:[%s1 + $0x8] sm:$0xf]
      %v197 = vld [vmem:[%s1 + $0xc] sm:$0xf]
      %v198 = vld [vmem:[%s1 + $0x10] sm:$0xf]
      %v199 = vld [vmem:[%s1 + $0x14] sm:$0xf]
      %v200 = vld [vmem:[%s1 + $0x18] sm:$0xf]
      %v201 = vld [vmem:[%s1 + $0x1c] sm:$0xf]
      %v202 = vld [vmem:[%s1 + $0x20] sm:$0xf]
      %v203 = vld [vmem:[%s1 + $0x24] sm:$0xf]
      %v204 = vld [vmem:[%s1 + $0x28] sm:$0xf]
      %v205 = vld [vmem:[%s1 + $0x2c] sm:$0xf]
      %v206 = vld [vmem:[%s1 + $0x30] sm:$0xf]
      %v207 = vld [vmem:[%s1 + $0x34] sm:$0xf]
      %v208 = vld [vmem:[%s1 + $0x38] sm:$0xf]
      %v209 = vld [vmem:[%s1 + $0x3c] sm:$0xf]
      %v210 = vld [vmem:[%s1 + $0x40] sm:$0xf]
      %v211 = vld [vmem:[%s1 + $0x44] sm:$0xf]
      %v212 = vld [vmem:[%s1 + $0x48] sm:$0xf]
      %v213 = vld [vmem:[%s1 + $0x4c] sm:$0xf]
      %v214 = vld [vmem:[%s1 + $0x50] sm:$0xf]
      %v215 = vld [vmem:[%s1 + $0x54] sm:$0xf]
      %v216 = vld [vmem:[%s1 + $0x58] sm:$0xf]
      %v217 = vld [vmem:[%s1 + $0x5c] sm:$0xf]
      %v218 = vld [vmem:[%s1 + $0x60] sm:$0xf]
      %v219 = vld [vmem:[%s1 + $0x64] sm:$0xf]
      %v220 = vld [vmem:[%s1 + $0x68] sm:$0xf]
      %v221 = vld [vmem:[%s1 + $0x6c] sm:$0xf]
      %v222 = vld [vmem:[%s1 + $0x70] sm:$0xf]
      %v223 = vld [vmem:[%s1 + $0x74] sm:$0xf]
      %v224 = vld [vmem:[%s1 + $0x78] sm:$0xf]
      %v225 = vld [vmem:[%s1 + $0x7c] sm:$0xf]
      %v226 = vld [vmem:[%s1 + $0x80] sm:$0xf]
      %v227 = vld [vmem:[%s1 + $0x84] sm:$0xf]
      %v228 = vld [vmem:[%s1 + $0x88] sm:$0xf]
      %v229 = vld [vmem:[%s1 + $0x8c] sm:$0xf]
      %v230 = vld [vmem:[%s1 + $0x90] sm:$0xf]
      %v231 = vld [vmem:[%s1 + $0x94] sm:$0xf]
      %v232 = vld [vmem:[%s1 + $0x98] sm:$0xf]
      %v233 = vld [vmem:[%s1 + $0x9c] sm:$0xf]
      %v234 = vld [vmem:[%s1 + $0xa0] sm:$0xf]
      %v235 = vld [vmem:[%s1 + $0xa4] sm:$0xf]
      %v236 = vld [vmem:[%s1 + $0xa8] sm:$0xf]
      %v237 = vld [vmem:[%s1 + $0xac] sm:$0xf]
      %v238 = vld [vmem:[%s1 + $0xb0] sm:$0xf]
      %v239 = vld [vmem:[%s1 + $0xb4] sm:$0xf]
      %v240 = vld [vmem:[%s1 + $0xb8] sm:$0xf]
      %v241 = vld [vmem:[%s1 + $0xbc] sm:$0xf]
      %v242 = vld [vmem:[%s1 + $0xc0] sm:$0xf]
      %v243 = vld [vmem:[%s1 + $0xc4] sm:$0xf]
      %v244 = vld [vmem:[%s1 + $0xc8] sm:$0xf]
      %v245 = vld [vmem:[%s1 + $0xcc] sm:$0xf]
      %v246 = vld [vmem:[%s1 + $0xd0] sm:$0xf]
      %v247 = vld [vmem:[%s1 + $0xd4] sm:$0xf]
      %v248 = vld [vmem:[%s1 + $0xd8] sm:$0xf]
      %v249 = vld [vmem:[%s1 + $0xdc] sm:$0xf]
      %v250 = vld [vmem:[%s1 + $0xe0] sm:$0xf]
      %v251 = vld [vmem:[%s1 + $0xe4] sm:$0xf]
      %v252 = vld [vmem:[%s1 + $0xe8] sm:$0xf]
      %v253 = vld [vmem:[%s1 + $0xec] sm:$0xf]
      %v254 = vld [vmem:[%s1 + $0xf0] sm:$0xf]
      %v255 = vld [vmem:[%s1 + $0xf4] sm:$0xf]
      %v256 = vld [vmem:[%s1 + $0xf8] sm:$0xf]
      %v257 = vld [vmem:[%s1 + $0xfc] sm:$0xf]
      %v258 = vld [vmem:[%s2] sm:$0x1]
      %v260 = vlaneseq
      %v261 = vshrl.u32 %v260, 7
      %v262 = vsub.s32 0, %v261
      %v263 = vrot.slane %v258, %v262
      %v281 = vunpack.c.l.b16 %v178
      %v282 = vunpack.c.h.b16 %v178
      %v283 = vunpack.c.l.b16 %v179
      %v284 = vunpack.c.h.b16 %v179
      %v285 = vunpack.c.l.b16 %v180
      %v286 = vunpack.c.h.b16 %v180
      %v287 = vunpack.c.l.b16 %v181
      %v288 = vunpack.c.h.b16 %v181
      %v289 = vunpack.c.l.b16 %v182
      %v290 = vunpack.c.h.b16 %v182
      %v291 = vunpack.c.l.b16 %v183
      %v292 = vunpack.c.h.b16 %v183
      %v293 = vunpack.c.l.b16 %v184
      %v294 = vunpack.c.h.b16 %v184
      %v295 = vunpack.c.l.b16 %v185
      %v296 = vunpack.c.h.b16 %v185
      %v297 = vunpack.c.l.b16 %v186
      %v298 = vunpack.c.h.b16 %v186
      %v299 = vunpack.c.l.b16 %v187
      %v300 = vunpack.c.h.b16 %v187
      %v301 = vunpack.c.l.b16 %v188
      %v302 = vunpack.c.h.b16 %v188
      %v303 = vunpack.c.l.b16 %v189
      %v304 = vunpack.c.h.b16 %v189
      %v305 = vunpack.c.l.b16 %v190
      %v306 = vunpack.c.h.b16 %v190
      %v307 = vunpack.c.l.b16 %v191
      %v308 = vunpack.c.h.b16 %v191
      %v309 = vunpack.c.l.b16 %v192
      %v310 = vunpack.c.h.b16 %v192
      %v311 = vunpack.c.l.b16 %v193
      %v312 = vunpack.c.h.b16 %v193
      %v313 = vpack.c.b16 %v285, %v281
      %v314 = vpack.c.b16 %v286, %v282
      %v315 = vpack.c.b16 %v287, %v283
      %v316 = vpack.c.b16 %v288, %v284
      %v317 = vpack.c.b16 %v293, %v289
      %v318 = vpack.c.b16 %v294, %v290
      %v319 = vpack.c.b16 %v295, %v291
      %v320 = vpack.c.b16 %v296, %v292
      %v321 = vpack.c.b16 %v301, %v297
      %v322 = vpack.c.b16 %v302, %v298
      %v323 = vpack.c.b16 %v303, %v299
      %v324 = vpack.c.b16 %v304, %v300
      %v325 = vpack.c.b16 %v309, %v305
      %v326 = vpack.c.b16 %v310, %v306
      %v327 = vpack.c.b16 %v311, %v307
      %v328 = vpack.c.b16 %v312, %v308
      %v409 = vunpack.c.l.b16 %v194
      %v410 = vunpack.c.l.b16 %v195
      %v411 = vunpack.c.l.b16 %v196
      %v412 = vunpack.c.l.b16 %v197
      %v413 = vunpack.c.l.b16 %v198
      %v414 = vunpack.c.l.b16 %v199
      %v415 = vunpack.c.l.b16 %v200
      %v416 = vunpack.c.l.b16 %v201
      %v417 = vunpack.c.l.b16 %v202
      %v418 = vunpack.c.l.b16 %v203
      %v419 = vunpack.c.l.b16 %v204
      %v420 = vunpack.c.l.b16 %v205
      %v421 = vunpack.c.l.b16 %v206
      %v422 = vunpack.c.l.b16 %v207
      %v423 = vunpack.c.l.b16 %v208
      %v424 = vunpack.c.l.b16 %v209
      %v425 = vunpack.c.l.b16 %v210
      %v426 = vunpack.c.l.b16 %v211
      %v427 = vunpack.c.l.b16 %v212
      %v428 = vunpack.c.l.b16 %v213
      %v429 = vunpack.c.l.b16 %v214
      %v430 = vunpack.c.l.b16 %v215
      %v431 = vunpack.c.l.b16 %v216
      %v432 = vunpack.c.l.b16 %v217
      %v433 = vunpack.c.l.b16 %v218
      %v434 = vunpack.c.l.b16 %v219
      %v435 = vunpack.c.l.b16 %v220
      %v436 = vunpack.c.l.b16 %v221
      %v437 = vunpack.c.l.b16 %v222
      %v438 = vunpack.c.l.b16 %v223
      %v439 = vunpack.c.l.b16 %v224
      %v440 = vunpack.c.l.b16 %v225
      %v441 = vunpack.c.l.b16 %v226
      %v442 = vunpack.c.l.b16 %v227
      %v443 = vunpack.c.l.b16 %v228
      %v444 = vunpack.c.l.b16 %v229
      %v445 = vunpack.c.l.b16 %v230
      %v446 = vunpack.c.l.b16 %v231
      %v447 = vunpack.c.l.b16 %v232
      %v448 = vunpack.c.l.b16 %v233
      %v449 = vunpack.c.l.b16 %v234
      %v450 = vunpack.c.l.b16 %v235
      %v451 = vunpack.c.l.b16 %v236
      %v452 = vunpack.c.l.b16 %v237
      %v453 = vunpack.c.l.b16 %v238
      %v454 = vunpack.c.l.b16 %v239
      %v455 = vunpack.c.l.b16 %v240
      %v456 = vunpack.c.l.b16 %v241
      %v457 = vunpack.c.l.b16 %v242
      %v458 = vunpack.c.l.b16 %v243
      %v459 = vunpack.c.l.b16 %v244
      %v460 = vunpack.c.l.b16 %v245
      %v461 = vunpack.c.l.b16 %v246
      %v462 = vunpack.c.l.b16 %v247
      %v463 = vunpack.c.l.b16 %v248
      %v464 = vunpack.c.l.b16 %v249
      %v465 = vunpack.c.l.b16 %v250
      %v466 = vunpack.c.l.b16 %v251
      %v467 = vunpack.c.l.b16 %v252
      %v468 = vunpack.c.l.b16 %v253
      %v469 = vunpack.c.l.b16 %v254
      %v470 = vunpack.c.l.b16 %v255
      %v471 = vunpack.c.l.b16 %v256
      %v472 = vunpack.c.l.b16 %v257
      %v473 = vpack.c.b16 %v410, %v409
      %v474 = vpack.c.b16 %v412, %v411
      %v475 = vpack.c.b16 %v414, %v413
      %v476 = vpack.c.b16 %v416, %v415
      %v477 = vpack.c.b16 %v418, %v417
      %v478 = vpack.c.b16 %v420, %v419
      %v479 = vpack.c.b16 %v422, %v421
      %v480 = vpack.c.b16 %v424, %v423
      %v481 = vpack.c.b16 %v426, %v425
      %v482 = vpack.c.b16 %v428, %v427
      %v483 = vpack.c.b16 %v430, %v429
      %v484 = vpack.c.b16 %v432, %v431
      %v485 = vpack.c.b16 %v434, %v433
      %v486 = vpack.c.b16 %v436, %v435
      %v487 = vpack.c.b16 %v438, %v437
      %v488 = vpack.c.b16 %v440, %v439
      %v489 = vpack.c.b16 %v442, %v441
      %v490 = vpack.c.b16 %v444, %v443
      %v491 = vpack.c.b16 %v446, %v445
      %v492 = vpack.c.b16 %v448, %v447
      %v493 = vpack.c.b16 %v450, %v449
      %v494 = vpack.c.b16 %v452, %v451
      %v495 = vpack.c.b16 %v454, %v453
      %v496 = vpack.c.b16 %v456, %v455
      %v497 = vpack.c.b16 %v458, %v457
      %v498 = vpack.c.b16 %v460, %v459
      %v499 = vpack.c.b16 %v462, %v461
      %v500 = vpack.c.b16 %v464, %v463
      %v501 = vpack.c.b16 %v466, %v465
      %v502 = vpack.c.b16 %v468, %v467
      %v503 = vpack.c.b16 %v470, %v469
      %v504 = vpack.c.b16 %v472, %v471
      %537 = vmatprep.subr.bf16.mxu0 0
      %538 = vmatpush1.bf16.msra.mxu0 %v473
      %539 = vmatprep.subr.bf16.mxu0 0
      %540 = vmatpush1.bf16.msra.mxu0 %v474
      %541 = vmatprep.subr.bf16.mxu0 0
      %542 = vmatpush1.bf16.msra.mxu0 %v475
      %543 = vmatprep.subr.bf16.mxu0 0
      %544 = vmatpush1.bf16.msra.mxu0 %v476
      %545 = vmatprep.subr.bf16.mxu0 0
      %546 = vmatpush1.bf16.msra.mxu0 %v477
      %547 = vmatprep.subr.bf16.mxu0 0
      %548 = vmatpush1.bf16.msra.mxu0 %v478
      %549 = vmatprep.subr.bf16.mxu0 0
      %550 = vmatpush1.bf16.msra.mxu0 %v479
      %551 = vmatprep.subr.bf16.mxu0 0
      %552 = vmatpush1.bf16.msra.mxu0 %v480
      %553 = vmatprep.subr.bf16.mxu0 0
      %554 = vmatpush1.bf16.msra.mxu0 %v481
      %555 = vmatprep.subr.bf16.mxu0 0
      %556 = vmatpush1.bf16.msra.mxu0 %v482
      %557 = vmatprep.subr.bf16.mxu0 0
      %558 = vmatpush1.bf16.msra.mxu0 %v483
      %559 = vmatprep.subr.bf16.mxu0 0
      %560 = vmatpush1.bf16.msra.mxu0 %v484
      %561 = vmatprep.subr.bf16.mxu0 0
      %562 = vmatpush1.bf16.msra.mxu0 %v485
      %563 = vmatprep.subr.bf16.mxu0 0
      %564 = vmatpush1.bf16.msra.mxu0 %v486
      %565 = vmatprep.subr.bf16.mxu0 0
      %566 = vmatpush1.bf16.msra.mxu0 %v487
      %567 = vmatprep.subr.bf16.mxu0 0
      %568 = vmatpush1.bf16.msra.mxu0 %v488
      %569 = vmatprep.mubr.bf16.mxu0 %v314
      %570 = vmatmul.mubr.bf16.gmra.mrb[0].mxu0 %v313
      %v571 = vpop.f32.mrb[0].mxu0
      %v572 = vadd.f32 %v263, %v571
      %v573 = vpop.f32.mrb[0].mxu0
      %v574 = vpop.f32.mrb[0].mxu0
      %v575 = vadd.f32 %v263, %v574
      %v576 = vpop.f32.mrb[0].mxu0
      %577 = vmatprep.mubr.bf16.mxu0 %v318
      %578 = vmatmul.mubr.bf16.gmra.mrb[0].mxu0 %v317
      %v579 = vpop.f32.mrb[0].mxu0
      %v580 = vadd.f32 %v263, %v579
      %v581 = vpop.f32.mrb[0].mxu0
      %v582 = vpop.f32.mrb[0].mxu0
      %v583 = vadd.f32 %v263, %v582
      %v584 = vpop.f32.mrb[0].mxu0
      %585 = vmatprep.mubr.bf16.mxu0 %v322
      %586 = vmatmul.mubr.bf16.gmra.mrb[0].mxu0 %v321
      %v587 = vpop.f32.mrb[0].mxu0
      %v588 = vadd.f32 %v263, %v587
      %v589 = vpop.f32.mrb[0].mxu0
      %v590 = vpop.f32.mrb[0].mxu0
      %v591 = vadd.f32 %v263, %v590
      %v592 = vpop.f32.mrb[0].mxu0
      %593 = vmatprep.mubr.bf16.mxu0 %v326
      %594 = vmatmul.mubr.bf16.gmra.mrb[0].mxu0 %v325
      %v595 = vpop.f32.mrb[0].mxu0
      %v596 = vadd.f32 %v263, %v595
      %v597 = vpop.f32.mrb[0].mxu0
      %v598 = vpop.f32.mrb[0].mxu0
      %v599 = vadd.f32 %v263, %v598
      %v600 = vpop.f32.mrb[0].mxu0
      %601 = vdwg.mxu0
      %602 = vmatprep.subr.bf16.mxu0 0
      %603 = vmatpush1.bf16.msra.mxu0 %v489
      %604 = vmatprep.subr.bf16.mxu0 0
      %605 = vmatpush1.bf16.msra.mxu0 %v490
      %606 = vmatprep.subr.bf16.mxu0 0
      %607 = vmatpush1.bf16.msra.mxu0 %v491
      %608 = vmatprep.subr.bf16.mxu0 0
      %609 = vmatpush1.bf16.msra.mxu0 %v492
      %610 = vmatprep.subr.bf16.mxu0 0
      %611 = vmatpush1.bf16.msra.mxu0 %v493
      %612 = vmatprep.subr.bf16.mxu0 0
      %613 = vmatpush1.bf16.msra.mxu0 %v494
      %614 = vmatprep.subr.bf16.mxu0 0
      %615 = vmatpush1.bf16.msra.mxu0 %v495
      %616 = vmatprep.subr.bf16.mxu0 0
      %617 = vmatpush1.bf16.msra.mxu0 %v496
      %618 = vmatprep.subr.bf16.mxu0 0
      %619 = vmatpush1.bf16.msra.mxu0 %v497
      %620 = vmatprep.subr.bf16.mxu0 0
      %621 = vmatpush1.bf16.msra.mxu0 %v498
      %622 = vmatprep.subr.bf16.mxu0 0
      %623 = vmatpush1.bf16.msra.mxu0 %v499
      %624 = vmatprep.subr.bf16.mxu0 0
      %625 = vmatpush1.bf16.msra.mxu0 %v500
      %626 = vmatprep.subr.bf16.mxu0 0
      %627 = vmatpush1.bf16.msra.mxu0 %v501
      %628 = vmatprep.subr.bf16.mxu0 0
      %629 = vmatpush1.bf16.msra.mxu0 %v502
      %630 = vmatprep.subr.bf16.mxu0 0
      %631 = vmatpush1.bf16.msra.mxu0 %v503
      %632 = vmatprep.subr.bf16.mxu0 0
      %633 = vmatpush1.bf16.msra.mxu0 %v504
      %634 = vmatprep.mubr.bf16.mxu0 %v316
      %635 = vmatmul.mubr.bf16.gmra.mrb[0].mxu0 %v315
      %v636 = vpop.f32.mrb[0].mxu0
      %v637 = vadd.f32 %v572, %v636
      %v638 = vpop.f32.mrb[0].mxu0
      %v639 = vpop.f32.mrb[0].mxu0
      %v640 = vadd.f32 %v575, %v639
      %v641 = vpop.f32.mrb[0].mxu0
      %642 = vmatprep.mubr.bf16.mxu0 %v320
      %643 = vmatmul.mubr.bf16.gmra.mrb[0].mxu0 %v319
      %v644 = vpop.f32.mrb[0].mxu0
      %v645 = vadd.f32 %v580, %v644
      %v646 = vpop.f32.mrb[0].mxu0
      %v647 = vpop.f32.mrb[0].mxu0
      %v648 = vadd.f32 %v583, %v647
      %v649 = vpop.f32.mrb[0].mxu0
      %650 = vmatprep.mubr.bf16.mxu0 %v324
      %651 = vmatmul.mubr.bf16.gmra.mrb[0].mxu0 %v323
      %v652 = vpop.f32.mrb[0].mxu0
      %v653 = vadd.f32 %v588, %v652
      %v654 = vpop.f32.mrb[0].mxu0
      %v655 = vpop.f32.mrb[0].mxu0
      %v656 = vadd.f32 %v591, %v655
      %v657 = vpop.f32.mrb[0].mxu0
      %658 = vmatprep.mubr.bf16.mxu0 %v328
      %659 = vmatmul.mubr.bf16.gmra.mrb[0].mxu0 %v327
      %v660 = vpop.f32.mrb[0].mxu0
      %v661 = vadd.f32 %v596, %v660
      %v662 = vpop.f32.mrb[0].mxu0
      %v663 = vpop.f32.mrb[0].mxu0
      %v664 = vadd.f32 %v599, %v663
      %v665 = vpop.f32.mrb[0].mxu0
      %666 = vdwg.mxu0
      %vm667 = vcmp.gt.f32.partialorder %v637, 0.0
      %vm668 = vcmp.gt.f32.partialorder %v640, 0.0
      %vm669 = vcmp.gt.f32.partialorder %v645, 0.0
      %vm670 = vcmp.gt.f32.partialorder %v648, 0.0
      %vm671 = vcmp.gt.f32.partialorder %v653, 0.0
      %vm672 = vcmp.gt.f32.partialorder %v656, 0.0
      %vm673 = vcmp.gt.f32.partialorder %v661, 0.0
      %vm674 = vcmp.gt.f32.partialorder %v664, 0.0
      %v675 = vmul.f32 %v637, 0.2
      %v676 = vmul.f32 %v640, 0.2
      %v677 = vmul.f32 %v645, 0.2
      %v678 = vmul.f32 %v648, 0.2
      %v679 = vmul.f32 %v653, 0.2
      %v680 = vmul.f32 %v656, 0.2
      %v681 = vmul.f32 %v661, 0.2
      %v682 = vmul.f32 %v664, 0.2
      %v683 = vsel %vm667, %v637, %v675
      %v684 = vsel %vm668, %v640, %v676
      %v685 = vsel %vm669, %v645, %v677
      %v686 = vsel %vm670, %v648, %v678
      %v687 = vsel %vm671, %v653, %v679
      %v688 = vsel %vm672, %v656, %v680
      %v689 = vsel %vm673, %v661, %v681
      %v690 = vsel %vm674, %v664, %v682
      %v691 = vpack.c.bf16 %v684, %v683
      %v692 = vpack.c.bf16 %v686, %v685
      %v693 = vpack.c.bf16 %v688, %v687
      %v694 = vpack.c.bf16 %v690, %v689
      %v699 = vunpack.c.l.b16 %v691
      %v700 = vunpack.c.h.b16 %v691
      %v701 = vunpack.c.l.b16 %v692
      %v702 = vunpack.c.h.b16 %v692
      %v703 = vunpack.c.l.b16 %v693
      %v704 = vunpack.c.h.b16 %v693
      %v705 = vunpack.c.l.b16 %v694
      %v706 = vunpack.c.h.b16 %v694
      %v707 = vpack.c.b16 %v699, %v699
      %v708 = vpack.c.b16 %v700, %v700
      %v709 = vpack.c.b16 %v701, %v701
      %v710 = vpack.c.b16 %v702, %v702
      %v711 = vpack.c.b16 %v703, %v703
      %v712 = vpack.c.b16 %v704, %v704
      %v713 = vpack.c.b16 %v705, %v705
      %v714 = vpack.c.b16 %v706, %v706
      %723 = vst [vmem:[%s175] sm:$0xf] %v707
      %724 = vst [vmem:[%s175 + $0x4] sm:$0xf] %v708
      %725 = vst [vmem:[%s175 + $0x8] sm:$0xf] %v709
      %726 = vst [vmem:[%s175 + $0xc] sm:$0xf] %v710
      %727 = vst [vmem:[%s175 + $0x10] sm:$0xf] %v711
      %728 = vst [vmem:[%s175 + $0x14] sm:$0xf] %v712
      %729 = vst [vmem:[%s175 + $0x18] sm:$0xf] %v713
      %730 = vst [vmem:[%s175 + $0x1c] sm:$0xf] %v714
      %s731 = smul.u32 8, %s14
      %p732 = scmp.lt.s32.totalorder %s731, 15
      %s733 = scalar_select %p732, %s731, 15
      %s734 = smul.addr %s733, 4
      %s735 = scalar_lea.vmem %s3, %s734
      // Predicated region
      $region33: #{stage1_d_img_forward.6} parent=31 // pred_check
        %p736 = pneg %p100
      $region34: #{stage1_d_img_forward.6} parent=31 // pred_check_branch
        %738 = sbr.rel (%p736) target = $region36
      $region35: #{stage1_d_img_forward.6} parent=31 // pred_region
        %s739 = smul.u32 8, %s14
      $region36: #{stage1_d_img_forward.6} parent=31 // pred_fallthru
        _
    $region32: #{stage1_d_img_forward.6} parent=5 // pred_fallthru
      _
    %p740 = scmp.le.s32.totalorder 2, %s9
    // Predicated region
    $region37: #{stage1_d_img_forward.6} parent=5 // pred_check
      %p741 = pneg %p740
    $region38: #{stage1_d_img_forward.6} parent=5 // pred_check_branch
      %743 = sbr.rel (%p741) target = $region40
    $region39: #{stage1_d_img_forward.6} parent=5 // pred_region
      %s744 = ssub.s32 %s9, 2
      // Predicated region
      $region41: #{stage1_d_img_forward.6} parent=39 // pred_check
        %p745 = pneg %p106
      $region42: #{stage1_d_img_forward.6} parent=39 // pred_check_branch
        %747 = sbr.rel (%p745) target = $region44
      $region43: #{stage1_d_img_forward.6} parent=39 // pred_region
        %s748 = smul.u32 8, %s15
        %p749 = scmp.lt.s32.totalorder %s748, 15
        %s750 = scalar_select %p749, %s748, 15
        %s751 = smul.addr %s750, 4
        %s752 = scalar_lea.vmem %s3, %s751
      $region44: #{stage1_d_img_forward.6} parent=39 // pred_fallthru
        _
    $region40: #{stage1_d_img_forward.6} parent=5 // pred_fallthru
      _
  $region6: #{stage1_d_img_forward.6} parent=0 // loop_footer
    %s13 = sadd.s32 1, %s9
  $region7: #{stage1_d_img_forward.6} parent=0 // loop_footer_branch
    %8 = sbr.rel target = $region3
  $region8: #{stage1_d_img_forward.6} parent=0 // loop_exit
    _

// kernel: stage1_d_img_forward.7
$region0: #{stage1_d_img_forward.7}
  #allocation0 [shape = 'u32[]', space=smem, size = 0x4, offset = 0x4, fixed_abs, tag = 'smem constant byte address 0x4 - core index']
  #allocation1 [shape = 'u32[144,128]{1,0:T(1,128)}', space=vmem, size = 0x12000, scoped, tag = 'internal scratch']
  %s0 = inlined_call_operand.vmem [shape: bf16[32,1024], index: 0, kind: input, shape index: {}]
  %s1 = inlined_call_operand.vmem [shape: bf16[1024,128], index: 1, kind: input, shape index: {}]
  %s2 = inlined_call_operand.vmem [shape: f32[1,128], index: 2, kind: input, shape index: {}]
  %s3 = inlined_call_operand.vmem [shape: bf16[32,128], index: 3, kind: output, shape index: {}]
  %s4 = sld [smem:[#allocation0]]
  $region45: #{stage1_d_img_forward.7} parent=0
    _
  %s6 = ssub.s32 1, %s4
  %s7 = scalar_select 0, %s6, %s4
  loop: start=0, step=1, limit=4
  $region2: #{stage1_d_img_forward.7} parent=0 // loop_pre_header
    _
  $region3: #{stage1_d_img_forward.7} parent=0 // loop_header
    %s9 = sphi 0, %s13
    %p10 = scmp.ge.s32.totalorder %s9, 4
    %s19 = sphi 0, %s21
    %s22 = sphi 0, %s19
    %s23 = sphi 0, %s22
    %s39 = sphi 0, %s23
    %s43 = sphi 0, %s43
    %s45 = sphi 0, %s43
    %s46 = sphi 0, %s45
    %s60 = sphi 0, %s46
    %s64 = sphi 0, %s64
    %s66 = sphi 0, %s64
    %s67 = sphi 0, %s66
    %s81 = sphi 0, %s67
    %s87 = sphi 0, %s89
    %s90 = sphi 0, %s87
    %s91 = sphi 0, %s90
    %s107 = sphi 0, %s91
  $region4: #{stage1_d_img_forward.7} parent=0 // loop_header_branch
    %12 = sbr.rel (%p10) target = $region8
  $region5: #{stage1_d_img_forward.7} parent=0 // loop_body
    %s14 = ssub.s32 %s9, 1
    %s15 = ssub.s32 %s9, 2
    %s16 = sadd.s32 %s9, 1
    %s17 = ssub.s32 %s9, %s16
    %p18 = scmp.eq.s32.totalorder %s17, 0
    %s20 = sadd.s32 %s19, 1
    %s21 = scalar_select %p18, %s19, %s20
    %p24 = pneg %p18
    %p25 = scmp.eq.s32.totalorder %s9, 1
    %p26 = por %p24, %p25
    %p27 = scmp.ne.s32.totalorder %s19, %s22
    %p28 = scmp.eq.s32.totalorder %s9, 0
    %p29 = por %p27, %p28
    %p30 = scmp.ne.s32.totalorder %s19, %s22
    %p31 = scmp.eq.s32.totalorder %s14, 1
    %p32 = por %p30, %p31
    %p33 = scmp.ne.s32.totalorder %s22, %s23
    %p34 = scmp.eq.s32.totalorder %s14, 0
    %p35 = por %p33, %p34
    %p36 = scmp.ne.s32.totalorder %s22, %s23
    %p37 = scmp.eq.s32.totalorder %s15, 1
    %p38 = por %p36, %p37
    %p40 = scmp.ne.s32.totalorder %s23, %s39
    %p41 = scmp.eq.s32.totalorder %s15, 0
    %p42 = por %p40, %p41
    %s44 = sadd.s32 %s43, 1
    %p47 = scmp.eq.s32.totalorder %s9, 1
    %p48 = scmp.ne.s32.totalorder %s43, %s45
    %p49 = scmp.eq.s32.totalorder %s9, 0
    %p50 = por %p48, %p49
    %p51 = scmp.ne.s32.totalorder %s43, %s45
    %p52 = scmp.eq.s32.totalorder %s14, 1
    %p53 = por %p51, %p52
    %p54 = scmp.ne.s32.totalorder %s45, %s46
    %p55 = scmp.eq.s32.totalorder %s14, 0
    %p56 = por %p54, %p55
    %p57 = scmp.ne.s32.totalorder %s45, %s46
    %p58 = scmp.eq.s32.totalorder %s15, 1
    %p59 = por %p57, %p58
    %p61 = scmp.ne.s32.totalorder %s46, %s60
    %p62 = scmp.eq.s32.totalorder %s15, 0
    %p63 = por %p61, %p62
    %s65 = sadd.s32 %s64, 1
    %p68 = scmp.eq.s32.totalorder %s9, 1
    %p69 = scmp.ne.s32.totalorder %s64, %s66
    %p70 = scmp.eq.s32.totalorder %s9, 0
    %p71 = por %p69, %p70
    %p72 = scmp.ne.s32.totalorder %s64, %s66
    %p73 = scmp.eq.s32.totalorder %s14, 1
    %p74 = por %p72, %p73
    %p75 = scmp.ne.s32.totalorder %s66, %s67
    %p76 = scmp.eq.s32.totalorder %s14, 0
    %p77 = por %p75, %p76
    %p78 = scmp.ne.s32.totalorder %s66, %s67
    %p79 = scmp.eq.s32.totalorder %s15, 1
    %p80 = por %p78, %p79
    %p82 = scmp.ne.s32.totalorder %s67, %s81
    %p83 = scmp.eq.s32.totalorder %s15, 0
    %p84 = por %p82, %p83
    %s85 = ssub.s32 %s9, %s16
    %p86 = scmp.eq.s32.totalorder %s85, 0
    %s88 = sadd.s32 %s87, 1
    %s89 = scalar_select %p86, %s87, %s88
    %p92 = pneg %p86
    %p93 = scmp.eq.s32.totalorder %s9, 1
    %p94 = por %p92, %p93
    %p95 = scmp.ne.s32.totalorder %s87, %s90
    %p96 = scmp.eq.s32.totalorder %s9, 0
    %p97 = por %p95, %p96
    %p98 = scmp.ne.s32.totalorder %s87, %s90
    %p99 = scmp.eq.s32.totalorder %s14, 1
    %p100 = por %p98, %p99
    %p101 = scmp.ne.s32.totalorder %s90, %s91
    %p102 = scmp.eq.s32.totalorder %s14, 0
    %p103 = por %p101, %p102
    %p104 = scmp.ne.s32.totalorder %s90, %s91
    %p105 = scmp.eq.s32.totalorder %s15, 1
    %p106 = por %p104, %p105
    %p108 = scmp.ne.s32.totalorder %s91, %s107
    %p109 = scmp.eq.s32.totalorder %s15, 0
    %p110 = por %p108, %p109
    %p111 = scmp.le.s32.totalorder 1, %s9
    %p112 = scmp.lt.s32.totalorder %s9, 3
    %p113 = pnand %p111, %p112
    %p114 = pneg %p113
    // Predicated region
    $region9: #{stage1_d_img_forward.7} parent=5 // pred_check
      _
    $region10: #{stage1_d_img_forward.7} parent=5 // pred_check_branch
      %116 = sbr.rel (%p113) target = $region12
    $region11: #{stage1_d_img_forward.7} parent=5 // pred_region
      %s117 = ssub.s32 %s9, 1
      // Predicated region
      $region13: #{stage1_d_img_forward.7} parent=11 // pred_check
        %p118 = pneg %p56
      $region14: #{stage1_d_img_forward.7} parent=11 // pred_check_branch
        %120 = sbr.rel (%p118) target = $region16
      $region15: #{stage1_d_img_forward.7} parent=11 // pred_region
        _
      $region16: #{stage1_d_img_forward.7} parent=11 // pred_fallthru
        _
      // Predicated region
      $region17: #{stage1_d_img_forward.7} parent=11 // pred_check
        %p121 = pneg %p77
      $region18: #{stage1_d_img_forward.7} parent=11 // pred_check_branch
        %123 = sbr.rel (%p121) target = $region20
      $region19: #{stage1_d_img_forward.7} parent=11 // pred_region
        _
      $region20: #{stage1_d_img_forward.7} parent=11 // pred_fallthru
        _
    $region12: #{stage1_d_img_forward.7} parent=5 // pred_fallthru
      _
    %p124 = scmp.lt.s32.totalorder %s9, 2
    // Predicated region
    $region21: #{stage1_d_img_forward.7} parent=5 // pred_check
      %p125 = pneg %p124
    $region22: #{stage1_d_img_forward.7} parent=5 // pred_check_branch
      %127 = sbr.rel (%p125) target = $region24
    $region23: #{stage1_d_img_forward.7} parent=5 // pred_region
      // Predicated region
      $region25: #{stage1_d_img_forward.7} parent=23 // pred_check
        %p128 = pneg %p29
      $region26: #{stage1_d_img_forward.7} parent=23 // pred_check_branch
        %130 = sbr.rel (%p128) target = $region28
      $region27: #{stage1_d_img_forward.7} parent=23 // pred_region
        %s131 = smul.u32 2, %s9
        %p132 = scmp.lt.s32.totalorder %s131, 3
        %s133 = scalar_select %p132, %s131, 3
        %s134 = smul.addr %s133, 8
        %s135 = smul.addr %s134, 4
        %s136 = scalar_lea.vmem %s0, %s135
        %s137 = smul.u32 2, %s9
      $region28: #{stage1_d_img_forward.7} parent=23 // pred_fallthru
        _
    $region24: #{stage1_d_img_forward.7} parent=5 // pred_fallthru
      _
    %p138 = scmp.le.s32.totalorder 1, %s9
    %p139 = scmp.lt.s32.totalorder %s9, 3
    %p140 = pnand %p138, %p139
    %p141 = pneg %p140
    // Predicated region
    $region29: #{stage1_d_img_forward.7} parent=5 // pred_check
      _
    $region30: #{stage1_d_img_forward.7} parent=5 // pred_check_branch
      %143 = sbr.rel (%p140) target = $region32
    $region31: #{stage1_d_img_forward.7} parent=5 // pred_region
      %s144 = ssub.s32 %s9, 1
      %s145 = smul.u32 2, %s14
      %p146 = scmp.lt.s32.totalorder %s145, 3
      %s147 = scalar_select %p146, %s145, 3
      %s148 = smul.addr %s147, 8
      %s149 = smul.addr %s148, 4
      %s150 = scalar_lea.vmem %s0, %s149
      %p151 = pneg %p35
      %p152 = pneg %p32
      %p153 = pneg %p56
      %p154 = pneg %p53
      %p155 = pneg %p77
      %p156 = pneg %p74
      %p157 = pneg %p103
      %p158 = pneg %p100
      %s159 = smul.u32 2, %s14
      %p160 = scmp.lt.s32.totalorder %s159, 3
      %s161 = scalar_select %p160, %s159, 3
      %s162 = smul.addr %s161, 4
      %s163 = scalar_lea.vmem %s3, %s162
      %s164 = smul.u32 2, %s14
      %p165 = scmp.lt.s32.totalorder %s164, 3
      %s166 = scalar_select %p165, %s164, 3
      %s167 = smul.addr %s166, 8
      %s168 = smul.addr %s167, 4
      %s169 = scalar_lea.vmem %s0, %s168
      %s170 = smul.u32 2, %s14
      %s171 = smul.u32 2, %s14
      %p172 = scmp.lt.s32.totalorder %s171, 3
      %s173 = scalar_select %p172, %s171, 3
      %s174 = smul.addr %s173, 4
      %s175 = scalar_lea.vmem %s3, %s174
      %s176 = smul.u32 2, %s14
      %v178 = vld [vmem:[%s169] sm:$0xff]
      %v179 = vld [vmem:[%s169 + $0x8] sm:$0xff]
      %v180 = vld [vmem:[%s169 + $0x10] sm:$0xff]
      %v181 = vld [vmem:[%s169 + $0x18] sm:$0xff]
      %v182 = vld [vmem:[%s169 + $0x20] sm:$0xff]
      %v183 = vld [vmem:[%s169 + $0x28] sm:$0xff]
      %v184 = vld [vmem:[%s169 + $0x30] sm:$0xff]
      %v185 = vld [vmem:[%s169 + $0x38] sm:$0xff]
      %v186 = vld [vmem:[%s1] sm:$0xf]
      %v187 = vld [vmem:[%s1 + $0x4] sm:$0xf]
      %v188 = vld [vmem:[%s1 + $0x8] sm:$0xf]
      %v189 = vld [vmem:[%s1 + $0xc] sm:$0xf]
      %v190 = vld [vmem:[%s1 + $0x10] sm:$0xf]
      %v191 = vld [vmem:[%s1 + $0x14] sm:$0xf]
      %v192 = vld [vmem:[%s1 + $0x18] sm:$0xf]
      %v193 = vld [vmem:[%s1 + $0x1c] sm:$0xf]
      %v194 = vld [vmem:[%s1 + $0x20] sm:$0xf]
      %v195 = vld [vmem:[%s1 + $0x24] sm:$0xf]
      %v196 = vld [vmem:[%s1 + $0x28] sm:$0xf]
      %v197 = vld [vmem:[%s1 + $0x2c] sm:$0xf]
      %v198 = vld [vmem:[%s1 + $0x30] sm:$0xf]
      %v199 = vld [vmem:[%s1 + $0x34] sm:$0xf]
      %v200 = vld [vmem:[%s1 + $0x38] sm:$0xf]
      %v201 = vld [vmem:[%s1 + $0x3c] sm:$0xf]
      %v202 = vld [vmem:[%s1 + $0x40] sm:$0xf]
      %v203 = vld [vmem:[%s1 + $0x44] sm:$0xf]
      %v204 = vld [vmem:[%s1 + $0x48] sm:$0xf]
      %v205 = vld [vmem:[%s1 + $0x4c] sm:$0xf]
      %v206 = vld [vmem:[%s1 + $0x50] sm:$0xf]
      %v207 = vld [vmem:[%s1 + $0x54] sm:$0xf]
      %v208 = vld [vmem:[%s1 + $0x58] sm:$0xf]
      %v209 = vld [vmem:[%s1 + $0x5c] sm:$0xf]
      %v210 = vld [vmem:[%s1 + $0x60] sm:$0xf]
      %v211 = vld [vmem:[%s1 + $0x64] sm:$0xf]
      %v212 = vld [vmem:[%s1 + $0x68] sm:$0xf]
      %v213 = vld [vmem:[%s1 + $0x6c] sm:$0xf]
      %v214 = vld [vmem:[%s1 + $0x70] sm:$0xf]
      %v215 = vld [vmem:[%s1 + $0x74] sm:$0xf]
      %v216 = vld [vmem:[%s1 + $0x78] sm:$0xf]
      %v217 = vld [vmem:[%s1 + $0x7c] sm:$0xf]
      %v218 = vld [vmem:[%s1 + $0x80] sm:$0xf]
      %v219 = vld [vmem:[%s1 + $0x84] sm:$0xf]
      %v220 = vld [vmem:[%s1 + $0x88] sm:$0xf]
      %v221 = vld [vmem:[%s1 + $0x8c] sm:$0xf]
      %v222 = vld [vmem:[%s1 + $0x90] sm:$0xf]
      %v223 = vld [vmem:[%s1 + $0x94] sm:$0xf]
      %v224 = vld [vmem:[%s1 + $0x98] sm:$0xf]
      %v225 = vld [vmem:[%s1 + $0x9c] sm:$0xf]
      %v226 = vld [vmem:[%s1 + $0xa0] sm:$0xf]
      %v227 = vld [vmem:[%s1 + $0xa4] sm:$0xf]
      %v228 = vld [vmem:[%s1 + $0xa8] sm:$0xf]
      %v229 = vld [vmem:[%s1 + $0xac] sm:$0xf]
      %v230 = vld [vmem:[%s1 + $0xb0] sm:$0xf]
      %v231 = vld [vmem:[%s1 + $0xb4] sm:$0xf]
      %v232 = vld [vmem:[%s1 + $0xb8] sm:$0xf]
      %v233 = vld [vmem:[%s1 + $0xbc] sm:$0xf]
      %v234 = vld [vmem:[%s1 + $0xc0] sm:$0xf]
      %v235 = vld [vmem:[%s1 + $0xc4] sm:$0xf]
      %v236 = vld [vmem:[%s1 + $0xc8] sm:$0xf]
      %v237 = vld [vmem:[%s1 + $0xcc] sm:$0xf]
      %v238 = vld [vmem:[%s1 + $0xd0] sm:$0xf]
      %v239 = vld [vmem:[%s1 + $0xd4] sm:$0xf]
      %v240 = vld [vmem:[%s1 + $0xd8] sm:$0xf]
      %v241 = vld [vmem:[%s1 + $0xdc] sm:$0xf]
      %v242 = vld [vmem:[%s1 + $0xe0] sm:$0xf]
      %v243 = vld [vmem:[%s1 + $0xe4] sm:$0xf]
      %v244 = vld [vmem:[%s1 + $0xe8] sm:$0xf]
      %v245 = vld [vmem:[%s1 + $0xec] sm:$0xf]
      %v246 = vld [vmem:[%s1 + $0xf0] sm:$0xf]
      %v247 = vld [vmem:[%s1 + $0xf4] sm:$0xf]
      %v248 = vld [vmem:[%s1 + $0xf8] sm:$0xf]
      %v249 = vld [vmem:[%s1 + $0xfc] sm:$0xf]
      %v250 = vld [vmem:[%s1 + $0x100] sm:$0xf]
      %v251 = vld [vmem:[%s1 + $0x104] sm:$0xf]
      %v252 = vld [vmem:[%s1 + $0x108] sm:$0xf]
      %v253 = vld [vmem:[%s1 + $0x10c] sm:$0xf]
      %v254 = vld [vmem:[%s1 + $0x110] sm:$0xf]
      %v255 = vld [vmem:[%s1 + $0x114] sm:$0xf]
      %v256 = vld [vmem:[%s1 + $0x118] sm:$0xf]
      %v257 = vld [vmem:[%s1 + $0x11c] sm:$0xf]
      %v258 = vld [vmem:[%s1 + $0x120] sm:$0xf]
      %v259 = vld [vmem:[%s1 + $0x124] sm:$0xf]
      %v260 = vld [vmem:[%s1 + $0x128] sm:$0xf]
      %v261 = vld [vmem:[%s1 + $0x12c] sm:$0xf]
      %v262 = vld [vmem:[%s1 + $0x130] sm:$0xf]
      %v263 = vld [vmem:[%s1 + $0x134] sm:$0xf]
      %v264 = vld [vmem:[%s1 + $0x138] sm:$0xf]
      %v265 = vld [vmem:[%s1 + $0x13c] sm:$0xf]
      %v266 = vld [vmem:[%s1 + $0x140] sm:$0xf]
      %v267 = vld [vmem:[%s1 + $0x144] sm:$0xf]
      %v268 = vld [vmem:[%s1 + $0x148] sm:$0xf]
      %v269 = vld [vmem:[%s1 + $0x14c] sm:$0xf]
      %v270 = vld [vmem:[%s1 + $0x150] sm:$0xf]
      %v271 = vld [vmem:[%s1 + $0x154] sm:$0xf]
      %v272 = vld [vmem:[%s1 + $0x158] sm:$0xf]
      %v273 = vld [vmem:[%s1 + $0x15c] sm:$0xf]
      %v274 = vld [vmem:[%s1 + $0x160] sm:$0xf]
      %v275 = vld [vmem:[%s1 + $0x164] sm:$0xf]
      %v276 = vld [vmem:[%s1 + $0x168] sm:$0xf]
      %v277 = vld [vmem:[%s1 + $0x16c] sm:$0xf]
      %v278 = vld [vmem:[%s1 + $0x170] sm:$0xf]
      %v279 = vld [vmem:[%s1 + $0x174] sm:$0xf]
      %v280 = vld [vmem:[%s1 + $0x178] sm:$0xf]
      %v281 = vld [vmem:[%s1 + $0x17c] sm:$0xf]
      %v282 = vld [vmem:[%s1 + $0x180] sm:$0xf]
      %v283 = vld [vmem:[%s1 + $0x184] sm:$0xf]
      %v284 = vld [vmem:[%s1 + $0x188] sm:$0xf]
      %v285 = vld [vmem:[%s1 + $0x18c] sm:$0xf]
      %v286 = vld [vmem:[%s1 + $0x190] sm:$0xf]
      %v287 = vld [vmem:[%s1 + $0x194] sm:$0xf]
      %v288 = vld [vmem:[%s1 + $0x198] sm:$0xf]
      %v289 = vld [vmem:[%s1 + $0x19c] sm:$0xf]
      %v290 = vld [vmem:[%s1 + $0x1a0] sm:$0xf]
      %v291 = vld [vmem:[%s1 + $0x1a4] sm:$0xf]
      %v292 = vld [vmem:[%s1 + $0x1a8] sm:$0xf]
      %v293 = vld [vmem:[%s1 + $0x1ac] sm:$0xf]
      %v294 = vld [vmem:[%s1 + $0x1b0] sm:$0xf]
      %v295 = vld [vmem:[%s1 + $0x1b4] sm:$0xf]
      %v296 = vld [vmem:[%s1 + $0x1b8] sm:$0xf]
      %v297 = vld [vmem:[%s1 + $0x1bc] sm:$0xf]
      %v298 = vld [vmem:[%s1 + $0x1c0] sm:$0xf]
      %v299 = vld [vmem:[%s1 + $0x1c4] sm:$0xf]
      %v300 = vld [vmem:[%s1 + $0x1c8] sm:$0xf]
      %v301 = vld [vmem:[%s1 + $0x1cc] sm:$0xf]
      %v302 = vld [vmem:[%s1 + $0x1d0] sm:$0xf]
      %v303 = vld [vmem:[%s1 + $0x1d4] sm:$0xf]
      %v304 = vld [vmem:[%s1 + $0x1d8] sm:$0xf]
      %v305 = vld [vmem:[%s1 + $0x1dc] sm:$0xf]
      %v306 = vld [vmem:[%s1 + $0x1e0] sm:$0xf]
      %v307 = vld [vmem:[%s1 + $0x1e4] sm:$0xf]
      %v308 = vld [vmem:[%s1 + $0x1e8] sm:$0xf]
      %v309 = vld [vmem:[%s1 + $0x1ec] sm:$0xf]
      %v310 = vld [vmem:[%s1 + $0x1f0] sm:$0xf]
      %v311 = vld [vmem:[%s1 + $0x1f4] sm:$0xf]
      %v312 = vld [vmem:[%s1 + $0x1f8] sm:$0xf]
      %v313 = vld [vmem:[%s1 + $0x1fc] sm:$0xf]
      %v314 = vld [vmem:[%s2] sm:$0x1]
      %v316 = vlaneseq
      %v317 = vshrl.u32 %v316, 7
      %v318 = vsub.s32 0, %v317
      %v319 = vrot.slane %v314, %v318
      %v329 = vunpack.c.l.b16 %v178
      %v330 = vunpack.c.h.b16 %v178
      %v331 = vunpack.c.l.b16 %v179
      %v332 = vunpack.c.h.b16 %v179
      %v333 = vunpack.c.l.b16 %v180
      %v334 = vunpack.c.h.b16 %v180
      %v335 = vunpack.c.l.b16 %v181
      %v336 = vunpack.c.h.b16 %v181
      %v337 = vunpack.c.l.b16 %v182
      %v338 = vunpack.c.h.b16 %v182
      %v339 = vunpack.c.l.b16 %v183
      %v340 = vunpack.c.h.b16 %v183
      %v341 = vunpack.c.l.b16 %v184
      %v342 = vunpack.c.h.b16 %v184
      %v343 = vunpack.c.l.b16 %v185
      %v344 = vunpack.c.h.b16 %v185
      %v345 = vpack.c.b16 %v337, %v329
      %v346 = vpack.c.b16 %v338, %v330
      %v347 = vpack.c.b16 %v339, %v331
      %v348 = vpack.c.b16 %v340, %v332
      %v349 = vpack.c.b16 %v341, %v333
      %v350 = vpack.c.b16 %v342, %v334
      %v351 = vpack.c.b16 %v343, %v335
      %v352 = vpack.c.b16 %v344, %v336
      %v489 = vunpack.c.l.b16 %v186
      %v490 = vunpack.c.l.b16 %v187
      %v491 = vunpack.c.l.b16 %v188
      %v492 = vunpack.c.l.b16 %v189
      %v493 = vunpack.c.l.b16 %v190
      %v494 = vunpack.c.l.b16 %v191
      %v495 = vunpack.c.l.b16 %v192
      %v496 = vunpack.c.l.b16 %v193
      %v497 = vunpack.c.l.b16 %v194
      %v498 = vunpack.c.l.b16 %v195
      %v499 = vunpack.c.l.b16 %v196
      %v500 = vunpack.c.l.b16 %v197
      %v501 = vunpack.c.l.b16 %v198
      %v502 = vunpack.c.l.b16 %v199
      %v503 = vunpack.c.l.b16 %v200
      %v504 = vunpack.c.l.b16 %v201
      %v505 = vunpack.c.l.b16 %v202
      %v506 = vunpack.c.l.b16 %v203
      %v507 = vunpack.c.l.b16 %v204
      %v508 = vunpack.c.l.b16 %v205
      %v509 = vunpack.c.l.b16 %v206
      %v510 = vunpack.c.l.b16 %v207
      %v511 = vunpack.c.l.b16 %v208
      %v512 = vunpack.c.l.b16 %v209
      %v513 = vunpack.c.l.b16 %v210
      %v514 = vunpack.c.l.b16 %v211
      %v515 = vunpack.c.l.b16 %v212
      %v516 = vunpack.c.l.b16 %v213
      %v517 = vunpack.c.l.b16 %v214
      %v518 = vunpack.c.l.b16 %v215
      %v519 = vunpack.c.l.b16 %v216
      %v520 = vunpack.c.l.b16 %v217
      %v521 = vunpack.c.l.b16 %v218
      %v522 = vunpack.c.l.b16 %v219
      %v523 = vunpack.c.l.b16 %v220
      %v524 = vunpack.c.l.b16 %v221
      %v525 = vunpack.c.l.b16 %v222
      %v526 = vunpack.c.l.b16 %v223
      %v527 = vunpack.c.l.b16 %v224
      %v528 = vunpack.c.l.b16 %v225
      %v529 = vunpack.c.l.b16 %v226
      %v530 = vunpack.c.l.b16 %v227
      %v531 = vunpack.c.l.b16 %v228
      %v532 = vunpack.c.l.b16 %v229
      %v533 = vunpack.c.l.b16 %v230
      %v534 = vunpack.c.l.b16 %v231
      %v535 = vunpack.c.l.b16 %v232
      %v536 = vunpack.c.l.b16 %v233
      %v537 = vunpack.c.l.b16 %v234
      %v538 = vunpack.c.l.b16 %v235
      %v539 = vunpack.c.l.b16 %v236
      %v540 = vunpack.c.l.b16 %v237
      %v541 = vunpack.c.l.b16 %v238
      %v542 = vunpack.c.l.b16 %v239
      %v543 = vunpack.c.l.b16 %v240
      %v544 = vunpack.c.l.b16 %v241
      %v545 = vunpack.c.l.b16 %v242
      %v546 = vunpack.c.l.b16 %v243
      %v547 = vunpack.c.l.b16 %v244
      %v548 = vunpack.c.l.b16 %v245
      %v549 = vunpack.c.l.b16 %v246
      %v550 = vunpack.c.l.b16 %v247
      %v551 = vunpack.c.l.b16 %v248
      %v552 = vunpack.c.l.b16 %v249
      %v553 = vunpack.c.l.b16 %v250
      %v554 = vunpack.c.l.b16 %v251
      %v555 = vunpack.c.l.b16 %v252
      %v556 = vunpack.c.l.b16 %v253
      %v557 = vunpack.c.l.b16 %v254
      %v558 = vunpack.c.l.b16 %v255
      %v559 = vunpack.c.l.b16 %v256
      %v560 = vunpack.c.l.b16 %v257
      %v561 = vunpack.c.l.b16 %v258
      %v562 = vunpack.c.l.b16 %v259
      %v563 = vunpack.c.l.b16 %v260
      %v564 = vunpack.c.l.b16 %v261
      %v565 = vunpack.c.l.b16 %v262
      %v566 = vunpack.c.l.b16 %v263
      %v567 = vunpack.c.l.b16 %v264
      %v568 = vunpack.c.l.b16 %v265
      %v569 = vunpack.c.l.b16 %v266
      %v570 = vunpack.c.l.b16 %v267
      %v571 = vunpack.c.l.b16 %v268
      %v572 = vunpack.c.l.b16 %v269
      %v573 = vunpack.c.l.b16 %v270
      %v574 = vunpack.c.l.b16 %v271
      %v575 = vunpack.c.l.b16 %v272
      %v576 = vunpack.c.l.b16 %v273
      %v577 = vunpack.c.l.b16 %v274
      %v578 = vunpack.c.l.b16 %v275
      %v579 = vunpack.c.l.b16 %v276
      %v580 = vunpack.c.l.b16 %v277
      %v581 = vunpack.c.l.b16 %v278
      %v582 = vunpack.c.l.b16 %v279
      %v583 = vunpack.c.l.b16 %v280
      %v584 = vunpack.c.l.b16 %v281
      %v585 = vunpack.c.l.b16 %v282
      %v586 = vunpack.c.l.b16 %v283
      %v587 = vunpack.c.l.b16 %v284
      %v588 = vunpack.c.l.b16 %v285
      %v589 = vunpack.c.l.b16 %v286
      %v590 = vunpack.c.l.b16 %v287
      %v591 = vunpack.c.l.b16 %v288
      %v592 = vunpack.c.l.b16 %v289
      %v593 = vunpack.c.l.b16 %v290
      %v594 = vunpack.c.l.b16 %v291
      %v595 = vunpack.c.l.b16 %v292
      %v596 = vunpack.c.l.b16 %v293
      %v597 = vunpack.c.l.b16 %v294
      %v598 = vunpack.c.l.b16 %v295
      %v599 = vunpack.c.l.b16 %v296
      %v600 = vunpack.c.l.b16 %v297
      %v601 = vunpack.c.l.b16 %v298
      %v602 = vunpack.c.l.b16 %v299
      %v603 = vunpack.c.l.b16 %v300
      %v604 = vunpack.c.l.b16 %v301
      %v605 = vunpack.c.l.b16 %v302
      %v606 = vunpack.c.l.b16 %v303
      %v607 = vunpack.c.l.b16 %v304
      %v608 = vunpack.c.l.b16 %v305
      %v609 = vunpack.c.l.b16 %v306
      %v610 = vunpack.c.l.b16 %v307
      %v611 = vunpack.c.l.b16 %v308
      %v612 = vunpack.c.l.b16 %v309
      %v613 = vunpack.c.l.b16 %v310
      %v614 = vunpack.c.l.b16 %v311
      %v615 = vunpack.c.l.b16 %v312
      %v616 = vunpack.c.l.b16 %v313
      %v617 = vpack.c.b16 %v490, %v489
      %v618 = vpack.c.b16 %v492, %v491
      %v619 = vpack.c.b16 %v494, %v493
      %v620 = vpack.c.b16 %v496, %v495
      %v621 = vpack.c.b16 %v498, %v497
      %v622 = vpack.c.b16 %v500, %v499
      %v623 = vpack.c.b16 %v502, %v501
      %v624 = vpack.c.b16 %v504, %v503
      %v625 = vpack.c.b16 %v506, %v505
      %v626 = vpack.c.b16 %v508, %v507
      %v627 = vpack.c.b16 %v510, %v509
      %v628 = vpack.c.b16 %v512, %v511
      %v629 = vpack.c.b16 %v514, %v513
      %v630 = vpack.c.b16 %v516, %v515
      %v631 = vpack.c.b16 %v518, %v517
      %v632 = vpack.c.b16 %v520, %v519
      %v633 = vpack.c.b16 %v522, %v521
      %v634 = vpack.c.b16 %v524, %v523
      %v635 = vpack.c.b16 %v526, %v525
      %v636 = vpack.c.b16 %v528, %v527
      %v637 = vpack.c.b16 %v530, %v529
      %v638 = vpack.c.b16 %v532, %v531
      %v639 = vpack.c.b16 %v534, %v533
      %v640 = vpack.c.b16 %v536, %v535
      %v641 = vpack.c.b16 %v538, %v537
      %v642 = vpack.c.b16 %v540, %v539
      %v643 = vpack.c.b16 %v542, %v541
      %v644 = vpack.c.b16 %v544, %v543
      %v645 = vpack.c.b16 %v546, %v545
      %v646 = vpack.c.b16 %v548, %v547
      %v647 = vpack.c.b16 %v550, %v549
      %v648 = vpack.c.b16 %v552, %v551
      %v649 = vpack.c.b16 %v554, %v553
      %v650 = vpack.c.b16 %v556, %v555
      %v651 = vpack.c.b16 %v558, %v557
      %v652 = vpack.c.b16 %v560, %v559
      %v653 = vpack.c.b16 %v562, %v561
      %v654 = vpack.c.b16 %v564, %v563
      %v655 = vpack.c.b16 %v566, %v565
      %v656 = vpack.c.b16 %v568, %v567
      %v657 = vpack.c.b16 %v570, %v569
      %v658 = vpack.c.b16 %v572, %v571
      %v659 = vpack.c.b16 %v574, %v573
      %v660 = vpack.c.b16 %v576, %v575
      %v661 = vpack.c.b16 %v578, %v577
      %v662 = vpack.c.b16 %v580, %v579
      %v663 = vpack.c.b16 %v582, %v581
      %v664 = vpack.c.b16 %v584, %v583
      %v665 = vpack.c.b16 %v586, %v585
      %v666 = vpack.c.b16 %v588, %v587
      %v667 = vpack.c.b16 %v590, %v589
      %v668 = vpack.c.b16 %v592, %v591
      %v669 = vpack.c.b16 %v594, %v593
      %v670 = vpack.c.b16 %v596, %v595
      %v671 = vpack.c.b16 %v598, %v597
      %v672 = vpack.c.b16 %v600, %v599
      %v673 = vpack.c.b16 %v602, %v601
      %v674 = vpack.c.b16 %v604, %v603
      %v675 = vpack.c.b16 %v606, %v605
      %v676 = vpack.c.b16 %v608, %v607
      %v677 = vpack.c.b16 %v610, %v609
      %v678 = vpack.c.b16 %v612, %v611
      %v679 = vpack.c.b16 %v614, %v613
      %v680 = vpack.c.b16 %v616, %v615
      %745 = vmatprep.subr.bf16.mxu0 0
      %746 = vmatpush1.bf16.msra.mxu0 %v617
      %747 = vmatprep.subr.bf16.mxu0 0
      %748 = vmatpush1.bf16.msra.mxu0 %v618
      %749 = vmatprep.subr.bf16.mxu0 0
      %750 = vmatpush1.bf16.msra.mxu0 %v619
      %751 = vmatprep.subr.bf16.mxu0 0
      %752 = vmatpush1.bf16.msra.mxu0 %v620
      %753 = vmatprep.subr.bf16.mxu0 0
      %754 = vmatpush1.bf16.msra.mxu0 %v621
      %755 = vmatprep.subr.bf16.mxu0 0
      %756 = vmatpush1.bf16.msra.mxu0 %v622
      %757 = vmatprep.subr.bf16.mxu0 0
      %758 = vmatpush1.bf16.msra.mxu0 %v623
      %759 = vmatprep.subr.bf16.mxu0 0
      %760 = vmatpush1.bf16.msra.mxu0 %v624
      %761 = vmatprep.subr.bf16.mxu0 0
      %762 = vmatpush1.bf16.msra.mxu0 %v625
      %763 = vmatprep.subr.bf16.mxu0 0
      %764 = vmatpush1.bf16.msra.mxu0 %v626
      %765 = vmatprep.subr.bf16.mxu0 0
      %766 = vmatpush1.bf16.msra.mxu0 %v627
      %767 = vmatprep.subr.bf16.mxu0 0
      %768 = vmatpush1.bf16.msra.mxu0 %v628
      %769 = vmatprep.subr.bf16.mxu0 0
      %770 = vmatpush1.bf16.msra.mxu0 %v629
      %771 = vmatprep.subr.bf16.mxu0 0
      %772 = vmatpush1.bf16.msra.mxu0 %v630
      %773 = vmatprep.subr.bf16.mxu0 0
      %774 = vmatpush1.bf16.msra.mxu0 %v631
      %775 = vmatprep.subr.bf16.mxu0 0
      %776 = vmatpush1.bf16.msra.mxu0 %v632
      %777 = vmatprep.mubr.bf16.mxu0 %v346
      %778 = vmatmul.mubr.bf16.gmra.mrb[0].mxu0 %v345
      %v779 = vpop.f32.mrb[0].mxu0
      %v780 = vadd.f32 %v319, %v779
      %v781 = vpop.f32.mrb[0].mxu0
      %v782 = vpop.f32.mrb[0].mxu0
      %v783 = vadd.f32 %v319, %v782
      %v784 = vpop.f32.mrb[0].mxu0
      %785 = vdwg.mxu0
      %786 = vmatprep.subr.bf16.mxu0 0
      %787 = vmatpush1.bf16.msra.mxu0 %v633
      %788 = vmatprep.subr.bf16.mxu0 0
      %789 = vmatpush1.bf16.msra.mxu0 %v634
      %790 = vmatprep.subr.bf16.mxu0 0
      %791 = vmatpush1.bf16.msra.mxu0 %v635
      %792 = vmatprep.subr.bf16.mxu0 0
      %793 = vmatpush1.bf16.msra.mxu0 %v636
      %794 = vmatprep.subr.bf16.mxu0 0
      %795 = vmatpush1.bf16.msra.mxu0 %v637
      %796 = vmatprep.subr.bf16.mxu0 0
      %797 = vmatpush1.bf16.msra.mxu0 %v638
      %798 = vmatprep.subr.bf16.mxu0 0
      %799 = vmatpush1.bf16.msra.mxu0 %v639
      %800 = vmatprep.subr.bf16.mxu0 0
      %801 = vmatpush1.bf16.msra.mxu0 %v640
      %802 = vmatprep.subr.bf16.mxu0 0
      %803 = vmatpush1.bf16.msra.mxu0 %v641
      %804 = vmatprep.subr.bf16.mxu0 0
      %805 = vmatpush1.bf16.msra.mxu0 %v642
      %806 = vmatprep.subr.bf16.mxu0 0
      %807 = vmatpush1.bf16.msra.mxu0 %v643
      %808 = vmatprep.subr.bf16.mxu0 0
      %809 = vmatpush1.bf16.msra.mxu0 %v644
      %810 = vmatprep.subr.bf16.mxu0 0
      %811 = vmatpush1.bf16.msra.mxu0 %v645
      %812 = vmatprep.subr.bf16.mxu0 0
      %813 = vmatpush1.bf16.msra.mxu0 %v646
      %814 = vmatprep.subr.bf16.mxu0 0
      %815 = vmatpush1.bf16.msra.mxu0 %v647
      %816 = vmatprep.subr.bf16.mxu0 0
      %817 = vmatpush1.bf16.msra.mxu0 %v648
      %818 = vmatprep.mubr.bf16.mxu0 %v348
      %819 = vmatmul.mubr.bf16.gmra.mrb[0].mxu0 %v347
      %v820 = vpop.f32.mrb[0].mxu0
      %v821 = vadd.f32 %v780, %v820
      %v822 = vpop.f32.mrb[0].mxu0
      %v823 = vpop.f32.mrb[0].mxu0
      %v824 = vadd.f32 %v783, %v823
      %v825 = vpop.f32.mrb[0].mxu0
      %826 = vdwg.mxu0
      %827 = vmatprep.subr.bf16.mxu0 0
      %828 = vmatpush1.bf16.msra.mxu0 %v649
      %829 = vmatprep.subr.bf16.mxu0 0
      %830 = vmatpush1.bf16.msra.mxu0 %v650
      %831 = vmatprep.subr.bf16.mxu0 0
      %832 = vmatpush1.bf16.msra.mxu0 %v651
      %833 = vmatprep.subr.bf16.mxu0 0
      %834 = vmatpush1.bf16.msra.mxu0 %v652
      %835 = vmatprep.subr.bf16.mxu0 0
      %836 = vmatpush1.bf16.msra.mxu0 %v653
      %837 = vmatprep.subr.bf16.mxu0 0
      %838 = vmatpush1.bf16.msra.mxu0 %v654
      %839 = vmatprep.subr.bf16.mxu0 0
      %840 = vmatpush1.bf16.msra.mxu0 %v655
      %841 = vmatprep.subr.bf16.mxu0 0
      %842 = vmatpush1.bf16.msra.mxu0 %v656
      %843 = vmatprep.subr.bf16.mxu0 0
      %844 = vmatpush1.bf16.msra.mxu0 %v657
      %845 = vmatprep.subr.bf16.mxu0 0
      %846 = vmatpush1.bf16.msra.mxu0 %v658
      %847 = vmatprep.subr.bf16.mxu0 0
      %848 = vmatpush1.bf16.msra.mxu0 %v659
      %849 = vmatprep.subr.bf16.mxu0 0
      %850 = vmatpush1.bf16.msra.mxu0 %v660
      %851 = vmatprep.subr.bf16.mxu0 0
      %852 = vmatpush1.bf16.msra.mxu0 %v661
      %853 = vmatprep.subr.bf16.mxu0 0
      %854 = vmatpush1.bf16.msra.mxu0 %v662
      %855 = vmatprep.subr.bf16.mxu0 0
      %856 = vmatpush1.bf16.msra.mxu0 %v663
      %857 = vmatprep.subr.bf16.mxu0 0
      %858 = vmatpush1.bf16.msra.mxu0 %v664
      %859 = vmatprep.mubr.bf16.mxu0 %v350
      %860 = vmatmul.mubr.bf16.gmra.mrb[0].mxu0 %v349
      %v861 = vpop.f32.mrb[0].mxu0
      %v862 = vadd.f32 %v821, %v861
      %v863 = vpop.f32.mrb[0].mxu0
      %v864 = vpop.f32.mrb[0].mxu0
      %v865 = vadd.f32 %v824, %v864
      %v866 = vpop.f32.mrb[0].mxu0
      %867 = vdwg.mxu0
      %868 = vmatprep.subr.bf16.mxu0 0
      %869 = vmatpush1.bf16.msra.mxu0 %v665
      %870 = vmatprep.subr.bf16.mxu0 0
      %871 = vmatpush1.bf16.msra.mxu0 %v666
      %872 = vmatprep.subr.bf16.mxu0 0
      %873 = vmatpush1.bf16.msra.mxu0 %v667
      %874 = vmatprep.subr.bf16.mxu0 0
      %875 = vmatpush1.bf16.msra.mxu0 %v668
      %876 = vmatprep.subr.bf16.mxu0 0
      %877 = vmatpush1.bf16.msra.mxu0 %v669
      %878 = vmatprep.subr.bf16.mxu0 0
      %879 = vmatpush1.bf16.msra.mxu0 %v670
      %880 = vmatprep.subr.bf16.mxu0 0
      %881 = vmatpush1.bf16.msra.mxu0 %v671
      %882 = vmatprep.subr.bf16.mxu0 0
      %883 = vmatpush1.bf16.msra.mxu0 %v672
      %884 = vmatprep.subr.bf16.mxu0 0
      %885 = vmatpush1.bf16.msra.mxu0 %v673
      %886 = vmatprep.subr.bf16.mxu0 0
      %887 = vmatpush1.bf16.msra.mxu0 %v674
      %888 = vmatprep.subr.bf16.mxu0 0
      %889 = vmatpush1.bf16.msra.mxu0 %v675
      %890 = vmatprep.subr.bf16.mxu0 0
      %891 = vmatpush1.bf16.msra.mxu0 %v676
      %892 = vmatprep.subr.bf16.mxu0 0
      %893 = vmatpush1.bf16.msra.mxu0 %v677
      %894 = vmatprep.subr.bf16.mxu0 0
      %895 = vmatpush1.bf16.msra.mxu0 %v678
      %896 = vmatprep.subr.bf16.mxu0 0
      %897 = vmatpush1.bf16.msra.mxu0 %v679
      %898 = vmatprep.subr.bf16.mxu0 0
      %899 = vmatpush1.bf16.msra.mxu0 %v680
      %900 = vmatprep.mubr.bf16.mxu0 %v352
      %901 = vmatmul.mubr.bf16.gmra.mrb[0].mxu0 %v351
      %v902 = vpop.f32.mrb[0].mxu0
      %v903 = vadd.f32 %v862, %v902
      %v904 = vpop.f32.mrb[0].mxu0
      %v905 = vpop.f32.mrb[0].mxu0
      %v906 = vadd.f32 %v865, %v905
      %v907 = vpop.f32.mrb[0].mxu0
      %908 = vdwg.mxu0
      %vm909 = vcmp.gt.f32.partialorder %v903, 0.0
      %vm910 = vcmp.gt.f32.partialorder %v906, 0.0
      %v911 = vmul.f32 %v903, 0.2
      %v912 = vmul.f32 %v906, 0.2
      %v913 = vsel %vm909, %v903, %v911
      %v914 = vsel %vm910, %v906, %v912
      %v915 = vpack.c.bf16 %v914, %v913
      %v917 = vunpack.c.l.b16 %v915
      %v918 = vunpack.c.h.b16 %v915
      %v919 = vpack.c.b16 %v917, %v917
      %v920 = vpack.c.b16 %v918, %v918
      %923 = vst [vmem:[%s175] sm:$0xf] %v919
      %924 = vst [vmem:[%s175 + $0x4] sm:$0xf] %v920
      %s925 = smul.u32 2, %s14
      %p926 = scmp.lt.s32.totalorder %s925, 3
      %s927 = scalar_select %p926, %s925, 3
      %s928 = smul.addr %s927, 4
      %s929 = scalar_lea.vmem %s3, %s928
      // Predicated region
      $region33: #{stage1_d_img_forward.7} parent=31 // pred_check
        %p930 = pneg %p100
      $region34: #{stage1_d_img_forward.7} parent=31 // pred_check_branch
        %932 = sbr.rel (%p930) target = $region36
      $region35: #{stage1_d_img_forward.7} parent=31 // pred_region
        %s933 = smul.u32 2, %s14
      $region36: #{stage1_d_img_forward.7} parent=31 // pred_fallthru
        _
    $region32: #{stage1_d_img_forward.7} parent=5 // pred_fallthru
      _
    %p934 = scmp.le.s32.totalorder 2, %s9
    // Predicated region
    $region37: #{stage1_d_img_forward.7} parent=5 // pred_check
      %p935 = pneg %p934
    $region38: #{stage1_d_img_forward.7} parent=5 // pred_check_branch
      %937 = sbr.rel (%p935) target = $region40
    $region39: #{stage1_d_img_forward.7} parent=5 // pred_region
      %s938 = ssub.s32 %s9, 2
      // Predicated region
      $region41: #{stage1_d_img_forward.7} parent=39 // pred_check
        %p939 = pneg %p106
      $region42: #{stage1_d_img_forward.7} parent=39 // pred_check_branch
        %941 = sbr.rel (%p939) target = $region44
      $region43: #{stage1_d_img_forward.7} parent=39 // pred_region
        %s942 = smul.u32 2, %s15
        %p943 = scmp.lt.s32.totalorder %s942, 3
        %s944 = scalar_select %p943, %s942, 3
        %s945 = smul.addr %s944, 4
        %s946 = scalar_lea.vmem %s3, %s945
      $region44: #{stage1_d_img_forward.7} parent=39 // pred_fallthru
        _
    $region40: #{stage1_d_img_forward.7} parent=5 // pred_fallthru
      _
  $region6: #{stage1_d_img_forward.7} parent=0 // loop_footer
    %s13 = sadd.s32 1, %s9
  $region7: #{stage1_d_img_forward.7} parent=0 // loop_footer_branch
    %8 = sbr.rel target = $region3
  $region8: #{stage1_d_img_forward.7} parent=0 // loop_exit
    _

</llo_original>
